<compile_context>
chip_gen: v6e
topology: v6e:2x2x1
jax: 0.10.0
libtpu: 0.0.40
codegen_flags: <defaults>
</compile_context>

<pallas_src>
import functools

import jax
import jax.numpy as jnp
from jax.experimental import pallas as pl
from jax.experimental.pallas import tpu as pltpu


# -----------------------------------------------------------------------------
# Kernel
# -----------------------------------------------------------------------------
def _bottleneck_kernel(
    x_ref,                    # (1, HW, Cin)  f32
    w1_ref,                   # (Cin, P)      bf16
    s1_ref, b1_ref,           # (1, P)        f32 folded BN1
    w2_ref,                   # (9P, P)       bf16, rows = [kx, ky, cin]
    s2_ref, b2_ref,           # (1, P)        f32 folded BN2
    w3_ref,                   # (P, Cout)     bf16
    s3_ref, b3_ref,           # (1, Cout)     f32 folded BN3
    out_ref,                  # (1, HW, Cout) f32
    pad_ref,                  # (M, P)        f32 scratch, M = (H+2)*W
    *, W,
):
    _, HW, _ = x_ref.shape
    P = w1_ref.shape[1]
    M = HW + 2 * W            # W zero rows on top + image + W zero rows on bottom

    # ---- conv1 (1x1) + bn1 + relu --------------------------------------------
    h1 = jnp.dot(x_ref[0].astype(jnp.bfloat16), w1_ref[...],
                 preferred_element_type=jnp.float32)
    h1 = jnp.maximum(h1 * s1_ref[...] + b1_ref[...], 0.0)       # (HW, P) f32

    # ---- conv2 (3x3, pad=1, stride=1) + bn2 + relu ----------------------------
    # Scratch layout: rows [0,W) zero, [W, W+HW) = h1 row-major, [W+HW, M) zero.
    # Tap (ky, kx) for output pixel m is buf_kx[m + ky*W]; vertical padding is
    # the zero bands, horizontal padding is the column masks on the +/-1 rolls.
    pad_ref[pl.ds(0, W), :] = jnp.zeros((W, P), jnp.float32)
    pad_ref[pl.ds(W + HW, W), :] = jnp.zeros((W, P), jnp.float32)
    pad_ref[pl.ds(W, HW), :] = h1
    pad = pad_ref[...]

    col = jax.lax.broadcasted_iota(jnp.int32, (M, 1), 0) % W
    mask_l = (col != (W - 1)).astype(jnp.float32)   # dx=-1 taps: kill last column
    mask_r = (col != 0).astype(jnp.float32)         # dx=+1 taps: kill first column

    buf_l = pltpu.roll(pad * mask_l, 1, axis=0).astype(jnp.bfloat16)      # kx = 0
    buf_c = pad.astype(jnp.bfloat16)                                      # kx = 1
    buf_r = pltpu.roll(pad * mask_r, M - 1, axis=0).astype(jnp.bfloat16)  # kx = 2

    taps = []
    for buf in (buf_l, buf_c, buf_r):            # kx-major (matches w2 packing)
        for ky in range(3):                      # ky offsets: static W-aligned slices
            taps.append(buf[ky * W: ky * W + HW, :])
    patch = jnp.concatenate(taps, axis=-1)       # (HW, 9P) bf16

    h2 = jnp.dot(patch, w2_ref[...], preferred_element_type=jnp.float32)
    h2 = jnp.maximum(h2 * s2_ref[...] + b2_ref[...], 0.0)        # (HW, P) f32

    # ---- conv3 (1x1) + bn3 + residual add + relu ------------------------------
    h3 = jnp.dot(h2.astype(jnp.bfloat16), w3_ref[...],
                 preferred_element_type=jnp.float32)
    h3 = h3 * s3_ref[...] + b3_ref[...]                          # (HW, Cout) f32
    out_ref[0] = jnp.maximum(h3 + x_ref[0], 0.0)                 # residual re-read


# -----------------------------------------------------------------------------
# Wrapper: grid over batch, auto double-buffered x/out tiles, weights resident.
# -----------------------------------------------------------------------------
def _vmem_cap_bytes():
    try:
        cap = getattr(pltpu.get_tpu_info(), "vmem_capacity_bytes", None)
        if cap:
            return int(cap)
    except Exception:
        pass
    return 64 * 1024 * 1024


def bottleneck_pallas(x_nhwc, params):
    """Fused Bottleneck forward.  x_nhwc: (N, H, W, Cin) float32, NHWC."""
    (w1, s1, b1, w2, s2, b2, w3, s3, b3) = params
    N, H, W, Cin = x_nhwc.shape
    P = w1.shape[1]                       # lane-padded bottleneck planes
    Cout = w3.shape[1]
    assert Cout == Cin, "identity residual needs inplanes == planes*expansion"
    HW = H * W
    M = HW + 2 * W

    x_flat = x_nhwc.reshape(N, HW, Cin)   # free metadata reshape, lane-dense slab

    # Per-step VMEM estimate: double-buffered x/out tiles + resident params +
    # conv2 temporaries (pad scratch, 3 bf16 roll buffers, (HW,9P) patch, h1/h2).
    blk_io = (HW * Cin + HW * Cout) * 4
    wts = (Cin * P + 9 * P * P + P * Cout) * 2 + (4 * P + 2 * Cout) * 4
    tmp = M * P * 4 + 3 * M * P * 2 + HW * 9 * P * 2 + 2 * HW * P * 4
    est = 2 * blk_io + 2 * wts + tmp + (4 << 20)
    # Cap from the actual chip (v5e/v6e: 128 MiB, v7x: 64 MiB) with ~15% headroom
    # for compiler-internal scratch, instead of a hard 64 MiB clamp.
    vmem_limit = int(min(max(est, 32 * 1024 * 1024), int(0.85 * _vmem_cap_bytes())))

    grid_spec = pltpu.PrefetchScalarGridSpec(
        num_scalar_prefetch=0,
        grid=(N,),
        in_specs=[
            pl.BlockSpec((1, HW, Cin), lambda n: (n, 0, 0)),
            pl.BlockSpec(w1.shape, lambda n: (0, 0)),
            pl.BlockSpec(s1.shape, lambda n: (0, 0)),
            pl.BlockSpec(b1.shape, lambda n: (0, 0)),
            pl.BlockSpec(w2.shape, lambda n: (0, 0)),
            pl.BlockSpec(s2.shape, lambda n: (0, 0)),
            pl.BlockSpec(b2.shape, lambda n: (0, 0)),
            pl.BlockSpec(w3.shape, lambda n: (0, 0)),
            pl.BlockSpec(s3.shape, lambda n: (0, 0)),
            pl.BlockSpec(b3.shape, lambda n: (0, 0)),
        ],
        out_specs=pl.BlockSpec((1, HW, Cout), lambda n: (n, 0, 0)),
        scratch_shapes=[pltpu.VMEM((M, P), jnp.float32)],
    )

    out = pl.pallas_call(
        functools.partial(_bottleneck_kernel, W=W),
        out_shape=jax.ShapeDtypeStruct((N, HW, Cout), jnp.float32),
        grid_spec=grid_spec,
        compiler_params=pltpu.CompilerParams(
            dimension_semantics=("parallel",),     # batch images are independent
            vmem_limit_bytes=vmem_limit),
    )(x_flat, w1, s1, b1, w2, s2, b2, w3, s3, b3)

    return out.reshape(N, H, W, Cout)


# -----------------------------------------------------------------------------
# Deterministic parameter construction (shapes follow Bottleneck.__init__).
# -----------------------------------------------------------------------------
def _round_up(v, m):
    return ((v + m - 1) // m) * m


def _bn_params(c):
    idx = jnp.arange(c, dtype=jnp.float32)
    gamma = 1.0 + 0.1 * jnp.cos(idx)
    beta = 0.05 * jnp.sin(idx)
    mean = 0.02 * (idx / max(c, 1))
    var = 1.0 + 0.1 * (idx % 3)
    return gamma, beta, mean, var


def _fold_bn(gamma, beta, mean, var, pad_to, eps=1e-5):
    scale = gamma / jnp.sqrt(var + eps)
    bias = beta - mean * scale
    c = scale.shape[0]
    scale = jnp.pad(scale, (0, pad_to - c), constant_values=1.0)
    bias = jnp.pad(bias, (0, pad_to - c), constant_values=0.0)
    return scale.reshape(1, -1), bias.reshape(1, -1)


def make_params(inplanes, planes, expansion, key):
    k1, k2, k3 = jax.random.split(key, 3)
    cout = planes * expansion
    assert cout == inplanes, "identity residual path requires inplanes == planes*expansion"
    # PyTorch conv weights are OIHW.
    w1_oihw = 0.1 * jax.random.normal(k1, (planes, inplanes, 1, 1), jnp.float32)
    w2_oihw = 0.1 * jax.random.normal(k2, (planes, planes, 3, 3), jnp.float32)
    w3_oihw = 0.1 * jax.random.normal(k3, (cout, planes, 1, 1), jnp.float32)
    bn1, bn2, bn3 = _bn_params(planes), _bn_params(planes), _bn_params(cout)

    LANE = 128
    P = _round_up(planes, LANE)     # lane-padded bottleneck planes only

    # 1x1 convs -> matmuls; only the plane axis is zero-padded.
    w1 = jnp.zeros((inplanes, P), jnp.float32).at[:, :planes].set(
        jnp.transpose(w1_oihw[:, :, 0, 0], (1, 0)))
    w3 = jnp.zeros((P, cout), jnp.float32).at[:planes, :].set(
        jnp.transpose(w3_oihw[:, :, 0, 0], (1, 0)))
    # 3x3 conv packed for a single deep-K (K = 9P) matmul: rows = [kx, ky, cin].
    w2_k = jnp.transpose(w2_oihw, (3, 2, 1, 0))                  # (kx, ky, cin, cout)
    w2_p = jnp.zeros((3, 3, P, P), jnp.float32).at[:, :, :planes, :planes].set(w2_k)
    w2 = w2_p.reshape(9 * P, P)

    s1, b1 = _fold_bn(*bn1, pad_to=P)
    s2, b2 = _fold_bn(*bn2, pad_to=P)
    s3, b3 = _fold_bn(*bn3, pad_to=cout)

    kernel_params = (w1.astype(jnp.bfloat16), s1, b1,
                     w2.astype(jnp.bfloat16), s2, b2,
                     w3.astype(jnp.bfloat16), s3, b3)
    torch_params = (w1_oihw, bn1, w2_oihw, bn2, w3_oihw, bn3)
    return kernel_params, torch_params


# -----------------------------------------------------------------------------
# Pure-JAX reference (mirrors the PyTorch eval-mode forward), NHWC, f32.
# -----------------------------------------------------------------------------
def bottleneck_reference(x, torch_params, eps=1e-5):
    (w1, bn1, w2, bn2, w3, bn3) = torch_params

    def conv(x, w_oihw, pad):
        w_hwio = jnp.transpose(w_oihw, (2, 3, 1, 0))
        return jax.lax.conv_general_dilated(
            x, w_hwio, window_strides=(1, 1),
            padding=[(pad, pad), (pad, pad)],
            dimension_numbers=("NHWC", "HWIO", "NHWC"))

    def bn(x, p):
        gamma, beta, mean, var = p
        inv = gamma / jnp.sqrt(var + eps)
        return x * inv + (beta - mean * inv)

    out = jax.nn.relu(bn(conv(x, w1, 0), bn1))
    out = jax.nn.relu(bn(conv(out, w2, 1), bn2))
    out = bn(conv(out, w3, 0), bn3)
    return jax.nn.relu(out + x)


if __name__ == "__main__":
    # Small shapes implied by the module: inplanes = planes * expansion so the
    # identity residual is valid (downsample=None).  NHWC end-to-end.
    N, H, W = 2, 16, 16
    planes, expansion = 4, 4
    inplanes = planes * expansion  # 16

    key = jax.random.PRNGKey(0)
    kx, kp = jax.random.split(key)
    x = jax.random.normal(kx, (N, H, W, inplanes), jnp.float32)

    kernel_params, torch_params = make_params(inplanes, planes, expansion, kp)

    run = jax.jit(functools.partial(bottleneck_pallas, params=kernel_params))
    out = jax.block_until_ready(run(x))

    ref = bottleneck_reference(x, torch_params)
    assert out.shape == (N, H, W, inplanes)
    max_err = float(jnp.max(jnp.abs(out - ref)))
    # bf16 matmul operands (f32 accumulate) -> slightly loosened tolerance.
    assert jnp.allclose(out, ref, rtol=2e-2, atol=2e-2), max_err

    print("KERNEL_OK")
</pallas_src>

<mosaic_0001>
module attributes {stable_mosaic.version = 11 : i64} {
  func.func @_bottleneck_kernel(%arg0: i32, %arg1: memref<1x256x16xf32, #tpu.memory_space<vmem>>, %arg2: memref<16x128xbf16, #tpu.memory_space<vmem>>, %arg3: memref<1x128xf32, #tpu.memory_space<vmem>>, %arg4: memref<1x128xf32, #tpu.memory_space<vmem>>, %arg5: memref<1152x128xbf16, #tpu.memory_space<vmem>>, %arg6: memref<1x128xf32, #tpu.memory_space<vmem>>, %arg7: memref<1x128xf32, #tpu.memory_space<vmem>>, %arg8: memref<128x16xbf16, #tpu.memory_space<vmem>>, %arg9: memref<1x16xf32, #tpu.memory_space<vmem>>, %arg10: memref<1x16xf32, #tpu.memory_space<vmem>>, %arg11: memref<1x256x16xf32, #tpu.memory_space<vmem>>, %arg12: memref<288x128xf32, #tpu.memory_space<vmem>>) attributes {dimension_semantics = [#tpu.dimension_semantics<parallel>], iteration_bounds = array<i64: 2>, scalar_prefetch = 0 : i64, scratch_operands = 1 : i64, tpu.core_type = #tpu.core_type<tc>, window_params = [{transform_indices = @transform_0, window_bounds = array<i64: 1, 256, 16>}, {pipeline_mode = #tpu.pipeline_mode<synchronous>, transform_indices = @transform_1, window_bounds = array<i64: 16, 128>}, {pipeline_mode = #tpu.pipeline_mode<synchronous>, transform_indices = @transform_2, window_bounds = array<i64: 1, 128>}, {pipeline_mode = #tpu.pipeline_mode<synchronous>, transform_indices = @transform_3, window_bounds = array<i64: 1, 128>}, {pipeline_mode = #tpu.pipeline_mode<synchronous>, transform_indices = @transform_4, window_bounds = array<i64: 1152, 128>}, {pipeline_mode = #tpu.pipeline_mode<synchronous>, transform_indices = @transform_5, window_bounds = array<i64: 1, 128>}, {pipeline_mode = #tpu.pipeline_mode<synchronous>, transform_indices = @transform_6, window_bounds = array<i64: 1, 128>}, {pipeline_mode = #tpu.pipeline_mode<synchronous>, transform_indices = @transform_7, window_bounds = array<i64: 128, 16>}, {pipeline_mode = #tpu.pipeline_mode<synchronous>, transform_indices = @transform_8, window_bounds = array<i64: 1, 16>}, {pipeline_mode = #tpu.pipeline_mode<synchronous>, transform_indices = @transform_9, window_bounds = array<i64: 1, 16>}, {transform_indices = @transform_10, window_bounds = array<i64: 1, 256, 16>}]} {
    %c0 = arith.constant 0 : index
    %c0_0 = arith.constant 0 : index
    %c0_1 = arith.constant 0 : index
    %0 = vector.load %arg1[%c0, %c0_0, %c0_1] : memref<1x256x16xf32, #tpu.memory_space<vmem>>, vector<1x256x16xf32>
    %1 = vector.shape_cast %0 : vector<1x256x16xf32> to vector<256x16xf32>
    %2 = arith.truncf %1 : vector<256x16xf32> to vector<256x16xbf16>
    %c0_2 = arith.constant 0 : index
    %c0_3 = arith.constant 0 : index
    %3 = vector.load %arg2[%c0_2, %c0_3] : memref<16x128xbf16, #tpu.memory_space<vmem>>, vector<16x128xbf16>
    %cst = arith.constant dense<0.000000e+00> : vector<256x128xf32>
    %4 = tpu.matmul %2, %3, %cst {dimension_numbers = #tpu.dot_dimension_numbers<[1], [0], [0], [1], [0, 0, 1, 1], [], []>} : vector<256x16xbf16>, vector<16x128xbf16>, vector<256x128xf32> -> vector<256x128xf32>
    %c0_4 = arith.constant 0 : index
    %c0_5 = arith.constant 0 : index
    %5 = vector.load %arg3[%c0_4, %c0_5] : memref<1x128xf32, #tpu.memory_space<vmem>>, vector<1x128xf32>
    %6 = vector.broadcast %5 : vector<1x128xf32> to vector<256x128xf32>
    %7 = arith.mulf %4, %6 : vector<256x128xf32>
    %c0_6 = arith.constant 0 : index
    %c0_7 = arith.constant 0 : index
    %8 = vector.load %arg4[%c0_6, %c0_7] : memref<1x128xf32, #tpu.memory_space<vmem>>, vector<1x128xf32>
    %9 = vector.broadcast %8 : vector<1x128xf32> to vector<256x128xf32>
    %10 = arith.addf %7, %9 : vector<256x128xf32>
    %cst_8 = arith.constant 0.000000e+00 : f32
    %11 = vector.broadcast %cst_8 : f32 to vector<256x128xf32>
    %12 = arith.maximumf %10, %11 : vector<256x128xf32>
    %cst_9 = arith.constant 0.000000e+00 : f32
    %13 = vector.broadcast %cst_9 : f32 to vector<16x128xf32>
    %c0_10 = arith.constant 0 : index
    %c0_11 = arith.constant 0 : index
    %14 = vector.load %arg12[%c0_10, %c0_11] : memref<288x128xf32, #tpu.memory_space<vmem>>, vector<16x128xf32>
    tpu.vector_store %arg12[%c0_10, %c0_11], %13 {strides = array<i32>} : memref<288x128xf32, #tpu.memory_space<vmem>>, vector<16x128xf32>,
    %cst_12 = arith.constant 0.000000e+00 : f32
    %15 = vector.broadcast %cst_12 : f32 to vector<16x128xf32>
    %c272 = arith.constant 272 : index
    %c0_13 = arith.constant 0 : index
    %16 = vector.load %arg12[%c272, %c0_13] : memref<288x128xf32, #tpu.memory_space<vmem>>, vector<16x128xf32>
    tpu.vector_store %arg12[%c272, %c0_13], %15 {strides = array<i32>} : memref<288x128xf32, #tpu.memory_space<vmem>>, vector<16x128xf32>,
    %c16 = arith.constant 16 : index
    %c0_14 = arith.constant 0 : index
    %17 = vector.load %arg12[%c16, %c0_14] : memref<288x128xf32, #tpu.memory_space<vmem>>, vector<256x128xf32>
    tpu.vector_store %arg12[%c16, %c0_14], %12 {strides = array<i32>} : memref<288x128xf32, #tpu.memory_space<vmem>>, vector<256x128xf32>,
    %c0_15 = arith.constant 0 : index
    %c0_16 = arith.constant 0 : index
    %18 = vector.load %arg12[%c0_15, %c0_16] : memref<288x128xf32, #tpu.memory_space<vmem>>, vector<288x128xf32>
    %19 = tpu.iota {dimensions = array<i32: 0>} : vector<288x1xi32>
    %c16_i32 = arith.constant 16 : i32
    %c0_i32 = arith.constant 0 : i32
    %20 = arith.cmpi eq, %c16_i32, %c0_i32 : i32
    %c1_i32 = arith.constant 1 : i32
    %21 = arith.select %20, %c1_i32, %c16_i32 : i32
    %22 = vector.broadcast %21 : i32 to vector<288x1xi32>
    %23 = arith.remsi %19, %22 : vector<288x1xi32>
    %c0_i32_17 = arith.constant 0 : i32
    %24 = vector.broadcast %c0_i32_17 : i32 to vector<288x1xi32>
    %25 = arith.cmpi ne, %23, %24 : vector<288x1xi32>
    %c0_i32_18 = arith.constant 0 : i32
    %26 = vector.broadcast %c0_i32_18 : i32 to vector<288x1xi32>
    %27 = arith.cmpi slt, %23, %26 : vector<288x1xi32>
    %c0_i32_19 = arith.constant 0 : i32
    %28 = arith.cmpi slt, %21, %c0_i32_19 : i32
    %29 = vector.broadcast %28 : i1 to vector<288x1xi1>
    %30 = vector.broadcast %29 : vector<288x1xi1> to vector<288x1xi1>
    %31 = arith.xori %27, %30 : vector<288x1xi1>
    %32 = arith.andi %31, %25 : vector<288x1xi1>
    %33 = vector.broadcast %21 : i32 to vector<288x1xi32>
    %34 = arith.addi %23, %33 : vector<288x1xi32>
    %35 = arith.select %32, %34, %23 : vector<288x1xi1>, vector<288x1xi32>
    %c15_i32 = arith.constant 15 : i32
    %36 = vector.broadcast %c15_i32 : i32 to vector<288x1xi32>
    %37 = arith.cmpi ne, %35, %36 : vector<288x1xi32>
    %38 = arith.extui %37 : vector<288x1xi1> to vector<288x1xi32>
    %39 = arith.sitofp %38 : vector<288x1xi32> to vector<288x1xf32>
    %c0_i32_20 = arith.constant 0 : i32
    %40 = vector.broadcast %c0_i32_20 : i32 to vector<288x1xi32>
    %41 = arith.cmpi ne, %35, %40 : vector<288x1xi32>
    %42 = arith.extui %41 : vector<288x1xi1> to vector<288x1xi32>
    %43 = arith.sitofp %42 : vector<288x1xi32> to vector<288x1xf32>
    %44 = vector.broadcast %39 : vector<288x1xf32> to vector<288x128xf32>
    %45 = arith.mulf %18, %44 : vector<288x128xf32>
    %c1_i32_21 = arith.constant 1 : i32
    %46 = tpu.dynamic_rotate %45 by %c1_i32_21 dim 0 : vector<288x128xf32>, i32 -> vector<288x128xf32>
    %47 = arith.truncf %46 : vector<288x128xf32> to vector<288x128xbf16>
    %48 = arith.truncf %18 : vector<288x128xf32> to vector<288x128xbf16>
    %49 = vector.broadcast %43 : vector<288x1xf32> to vector<288x128xf32>
    %50 = arith.mulf %18, %49 : vector<288x128xf32>
    %c287_i32 = arith.constant 287 : i32
    %51 = tpu.dynamic_rotate %50 by %c287_i32 dim 0 : vector<288x128xf32>, i32 -> vector<288x128xf32>
    %52 = arith.truncf %51 : vector<288x128xf32> to vector<288x128xbf16>
    %53 = vector.extract_strided_slice %47 {offsets = [0, 0], sizes = [256, 128], strides = [1, 1]} : vector<288x128xbf16> to vector<256x128xbf16>
    %54 = vector.extract_strided_slice %47 {offsets = [16, 0], sizes = [256, 128], strides = [1, 1]} : vector<288x128xbf16> to vector<256x128xbf16>
    %55 = vector.extract_strided_slice %47 {offsets = [32, 0], sizes = [256, 128], strides = [1, 1]} : vector<288x128xbf16> to vector<256x128xbf16>
    %56 = vector.extract_strided_slice %48 {offsets = [0, 0], sizes = [256, 128], strides = [1, 1]} : vector<288x128xbf16> to vector<256x128xbf16>
    %57 = vector.extract_strided_slice %48 {offsets = [16, 0], sizes = [256, 128], strides = [1, 1]} : vector<288x128xbf16> to vector<256x128xbf16>
    %58 = vector.extract_strided_slice %48 {offsets = [32, 0], sizes = [256, 128], strides = [1, 1]} : vector<288x128xbf16> to vector<256x128xbf16>
    %59 = vector.extract_strided_slice %52 {offsets = [0, 0], sizes = [256, 128], strides = [1, 1]} : vector<288x128xbf16> to vector<256x128xbf16>
    %60 = vector.extract_strided_slice %52 {offsets = [16, 0], sizes = [256, 128], strides = [1, 1]} : vector<288x128xbf16> to vector<256x128xbf16>
    %61 = vector.extract_strided_slice %52 {offsets = [32, 0], sizes = [256, 128], strides = [1, 1]} : vector<288x128xbf16> to vector<256x128xbf16>
    %62 = tpu.concatenate %53, %54, %55, %56, %57, %58, %59, %60, %61 in 1 : vector<256x128xbf16>, vector<256x128xbf16>, vector<256x128xbf16>, vector<256x128xbf16>, vector<256x128xbf16>, vector<256x128xbf16>, vector<256x128xbf16>, vector<256x128xbf16>, vector<256x128xbf16> -> vector<256x1152xbf16>
    %c0_22 = arith.constant 0 : index
    %c0_23 = arith.constant 0 : index
    %63 = vector.load %arg5[%c0_22, %c0_23] : memref<1152x128xbf16, #tpu.memory_space<vmem>>, vector<1152x128xbf16>
    %cst_24 = arith.constant dense<0.000000e+00> : vector<256x128xf32>
    %64 = tpu.matmul %62, %63, %cst_24 {dimension_numbers = #tpu.dot_dimension_numbers<[1], [0], [0], [1], [0, 0, 1, 1], [], []>} : vector<256x1152xbf16>, vector<1152x128xbf16>, vector<256x128xf32> -> vector<256x128xf32>
    %c0_25 = arith.constant 0 : index
    %c0_26 = arith.constant 0 : index
    %65 = vector.load %arg6[%c0_25, %c0_26] : memref<1x128xf32, #tpu.memory_space<vmem>>, vector<1x128xf32>
    %66 = vector.broadcast %65 : vector<1x128xf32> to vector<256x128xf32>
    %67 = arith.mulf %64, %66 : vector<256x128xf32>
    %c0_27 = arith.constant 0 : index
    %c0_28 = arith.constant 0 : index
    %68 = vector.load %arg7[%c0_27, %c0_28] : memref<1x128xf32, #tpu.memory_space<vmem>>, vector<1x128xf32>
    %69 = vector.broadcast %68 : vector<1x128xf32> to vector<256x128xf32>
    %70 = arith.addf %67, %69 : vector<256x128xf32>
    %cst_29 = arith.constant 0.000000e+00 : f32
    %71 = vector.broadcast %cst_29 : f32 to vector<256x128xf32>
    %72 = arith.maximumf %70, %71 : vector<256x128xf32>
    %73 = arith.truncf %72 : vector<256x128xf32> to vector<256x128xbf16>
    %c0_30 = arith.constant 0 : index
    %c0_31 = arith.constant 0 : index
    %74 = vector.load %arg8[%c0_30, %c0_31] : memref<128x16xbf16, #tpu.memory_space<vmem>>, vector<128x16xbf16>
    %cst_32 = arith.constant dense<0.000000e+00> : vector<256x16xf32>
    %75 = tpu.matmul %73, %74, %cst_32 {dimension_numbers = #tpu.dot_dimension_numbers<[1], [0], [0], [1], [0, 0, 1, 1], [], []>} : vector<256x128xbf16>, vector<128x16xbf16>, vector<256x16xf32> -> vector<256x16xf32>
    %c0_33 = arith.constant 0 : index
    %c0_34 = arith.constant 0 : index
    %76 = vector.load %arg9[%c0_33, %c0_34] : memref<1x16xf32, #tpu.memory_space<vmem>>, vector<1x16xf32>
    %77 = vector.broadcast %76 : vector<1x16xf32> to vector<256x16xf32>
    %78 = arith.mulf %75, %77 : vector<256x16xf32>
    %c0_35 = arith.constant 0 : index
    %c0_36 = arith.constant 0 : index
    %79 = vector.load %arg10[%c0_35, %c0_36] : memref<1x16xf32, #tpu.memory_space<vmem>>, vector<1x16xf32>
    %80 = vector.broadcast %79 : vector<1x16xf32> to vector<256x16xf32>
    %81 = arith.addf %78, %80 : vector<256x16xf32>
    %c0_37 = arith.constant 0 : index
    %c0_38 = arith.constant 0 : index
    %c0_39 = arith.constant 0 : index
    %82 = vector.load %arg1[%c0_37, %c0_38, %c0_39] : memref<1x256x16xf32, #tpu.memory_space<vmem>>, vector<1x256x16xf32>
    %83 = vector.shape_cast %82 : vector<1x256x16xf32> to vector<256x16xf32>
    %84 = arith.addf %81, %83 : vector<256x16xf32>
    %cst_40 = arith.constant 0.000000e+00 : f32
    %85 = vector.broadcast %cst_40 : f32 to vector<256x16xf32>
    %86 = arith.maximumf %84, %85 : vector<256x16xf32>
    %c0_41 = arith.constant 0 : index
    %c0_42 = arith.constant 0 : index
    %c0_43 = arith.constant 0 : index
    %87 = vector.load %arg11[%c0_41, %c0_42, %c0_43] : memref<1x256x16xf32, #tpu.memory_space<vmem>>, vector<1x256x16xf32>
    %88 = vector.shape_cast %87 : vector<1x256x16xf32> to vector<256x16xf32>
    %89 = vector.shape_cast %86 : vector<256x16xf32> to vector<1x256x16xf32>
    tpu.vector_store %arg11[%c0_41, %c0_42, %c0_43], %89 {strides = array<i32>} : memref<1x256x16xf32, #tpu.memory_space<vmem>>, vector<1x256x16xf32>,
    return
  }
  func.func @transform_0(%arg0: i32) -> (i32, i32, i32) {
    %c0_i32 = arith.constant 0 : i32
    %c0_i32_0 = arith.constant 0 : i32
    %c0_i32_1 = arith.constant 0 : i32
    return %arg0, %c0_i32, %c0_i32_0 : i32, i32, i32
  }
  func.func @transform_1(%arg0: i32) -> (i32, i32) {
    %c0_i32 = arith.constant 0 : i32
    %c0_i32_0 = arith.constant 0 : i32
    %c0_i32_1 = arith.constant 0 : i32
    return %c0_i32, %c0_i32_0 : i32, i32
  }
  func.func @transform_2(%arg0: i32) -> (i32, i32) {
    %c0_i32 = arith.constant 0 : i32
    %c0_i32_0 = arith.constant 0 : i32
    %c0_i32_1 = arith.constant 0 : i32
    return %c0_i32, %c0_i32_0 : i32, i32
  }
  func.func @transform_3(%arg0: i32) -> (i32, i32) {
    %c0_i32 = arith.constant 0 : i32
    %c0_i32_0 = arith.constant 0 : i32
    %c0_i32_1 = arith.constant 0 : i32
    return %c0_i32, %c0_i32_0 : i32, i32
  }
  func.func @transform_4(%arg0: i32) -> (i32, i32) {
    %c0_i32 = arith.constant 0 : i32
    %c0_i32_0 = arith.constant 0 : i32
    %c0_i32_1 = arith.constant 0 : i32
    return %c0_i32, %c0_i32_0 : i32, i32
  }
  func.func @transform_5(%arg0: i32) -> (i32, i32) {
    %c0_i32 = arith.constant 0 : i32
    %c0_i32_0 = arith.constant 0 : i32
    %c0_i32_1 = arith.constant 0 : i32
    return %c0_i32, %c0_i32_0 : i32, i32
  }
  func.func @transform_6(%arg0: i32) -> (i32, i32) {
    %c0_i32 = arith.constant 0 : i32
    %c0_i32_0 = arith.constant 0 : i32
    %c0_i32_1 = arith.constant 0 : i32
    return %c0_i32, %c0_i32_0 : i32, i32
  }
  func.func @transform_7(%arg0: i32) -> (i32, i32) {
    %c0_i32 = arith.constant 0 : i32
    %c0_i32_0 = arith.constant 0 : i32
    %c0_i32_1 = arith.constant 0 : i32
    return %c0_i32, %c0_i32_0 : i32, i32
  }
  func.func @transform_8(%arg0: i32) -> (i32, i32) {
    %c0_i32 = arith.constant 0 : i32
    %c0_i32_0 = arith.constant 0 : i32
    %c0_i32_1 = arith.constant 0 : i32
    return %c0_i32, %c0_i32_0 : i32, i32
  }
  func.func @transform_9(%arg0: i32) -> (i32, i32) {
    %c0_i32 = arith.constant 0 : i32
    %c0_i32_0 = arith.constant 0 : i32
    %c0_i32_1 = arith.constant 0 : i32
    return %c0_i32, %c0_i32_0 : i32, i32
  }
  func.func @transform_10(%arg0: i32) -> (i32, i32, i32) {
    %c0_i32 = arith.constant 0 : i32
    %c0_i32_0 = arith.constant 0 : i32
    %c0_i32_1 = arith.constant 0 : i32
    return %arg0, %c0_i32, %c0_i32_0 : i32, i32, i32
  }
}

</mosaic_0001>

<llo_original>
// kernel: bottleneck_pallas.1
$region0: #{bottleneck_pallas.1}
  #allocation0 [shape = 'u32[]', space=smem, size = 0x4, offset = 0x4, fixed_abs, tag = 'smem constant byte address 0x4 - core index']
  #allocation1 [shape = 'u32[144,128]{1,0:T(1,128)}', space=vmem, size = 0x12000, scoped, tag = 'internal scratch']
  #allocation2 [shape = 'f32[288,128]{1,0:T(8,128)}', space=vmem, size = 0x24000, scoped, tag = 'scratch operand']
  %s0 = inlined_call_operand.hbm [shape: f32[2,256,16], index: 0, kind: input, shape index: {}]
  %s1 = inlined_call_operand.hbm [shape: bf16[16,128], index: 1, kind: input, shape index: {}]
  %s2 = inlined_call_operand.vmem [shape: f32[1,128], index: 2, kind: input, shape index: {}, may-alias: {2,5}]
  %s3 = inlined_call_operand.vmem [shape: f32[1,128], index: 3, kind: input, shape index: {}, may-alias: {3,6}]
  %s4 = inlined_call_operand.hbm [shape: bf16[1152,128], index: 4, kind: input, shape index: {}]
  %s5 = inlined_call_operand.vmem [shape: f32[1,128], index: 5, kind: input, shape index: {}, may-alias: {2,5}]
  %s6 = inlined_call_operand.vmem [shape: f32[1,128], index: 6, kind: input, shape index: {}, may-alias: {3,6}]
  %s7 = inlined_call_operand.hbm [shape: bf16[128,16], index: 7, kind: input, shape index: {}]
  %s8 = inlined_call_operand.vmem [shape: f32[1,16], index: 8, kind: input, shape index: {}]
  %s9 = inlined_call_operand.vmem [shape: f32[1,16], index: 9, kind: input, shape index: {}]
  %s10 = inlined_call_operand.hbm [shape: f32[2,256,16], index: 10, kind: output, shape index: {}]
  %s11 = sld [smem:[#allocation0]]
  $region89: #{bottleneck_pallas.1} parent=0
    _
  %s13 = ssub.s32 1, %s11
  %s14 = scalar_select 0, %s13, %s11
  $region1: #{bottleneck_pallas.1} parent=0
    #allocation3 [shape = 'u8[262144]{0}', space=vmem, size = 0x40000, scoped, tag = 'input window, operand 0']
    #allocation4 [shape = 's32[2]{0}', space=sflag, size = 0x8, scoped, tag = 'scoped memory for bottleneck_pallas.1']
    #allocation5 [shape = 's32[2]{0}', space=sflag, size = 0x8, scoped, tag = 'scoped memory for bottleneck_pallas.1']
    #allocation6 [shape = 'u8[4096]{0}', space=vmem, size = 0x1000, scoped, tag = 'input window, operand 1, single buffered']
    #allocation7 [shape = 's32[1]{0}', space=sflag, size = 0x4, scoped, tag = 'scoped memory for bottleneck_pallas.1']
    #allocation8 [shape = 'u8[294912]{0}', space=vmem, size = 0x48000, scoped, tag = 'input window, operand 4, single buffered']
    #allocation9 [shape = 'u8[32768]{0}', space=vmem, size = 0x8000, scoped, tag = 'input window, operand 7, single buffered']
    #allocation10 [shape = 's32[1]{0}', space=sflag, size = 0x4, scoped, tag = 'scoped memory for bottleneck_pallas.1']
    #allocation11 [shape = 'u8[262144]{0}', space=vmem, size = 0x40000, scoped, tag = 'output window, operand 0']
    %15 = vsyncpa [#allocation4], 0
    %s16 = scalar_lea.sflag [#allocation4], 1
    %17 = vsyncpa %s16, 0
    %18 = vsyncpa [#allocation7], 0
    %19 = vsyncpa [#allocation10], 0
    %20 = vsyncpa [#allocation5], 0
    %s21 = scalar_lea.sflag [#allocation5], 1
    %22 = vsyncpa %s21, 0
    loop: start=0, step=1, limit=4
    $region2: #{bottleneck_pallas.1} parent=1 // loop_pre_header
      _
    $region3: #{bottleneck_pallas.1} parent=1 // loop_header
      %s24 = sphi 0, %s28
      %p25 = scmp.ge.s32.totalorder %s24, 4
      %s34 = sphi 0, %s36
      %s37 = sphi 0, %s34
      %s38 = sphi 0, %s37
      %s54 = sphi 0, %s38
      %s58 = sphi 0, %s58
      %s60 = sphi 0, %s58
      %s61 = sphi 0, %s60
      %s75 = sphi 0, %s61
      %s79 = sphi 0, %s79
      %s81 = sphi 0, %s79
      %s82 = sphi 0, %s81
      %s96 = sphi 0, %s82
      %s100 = sphi 0, %s100
      %s102 = sphi 0, %s100
      %s103 = sphi 0, %s102
      %s117 = sphi 0, %s103
      %s121 = sphi 0, %s121
      %s123 = sphi 0, %s121
      %s124 = sphi 0, %s123
      %s138 = sphi 0, %s124
      %s142 = sphi 0, %s142
      %s144 = sphi 0, %s142
      %s145 = sphi 0, %s144
      %s159 = sphi 0, %s145
      %s163 = sphi 0, %s163
      %s165 = sphi 0, %s163
      %s166 = sphi 0, %s165
      %s180 = sphi 0, %s166
      %s184 = sphi 0, %s184
      %s186 = sphi 0, %s184
      %s187 = sphi 0, %s186
      %s201 = sphi 0, %s187
      %s205 = sphi 0, %s205
      %s207 = sphi 0, %s205
      %s208 = sphi 0, %s207
      %s222 = sphi 0, %s208
      %s226 = sphi 0, %s226
      %s228 = sphi 0, %s226
      %s229 = sphi 0, %s228
      %s243 = sphi 0, %s229
      %s249 = sphi 0, %s251
      %s252 = sphi 0, %s249
      %s253 = sphi 0, %s252
      %s269 = sphi 0, %s253
    $region4: #{bottleneck_pallas.1} parent=1 // loop_header_branch
      %27 = sbr.rel (%p25) target = $region8
    $region5: #{bottleneck_pallas.1} parent=1 // loop_body
      %s29 = ssub.s32 %s24, 1
      %s30 = ssub.s32 %s24, 2
      %s31 = sadd.s32 %s24, 1
      %s32 = ssub.s32 %s24, %s31
      %p33 = scmp.eq.s32.totalorder %s32, 0
      %s35 = sadd.s32 %s34, 1
      %s36 = scalar_select %p33, %s34, %s35
      %p39 = pneg %p33
      %p40 = scmp.eq.s32.totalorder %s24, 1
      %p41 = por %p39, %p40
      %p42 = scmp.ne.s32.totalorder %s34, %s37
      %p43 = scmp.eq.s32.totalorder %s24, 0
      %p44 = por %p42, %p43
      %p45 = scmp.ne.s32.totalorder %s34, %s37
      %p46 = scmp.eq.s32.totalorder %s29, 1
      %p47 = por %p45, %p46
      %p48 = scmp.ne.s32.totalorder %s37, %s38
      %p49 = scmp.eq.s32.totalorder %s29, 0
      %p50 = por %p48, %p49
      %p51 = scmp.ne.s32.totalorder %s37, %s38
      %p52 = scmp.eq.s32.totalorder %s30, 1
      %p53 = por %p51, %p52
      %p55 = scmp.ne.s32.totalorder %s38, %s54
      %p56 = scmp.eq.s32.totalorder %s30, 0
      %p57 = por %p55, %p56
      %s59 = sadd.s32 %s58, 1
      %p62 = scmp.eq.s32.totalorder %s24, 1
      %p63 = scmp.ne.s32.totalorder %s58, %s60
      %p64 = scmp.eq.s32.totalorder %s24, 0
      %p65 = por %p63, %p64
      %p66 = scmp.ne.s32.totalorder %s58, %s60
      %p67 = scmp.eq.s32.totalorder %s29, 1
      %p68 = por %p66, %p67
      %p69 = scmp.ne.s32.totalorder %s60, %s61
      %p70 = scmp.eq.s32.totalorder %s29, 0
      %p71 = por %p69, %p70
      %p72 = scmp.ne.s32.totalorder %s60, %s61
      %p73 = scmp.eq.s32.totalorder %s30, 1
      %p74 = por %p72, %p73
      %p76 = scmp.ne.s32.totalorder %s61, %s75
      %p77 = scmp.eq.s32.totalorder %s30, 0
      %p78 = por %p76, %p77
      %s80 = sadd.s32 %s79, 1
      %p83 = scmp.eq.s32.totalorder %s24, 1
      %p84 = scmp.ne.s32.totalorder %s79, %s81
      %p85 = scmp.eq.s32.totalorder %s24, 0
      %p86 = por %p84, %p85
      %p87 = scmp.ne.s32.totalorder %s79, %s81
      %p88 = scmp.eq.s32.totalorder %s29, 1
      %p89 = por %p87, %p88
      %p90 = scmp.ne.s32.totalorder %s81, %s82
      %p91 = scmp.eq.s32.totalorder %s29, 0
      %p92 = por %p90, %p91
      %p93 = scmp.ne.s32.totalorder %s81, %s82
      %p94 = scmp.eq.s32.totalorder %s30, 1
      %p95 = por %p93, %p94
      %p97 = scmp.ne.s32.totalorder %s82, %s96
      %p98 = scmp.eq.s32.totalorder %s30, 0
      %p99 = por %p97, %p98
      %s101 = sadd.s32 %s100, 1
      %p104 = scmp.eq.s32.totalorder %s24, 1
      %p105 = scmp.ne.s32.totalorder %s100, %s102
      %p106 = scmp.eq.s32.totalorder %s24, 0
      %p107 = por %p105, %p106
      %p108 = scmp.ne.s32.totalorder %s100, %s102
      %p109 = scmp.eq.s32.totalorder %s29, 1
      %p110 = por %p108, %p109
      %p111 = scmp.ne.s32.totalorder %s102, %s103
      %p112 = scmp.eq.s32.totalorder %s29, 0
      %p113 = por %p111, %p112
      %p114 = scmp.ne.s32.totalorder %s102, %s103
      %p115 = scmp.eq.s32.totalorder %s30, 1
      %p116 = por %p114, %p115
      %p118 = scmp.ne.s32.totalorder %s103, %s117
      %p119 = scmp.eq.s32.totalorder %s30, 0
      %p120 = por %p118, %p119
      %s122 = sadd.s32 %s121, 1
      %p125 = scmp.eq.s32.totalorder %s24, 1
      %p126 = scmp.ne.s32.totalorder %s121, %s123
      %p127 = scmp.eq.s32.totalorder %s24, 0
      %p128 = por %p126, %p127
      %p129 = scmp.ne.s32.totalorder %s121, %s123
      %p130 = scmp.eq.s32.totalorder %s29, 1
      %p131 = por %p129, %p130
      %p132 = scmp.ne.s32.totalorder %s123, %s124
      %p133 = scmp.eq.s32.totalorder %s29, 0
      %p134 = por %p132, %p133
      %p135 = scmp.ne.s32.totalorder %s123, %s124
      %p136 = scmp.eq.s32.totalorder %s30, 1
      %p137 = por %p135, %p136
      %p139 = scmp.ne.s32.totalorder %s124, %s138
      %p140 = scmp.eq.s32.totalorder %s30, 0
      %p141 = por %p139, %p140
      %s143 = sadd.s32 %s142, 1
      %p146 = scmp.eq.s32.totalorder %s24, 1
      %p147 = scmp.ne.s32.totalorder %s142, %s144
      %p148 = scmp.eq.s32.totalorder %s24, 0
      %p149 = por %p147, %p148
      %p150 = scmp.ne.s32.totalorder %s142, %s144
      %p151 = scmp.eq.s32.totalorder %s29, 1
      %p152 = por %p150, %p151
      %p153 = scmp.ne.s32.totalorder %s144, %s145
      %p154 = scmp.eq.s32.totalorder %s29, 0
      %p155 = por %p153, %p154
      %p156 = scmp.ne.s32.totalorder %s144, %s145
      %p157 = scmp.eq.s32.totalorder %s30, 1
      %p158 = por %p156, %p157
      %p160 = scmp.ne.s32.totalorder %s145, %s159
      %p161 = scmp.eq.s32.totalorder %s30, 0
      %p162 = por %p160, %p161
      %s164 = sadd.s32 %s163, 1
      %p167 = scmp.eq.s32.totalorder %s24, 1
      %p168 = scmp.ne.s32.totalorder %s163, %s165
      %p169 = scmp.eq.s32.totalorder %s24, 0
      %p170 = por %p168, %p169
      %p171 = scmp.ne.s32.totalorder %s163, %s165
      %p172 = scmp.eq.s32.totalorder %s29, 1
      %p173 = por %p171, %p172
      %p174 = scmp.ne.s32.totalorder %s165, %s166
      %p175 = scmp.eq.s32.totalorder %s29, 0
      %p176 = por %p174, %p175
      %p177 = scmp.ne.s32.totalorder %s165, %s166
      %p178 = scmp.eq.s32.totalorder %s30, 1
      %p179 = por %p177, %p178
      %p181 = scmp.ne.s32.totalorder %s166, %s180
      %p182 = scmp.eq.s32.totalorder %s30, 0
      %p183 = por %p181, %p182
      %s185 = sadd.s32 %s184, 1
      %p188 = scmp.eq.s32.totalorder %s24, 1
      %p189 = scmp.ne.s32.totalorder %s184, %s186
      %p190 = scmp.eq.s32.totalorder %s24, 0
      %p191 = por %p189, %p190
      %p192 = scmp.ne.s32.totalorder %s184, %s186
      %p193 = scmp.eq.s32.totalorder %s29, 1
      %p194 = por %p192, %p193
      %p195 = scmp.ne.s32.totalorder %s186, %s187
      %p196 = scmp.eq.s32.totalorder %s29, 0
      %p197 = por %p195, %p196
      %p198 = scmp.ne.s32.totalorder %s186, %s187
      %p199 = scmp.eq.s32.totalorder %s30, 1
      %p200 = por %p198, %p199
      %p202 = scmp.ne.s32.totalorder %s187, %s201
      %p203 = scmp.eq.s32.totalorder %s30, 0
      %p204 = por %p202, %p203
      %s206 = sadd.s32 %s205, 1
      %p209 = scmp.eq.s32.totalorder %s24, 1
      %p210 = scmp.ne.s32.totalorder %s205, %s207
      %p211 = scmp.eq.s32.totalorder %s24, 0
      %p212 = por %p210, %p211
      %p213 = scmp.ne.s32.totalorder %s205, %s207
      %p214 = scmp.eq.s32.totalorder %s29, 1
      %p215 = por %p213, %p214
      %p216 = scmp.ne.s32.totalorder %s207, %s208
      %p217 = scmp.eq.s32.totalorder %s29, 0
      %p218 = por %p216, %p217
      %p219 = scmp.ne.s32.totalorder %s207, %s208
      %p220 = scmp.eq.s32.totalorder %s30, 1
      %p221 = por %p219, %p220
      %p223 = scmp.ne.s32.totalorder %s208, %s222
      %p224 = scmp.eq.s32.totalorder %s30, 0
      %p225 = por %p223, %p224
      %s227 = sadd.s32 %s226, 1
      %p230 = scmp.eq.s32.totalorder %s24, 1
      %p231 = scmp.ne.s32.totalorder %s226, %s228
      %p232 = scmp.eq.s32.totalorder %s24, 0
      %p233 = por %p231, %p232
      %p234 = scmp.ne.s32.totalorder %s226, %s228
      %p235 = scmp.eq.s32.totalorder %s29, 1
      %p236 = por %p234, %p235
      %p237 = scmp.ne.s32.totalorder %s228, %s229
      %p238 = scmp.eq.s32.totalorder %s29, 0
      %p239 = por %p237, %p238
      %p240 = scmp.ne.s32.totalorder %s228, %s229
      %p241 = scmp.eq.s32.totalorder %s30, 1
      %p242 = por %p240, %p241
      %p244 = scmp.ne.s32.totalorder %s229, %s243
      %p245 = scmp.eq.s32.totalorder %s30, 0
      %p246 = por %p244, %p245
      %s247 = ssub.s32 %s24, %s31
      %p248 = scmp.eq.s32.totalorder %s247, 0
      %s250 = sadd.s32 %s249, 1
      %s251 = scalar_select %p248, %s249, %s250
      %p254 = pneg %p248
      %p255 = scmp.eq.s32.totalorder %s24, 1
      %p256 = por %p254, %p255
      %p257 = scmp.ne.s32.totalorder %s249, %s252
      %p258 = scmp.eq.s32.totalorder %s24, 0
      %p259 = por %p257, %p258
      %p260 = scmp.ne.s32.totalorder %s249, %s252
      %p261 = scmp.eq.s32.totalorder %s29, 1
      %p262 = por %p260, %p261
      %p263 = scmp.ne.s32.totalorder %s252, %s253
      %p264 = scmp.eq.s32.totalorder %s29, 0
      %p265 = por %p263, %p264
      %p266 = scmp.ne.s32.totalorder %s252, %s253
      %p267 = scmp.eq.s32.totalorder %s30, 1
      %p268 = por %p266, %p267
      %p270 = scmp.ne.s32.totalorder %s253, %s269
      %p271 = scmp.eq.s32.totalorder %s30, 0
      %p272 = por %p270, %p271
      %p273 = scmp.le.s32.totalorder 1, %s24
      %p274 = scmp.lt.s32.totalorder %s24, 3
      %p275 = pnand %p273, %p274
      %p276 = pneg %p275
      // Predicated region
      $region9: #{bottleneck_pallas.1} parent=5 // pred_check
        _
      $region10: #{bottleneck_pallas.1} parent=5 // pred_check_branch
        %278 = sbr.rel (%p275) target = $region12
      $region11: #{bottleneck_pallas.1} parent=5 // pred_region
        %s279 = ssub.s32 %s24, 1
        // Predicated region
        $region13: #{bottleneck_pallas.1} parent=11 // pred_check
          %p280 = pneg %p71
        $region14: #{bottleneck_pallas.1} parent=11 // pred_check_branch
          %282 = sbr.rel (%p280) target = $region16
        $region15: #{bottleneck_pallas.1} parent=11 // pred_region
          %s284 = ssub.s32 128, 128
          %285 = vsyncadd [#allocation7], %s284
          %s286 = sshll.u32 [#allocation6], 4
          %s287 = int_to_ptr.vmem [resolvable:$true] %s286
          %292 = dma.hbm_to_vmem [thread:$0]  %s1, 128, %s287, [#allocation7], 64, 64, 4
        $region16: #{bottleneck_pallas.1} parent=11 // pred_fallthru
          _
        // Predicated region
        $region17: #{bottleneck_pallas.1} parent=11 // pred_check
          %p293 = pneg %p92
        $region18: #{bottleneck_pallas.1} parent=11 // pred_check_branch
          %295 = sbr.rel (%p293) target = $region20
        $region19: #{bottleneck_pallas.1} parent=11 // pred_region
          _
        $region20: #{bottleneck_pallas.1} parent=11 // pred_fallthru
          _
        // Predicated region
        $region21: #{bottleneck_pallas.1} parent=11 // pred_check
          %p296 = pneg %p113
        $region22: #{bottleneck_pallas.1} parent=11 // pred_check_branch
          %298 = sbr.rel (%p296) target = $region24
        $region23: #{bottleneck_pallas.1} parent=11 // pred_region
          _
        $region24: #{bottleneck_pallas.1} parent=11 // pred_fallthru
          _
        // Predicated region
        $region25: #{bottleneck_pallas.1} parent=11 // pred_check
          %p299 = pneg %p134
        $region26: #{bottleneck_pallas.1} parent=11 // pred_check_branch
          %301 = sbr.rel (%p299) target = $region28
        $region27: #{bottleneck_pallas.1} parent=11 // pred_region
          %s303 = ssub.s32 9216, 9216
          %304 = vsyncadd [#allocation7], %s303
          %s305 = sshll.u32 [#allocation8], 4
          %s306 = int_to_ptr.vmem [resolvable:$true] %s305
          %311 = dma.hbm_to_vmem [thread:$0]  %s4, 9216, %s306, [#allocation7], 64, 64, 4
        $region28: #{bottleneck_pallas.1} parent=11 // pred_fallthru
          _
        // Predicated region
        $region29: #{bottleneck_pallas.1} parent=11 // pred_check
          %p312 = pneg %p155
        $region30: #{bottleneck_pallas.1} parent=11 // pred_check_branch
          %314 = sbr.rel (%p312) target = $region32
        $region31: #{bottleneck_pallas.1} parent=11 // pred_region
          _
        $region32: #{bottleneck_pallas.1} parent=11 // pred_fallthru
          _
        // Predicated region
        $region33: #{bottleneck_pallas.1} parent=11 // pred_check
          %p315 = pneg %p176
        $region34: #{bottleneck_pallas.1} parent=11 // pred_check_branch
          %317 = sbr.rel (%p315) target = $region36
        $region35: #{bottleneck_pallas.1} parent=11 // pred_region
          _
        $region36: #{bottleneck_pallas.1} parent=11 // pred_fallthru
          _
        // Predicated region
        $region37: #{bottleneck_pallas.1} parent=11 // pred_check
          %p318 = pneg %p197
        $region38: #{bottleneck_pallas.1} parent=11 // pred_check_branch
          %320 = sbr.rel (%p318) target = $region40
        $region39: #{bottleneck_pallas.1} parent=11 // pred_region
          %s322 = ssub.s32 1024, 1024
          %323 = vsyncadd [#allocation10], %s322
          %s324 = sshll.u32 [#allocation9], 4
          %s325 = int_to_ptr.vmem [resolvable:$true] %s324
          %330 = dma.hbm_to_vmem [thread:$0]  %s7, 1024, %s325, [#allocation10], 64, 64, 4
        $region40: #{bottleneck_pallas.1} parent=11 // pred_fallthru
          _
        // Predicated region
        $region41: #{bottleneck_pallas.1} parent=11 // pred_check
          %p331 = pneg %p218
        $region42: #{bottleneck_pallas.1} parent=11 // pred_check_branch
          %333 = sbr.rel (%p331) target = $region44
        $region43: #{bottleneck_pallas.1} parent=11 // pred_region
          _
        $region44: #{bottleneck_pallas.1} parent=11 // pred_fallthru
          _
        // Predicated region
        $region45: #{bottleneck_pallas.1} parent=11 // pred_check
          %p334 = pneg %p239
        $region46: #{bottleneck_pallas.1} parent=11 // pred_check_branch
          %336 = sbr.rel (%p334) target = $region48
        $region47: #{bottleneck_pallas.1} parent=11 // pred_region
          _
        $region48: #{bottleneck_pallas.1} parent=11 // pred_fallthru
          _
      $region12: #{bottleneck_pallas.1} parent=5 // pred_fallthru
        _
      %p337 = scmp.lt.s32.totalorder %s24, 2
      // Predicated region
      $region49: #{bottleneck_pallas.1} parent=5 // pred_check
        %p338 = pneg %p337
      $region50: #{bottleneck_pallas.1} parent=5 // pred_check_branch
        %340 = sbr.rel (%p338) target = $region52
      $region51: #{bottleneck_pallas.1} parent=5 // pred_region
        // Predicated region
        $region53: #{bottleneck_pallas.1} parent=51 // pred_check
          %p341 = pneg %p44
        $region54: #{bottleneck_pallas.1} parent=51 // pred_check_branch
          %343 = sbr.rel (%p341) target = $region56
        $region55: #{bottleneck_pallas.1} parent=51 // pred_region
          %s344 = sand.u32 %s34, 1
          %s345 = scalar_lea.sflag [#allocation4], %s344
          %s346 = sand.u32 %s34, 1
          %s347 = smul.addr %s346, 256
          %s348 = scalar_lea.vmem [#allocation3], %s347
          %s350 = ssub.s32 4096, 4096
          %351 = vsyncadd %s345, %s350
          %s352 = smul.addr %s24, 32
          %s353 = smul.addr %s352, 128
          %s354 = scalar_lea.hbm %s0, %s353
          %s355 = sshll.u32 %s348, 4
          %s356 = int_to_ptr.vmem [resolvable:$true] %s355
          %361 = dma.hbm_to_vmem [thread:$0]  %s354, 4096, %s356, %s345, 128, 128, 8
        $region56: #{bottleneck_pallas.1} parent=51 // pred_fallthru
          _
      $region52: #{bottleneck_pallas.1} parent=5 // pred_fallthru
        _
      %p362 = scmp.le.s32.totalorder 1, %s24
      %p363 = scmp.lt.s32.totalorder %s24, 3
      %p364 = pnand %p362, %p363
      %p365 = pneg %p364
      // Predicated region
      $region57: #{bottleneck_pallas.1} parent=5 // pred_check
        _
      $region58: #{bottleneck_pallas.1} parent=5 // pred_check_branch
        %367 = sbr.rel (%p364) target = $region60
      $region59: #{bottleneck_pallas.1} parent=5 // pred_region
        %s368 = ssub.s32 %s24, 1
        %s369 = sand.u32 %s37, 1
        %s370 = scalar_lea.sflag [#allocation4], %s369
        %s371 = sand.u32 %s37, 1
        %s372 = smul.addr %s371, 256
        %s373 = scalar_lea.vmem [#allocation3], %s372
        // Predicated region
        $region61: #{bottleneck_pallas.1} parent=59 // pred_check
          %p374 = pneg %p50
        $region62: #{bottleneck_pallas.1} parent=59 // pred_check_branch
          %376 = sbr.rel (%p374) target = $region64
        $region63: #{bottleneck_pallas.1} parent=59 // pred_region
          %377 = dma.done %s370, 4096
        $region64: #{bottleneck_pallas.1} parent=59 // pred_fallthru
          _
        // Predicated region
        $region65: #{bottleneck_pallas.1} parent=59 // pred_check
          %p378 = pneg %p71
        $region66: #{bottleneck_pallas.1} parent=59 // pred_check_branch
          %380 = sbr.rel (%p378) target = $region68
        $region67: #{bottleneck_pallas.1} parent=59 // pred_region
          %381 = dma.done [#allocation7], 128
        $region68: #{bottleneck_pallas.1} parent=59 // pred_fallthru
          _
        // Predicated region
        $region69: #{bottleneck_pallas.1} parent=59 // pred_check
          %p382 = pneg %p134
        $region70: #{bottleneck_pallas.1} parent=59 // pred_check_branch
          %384 = sbr.rel (%p382) target = $region72
        $region71: #{bottleneck_pallas.1} parent=59 // pred_region
          %385 = dma.done [#allocation7], 9216
        $region72: #{bottleneck_pallas.1} parent=59 // pred_fallthru
          _
        // Predicated region
        $region73: #{bottleneck_pallas.1} parent=59 // pred_check
          %p386 = pneg %p197
        $region74: #{bottleneck_pallas.1} parent=59 // pred_check_branch
          %388 = sbr.rel (%p386) target = $region76
        $region75: #{bottleneck_pallas.1} parent=59 // pred_region
          %389 = dma.done [#allocation10], 1024
        $region76: #{bottleneck_pallas.1} parent=59 // pred_fallthru
          _
        %s390 = sand.u32 %s37, 1
        %s391 = scalar_lea.sflag [#allocation4], %s390
        %s392 = sand.u32 %s37, 1
        %s393 = smul.addr %s392, 256
        %s394 = scalar_lea.vmem [#allocation3], %s393
        %p395 = pneg %p50
        %p396 = pneg %p47
        %p397 = pneg %p71
        %p398 = pneg %p68
        %p399 = pneg %p92
        %p400 = pneg %p89
        %p401 = pneg %p113
        %p402 = pneg %p110
        %p403 = pneg %p134
        %p404 = pneg %p131
        %p405 = pneg %p155
        %p406 = pneg %p152
        %p407 = pneg %p176
        %p408 = pneg %p173
        %p409 = pneg %p197
        %p410 = pneg %p194
        %p411 = pneg %p218
        %p412 = pneg %p215
        %p413 = pneg %p239
        %p414 = pneg %p236
        %p415 = pneg %p265
        %p416 = pneg %p262
        %s417 = sand.u32 %s252, 1
        %s418 = scalar_lea.sflag [#allocation5], %s417
        %s419 = sand.u32 %s252, 1
        %s420 = smul.addr %s419, 256
        %s421 = scalar_lea.vmem [#allocation11], %s420
        %v423 = vld [vmem:[%s373] sm:$0xff]
        %v424 = vld [vmem:[%s373 + $0x8] sm:$0xff]
        %v425 = vld [vmem:[%s373 + $0x10] sm:$0xff]
        %v426 = vld [vmem:[%s373 + $0x18] sm:$0xff]
        %v427 = vld [vmem:[%s373 + $0x20] sm:$0xff]
        %v428 = vld [vmem:[%s373 + $0x28] sm:$0xff]
        %v429 = vld [vmem:[%s373 + $0x30] sm:$0xff]
        %v430 = vld [vmem:[%s373 + $0x38] sm:$0xff]
        %v431 = vld [vmem:[%s373 + $0x40] sm:$0xff]
        %v432 = vld [vmem:[%s373 + $0x48] sm:$0xff]
        %v433 = vld [vmem:[%s373 + $0x50] sm:$0xff]
        %v434 = vld [vmem:[%s373 + $0x58] sm:$0xff]
        %v435 = vld [vmem:[%s373 + $0x60] sm:$0xff]
        %v436 = vld [vmem:[%s373 + $0x68] sm:$0xff]
        %v437 = vld [vmem:[%s373 + $0x70] sm:$0xff]
        %v438 = vld [vmem:[%s373 + $0x78] sm:$0xff]
        %v439 = vld [vmem:[%s373 + $0x80] sm:$0xff]
        %v440 = vld [vmem:[%s373 + $0x88] sm:$0xff]
        %v441 = vld [vmem:[%s373 + $0x90] sm:$0xff]
        %v442 = vld [vmem:[%s373 + $0x98] sm:$0xff]
        %v443 = vld [vmem:[%s373 + $0xa0] sm:$0xff]
        %v444 = vld [vmem:[%s373 + $0xa8] sm:$0xff]
        %v445 = vld [vmem:[%s373 + $0xb0] sm:$0xff]
        %v446 = vld [vmem:[%s373 + $0xb8] sm:$0xff]
        %v447 = vld [vmem:[%s373 + $0xc0] sm:$0xff]
        %v448 = vld [vmem:[%s373 + $0xc8] sm:$0xff]
        %v449 = vld [vmem:[%s373 + $0xd0] sm:$0xff]
        %v450 = vld [vmem:[%s373 + $0xd8] sm:$0xff]
        %v451 = vld [vmem:[%s373 + $0xe0] sm:$0xff]
        %v452 = vld [vmem:[%s373 + $0xe8] sm:$0xff]
        %v453 = vld [vmem:[%s373 + $0xf0] sm:$0xff]
        %v454 = vld [vmem:[%s373 + $0xf8] sm:$0xff]
        %v455 = vpack.c.bf16 %v424, %v423
        %v456 = vpack.c.bf16 %v426, %v425
        %v457 = vpack.c.bf16 %v428, %v427
        %v458 = vpack.c.bf16 %v430, %v429
        %v459 = vpack.c.bf16 %v432, %v431
        %v460 = vpack.c.bf16 %v434, %v433
        %v461 = vpack.c.bf16 %v436, %v435
        %v462 = vpack.c.bf16 %v438, %v437
        %v463 = vpack.c.bf16 %v440, %v439
        %v464 = vpack.c.bf16 %v442, %v441
        %v465 = vpack.c.bf16 %v444, %v443
        %v466 = vpack.c.bf16 %v446, %v445
        %v467 = vpack.c.bf16 %v448, %v447
        %v468 = vpack.c.bf16 %v450, %v449
        %v469 = vpack.c.bf16 %v452, %v451
        %v470 = vpack.c.bf16 %v454, %v453
        %v471 = vld [vmem:[#allocation6] sm:$0xf]
        %v472 = vld [vmem:[#allocation6 + $0x4] sm:$0xf]
        %v475 = vunpack.c.l.b16 %v471
        %v476 = vunpack.c.l.b16 %v472
        %v477 = vpack.c.b16 %v476, %v475
        %vm479 = vcmask 130048
        %v481 = vsel %vm479, %v455, 0
        %v484 = vsel %vm479, %v456, 0
        %v487 = vsel %vm479, %v457, 0
        %v490 = vsel %vm479, %v458, 0
        %v493 = vsel %vm479, %v459, 0
        %v496 = vsel %vm479, %v460, 0
        %v499 = vsel %vm479, %v461, 0
        %v502 = vsel %vm479, %v462, 0
        %v505 = vsel %vm479, %v463, 0
        %v508 = vsel %vm479, %v464, 0
        %v511 = vsel %vm479, %v465, 0
        %v514 = vsel %vm479, %v466, 0
        %v517 = vsel %vm479, %v467, 0
        %v520 = vsel %vm479, %v468, 0
        %v523 = vsel %vm479, %v469, 0
        %v526 = vsel %vm479, %v470, 0
        %528 = vmatprep.subr.bf16.mxu0 0
        %529 = vmatpush1.bf16.msra.mxu0 0
        %530 = vmatprep.subr.bf16.mxu0 0
        %531 = vmatpush1.bf16.msra.mxu0 0
        %532 = vmatprep.subr.bf16.mxu0 0
        %533 = vmatpush1.bf16.msra.mxu0 0
        %534 = vmatprep.subr.bf16.mxu0 0
        %535 = vmatpush1.bf16.msra.mxu0 0
        %536 = vmatprep.subr.bf16.mxu0 0
        %537 = vmatpush1.bf16.msra.mxu0 0
        %538 = vmatprep.subr.bf16.mxu0 0
        %539 = vmatpush1.bf16.msra.mxu0 0
        %540 = vmatprep.subr.bf16.mxu0 0
        %541 = vmatpush1.bf16.msra.mxu0 0
        %542 = vmatprep.subr.bf16.mxu0 0
        %543 = vmatpush1.bf16.msra.mxu0 %v477
        %544 = vmatprep.subr.bf16.mxu0 0
        %545 = vmatpush2.bf16.msra.mxu0 0
        %546 = vmatprep.subr.bf16.mxu0 0
        %547 = vmatpush2.bf16.msra.mxu0 0
        %548 = vmatprep.subr.bf16.mxu0 0
        %549 = vmatpush2.bf16.msra.mxu0 0
        %550 = vmatprep.subr.bf16.mxu0 0
        %551 = vmatpush2.bf16.msra.mxu0 0
        %552 = vmatprep.subr.bf16.mxu0 0
        %553 = vmatpush2.bf16.msra.mxu0 0
        %554 = vmatprep.subr.bf16.mxu0 0
        %555 = vmatpush2.bf16.msra.mxu0 0
        %556 = vmatprep.subr.bf16.mxu0 0
        %557 = vmatpush2.bf16.msra.mxu0 0
        %558 = vmatprep.subr.bf16.mxu0 0
        %559 = vmatpush2.bf16.msra.mxu0 0
        %560 = vmatprep.mubr.bf16.mxu0 0
        %561 = vmatmul.mubr.bf16.gmra.mxu0 %v481
        %v562 = vpop.f32.mrf.mxu0
        %v563 = vadd.f32 0.0, %v562
        %v564 = vpop.f32.mrf.mxu0
        %v565 = vpop.f32.mrf.mxu0
        %v566 = vadd.f32 0.0, %v565
        %v567 = vpop.f32.mrf.mxu0
        %568 = vmatprep.mubr.bf16.mxu0 0
        %569 = vmatmul.mubr.bf16.gmra.mxu0 %v484
        %v570 = vpop.f32.mrf.mxu0
        %v571 = vadd.f32 0.0, %v570
        %v572 = vpop.f32.mrf.mxu0
        %v573 = vpop.f32.mrf.mxu0
        %v574 = vadd.f32 0.0, %v573
        %v575 = vpop.f32.mrf.mxu0
        %576 = vmatprep.mubr.bf16.mxu0 0
        %577 = vmatmul.mubr.bf16.gmra.mxu0 %v487
        %v578 = vpop.f32.mrf.mxu0
        %v579 = vadd.f32 0.0, %v578
        %v580 = vpop.f32.mrf.mxu0
        %v581 = vpop.f32.mrf.mxu0
        %v582 = vadd.f32 0.0, %v581
        %v583 = vpop.f32.mrf.mxu0
        %584 = vmatprep.mubr.bf16.mxu0 0
        %585 = vmatmul.mubr.bf16.gmra.mxu0 %v490
        %v586 = vpop.f32.mrf.mxu0
        %v587 = vadd.f32 0.0, %v586
        %v588 = vpop.f32.mrf.mxu0
        %v589 = vpop.f32.mrf.mxu0
        %v590 = vadd.f32 0.0, %v589
        %v591 = vpop.f32.mrf.mxu0
        %592 = vmatprep.mubr.bf16.mxu0 0
        %593 = vmatmul.mubr.bf16.gmra.mxu0 %v493
        %v594 = vpop.f32.mrf.mxu0
        %v595 = vadd.f32 0.0, %v594
        %v596 = vpop.f32.mrf.mxu0
        %v597 = vpop.f32.mrf.mxu0
        %v598 = vadd.f32 0.0, %v597
        %v599 = vpop.f32.mrf.mxu0
        %600 = vmatprep.mubr.bf16.mxu0 0
        %601 = vmatmul.mubr.bf16.gmra.mxu0 %v496
        %v602 = vpop.f32.mrf.mxu0
        %v603 = vadd.f32 0.0, %v602
        %v604 = vpop.f32.mrf.mxu0
        %v605 = vpop.f32.mrf.mxu0
        %v606 = vadd.f32 0.0, %v605
        %v607 = vpop.f32.mrf.mxu0
        %608 = vmatprep.mubr.bf16.mxu0 0
        %609 = vmatmul.mubr.bf16.gmra.mxu0 %v499
        %v610 = vpop.f32.mrf.mxu0
        %v611 = vadd.f32 0.0, %v610
        %v612 = vpop.f32.mrf.mxu0
        %v613 = vpop.f32.mrf.mxu0
        %v614 = vadd.f32 0.0, %v613
        %v615 = vpop.f32.mrf.mxu0
        %616 = vmatprep.mubr.bf16.mxu0 0
        %617 = vmatmul.mubr.bf16.gmra.mxu0 %v502
        %v618 = vpop.f32.mrf.mxu0
        %v619 = vadd.f32 0.0, %v618
        %v620 = vpop.f32.mrf.mxu0
        %v621 = vpop.f32.mrf.mxu0
        %v622 = vadd.f32 0.0, %v621
        %v623 = vpop.f32.mrf.mxu0
        %624 = vmatprep.mubr.bf16.mxu0 0
        %625 = vmatmul.mubr.bf16.gmra.mxu0 %v505
        %v626 = vpop.f32.mrf.mxu0
        %v627 = vadd.f32 0.0, %v626
        %v628 = vpop.f32.mrf.mxu0
        %v629 = vpop.f32.mrf.mxu0
        %v630 = vadd.f32 0.0, %v629
        %v631 = vpop.f32.mrf.mxu0
        %632 = vmatprep.mubr.bf16.mxu0 0
        %633 = vmatmul.mubr.bf16.gmra.mxu0 %v508
        %v634 = vpop.f32.mrf.mxu0
        %v635 = vadd.f32 0.0, %v634
        %v636 = vpop.f32.mrf.mxu0
        %v637 = vpop.f32.mrf.mxu0
        %v638 = vadd.f32 0.0, %v637
        %v639 = vpop.f32.mrf.mxu0
        %640 = vmatprep.mubr.bf16.mxu0 0
        %641 = vmatmul.mubr.bf16.gmra.mxu0 %v511
        %v642 = vpop.f32.mrf.mxu0
        %v643 = vadd.f32 0.0, %v642
        %v644 = vpop.f32.mrf.mxu0
        %v645 = vpop.f32.mrf.mxu0
        %v646 = vadd.f32 0.0, %v645
        %v647 = vpop.f32.mrf.mxu0
        %648 = vmatprep.mubr.bf16.mxu0 0
        %649 = vmatmul.mubr.bf16.gmra.mxu0 %v514
        %v650 = vpop.f32.mrf.mxu0
        %v651 = vadd.f32 0.0, %v650
        %v652 = vpop.f32.mrf.mxu0
        %v653 = vpop.f32.mrf.mxu0
        %v654 = vadd.f32 0.0, %v653
        %v655 = vpop.f32.mrf.mxu0
        %656 = vmatprep.mubr.bf16.mxu0 0
        %657 = vmatmul.mubr.bf16.gmra.mxu0 %v517
        %v658 = vpop.f32.mrf.mxu0
        %v659 = vadd.f32 0.0, %v658
        %v660 = vpop.f32.mrf.mxu0
        %v661 = vpop.f32.mrf.mxu0
        %v662 = vadd.f32 0.0, %v661
        %v663 = vpop.f32.mrf.mxu0
        %664 = vmatprep.mubr.bf16.mxu0 0
        %665 = vmatmul.mubr.bf16.gmra.mxu0 %v520
        %v666 = vpop.f32.mrf.mxu0
        %v667 = vadd.f32 0.0, %v666
        %v668 = vpop.f32.mrf.mxu0
        %v669 = vpop.f32.mrf.mxu0
        %v670 = vadd.f32 0.0, %v669
        %v671 = vpop.f32.mrf.mxu0
        %672 = vmatprep.mubr.bf16.mxu0 0
        %673 = vmatmul.mubr.bf16.gmra.mxu0 %v523
        %v674 = vpop.f32.mrf.mxu0
        %v675 = vadd.f32 0.0, %v674
        %v676 = vpop.f32.mrf.mxu0
        %v677 = vpop.f32.mrf.mxu0
        %v678 = vadd.f32 0.0, %v677
        %v679 = vpop.f32.mrf.mxu0
        %680 = vmatprep.mubr.bf16.mxu0 0
        %681 = vmatmul.mubr.bf16.gmra.mxu0 %v526
        %v682 = vpop.f32.mrf.mxu0
        %v683 = vadd.f32 0.0, %v682
        %v684 = vpop.f32.mrf.mxu0
        %v685 = vpop.f32.mrf.mxu0
        %v686 = vadd.f32 0.0, %v685
        %v687 = vpop.f32.mrf.mxu0
        %688 = vdwg.mxu0
        %v689 = vld [vmem:[%s2] sm:$0x1]
        %v691 = vlaneseq
        %v692 = vshrl.u32 %v691, 7
        %v693 = vsub.s32 0, %v692
        %v694 = vrot.slane %v689, %v693
        %v696 = vmul.f32 %v563, %v694
        %v697 = vmul.f32 %v566, %v694
        %v698 = vmul.f32 %v571, %v694
        %v699 = vmul.f32 %v574, %v694
        %v700 = vmul.f32 %v579, %v694
        %v701 = vmul.f32 %v582, %v694
        %v702 = vmul.f32 %v587, %v694
        %v703 = vmul.f32 %v590, %v694
        %v704 = vmul.f32 %v595, %v694
        %v705 = vmul.f32 %v598, %v694
        %v706 = vmul.f32 %v603, %v694
        %v707 = vmul.f32 %v606, %v694
        %v708 = vmul.f32 %v611, %v694
        %v709 = vmul.f32 %v614, %v694
        %v710 = vmul.f32 %v619, %v694
        %v711 = vmul.f32 %v622, %v694
        %v712 = vmul.f32 %v627, %v694
        %v713 = vmul.f32 %v630, %v694
        %v714 = vmul.f32 %v635, %v694
        %v715 = vmul.f32 %v638, %v694
        %v716 = vmul.f32 %v643, %v694
        %v717 = vmul.f32 %v646, %v694
        %v718 = vmul.f32 %v651, %v694
        %v719 = vmul.f32 %v654, %v694
        %v720 = vmul.f32 %v659, %v694
        %v721 = vmul.f32 %v662, %v694
        %v722 = vmul.f32 %v667, %v694
        %v723 = vmul.f32 %v670, %v694
        %v724 = vmul.f32 %v675, %v694
        %v725 = vmul.f32 %v678, %v694
        %v726 = vmul.f32 %v683, %v694
        %v727 = vmul.f32 %v686, %v694
        %v728 = vld [vmem:[%s3] sm:$0x1]
        %v730 = vlaneseq
        %v731 = vshrl.u32 %v730, 7
        %v732 = vsub.s32 0, %v731
        %v733 = vrot.slane %v728, %v732
        %v735 = vadd.f32 %v696, %v733
        %v736 = vadd.f32 %v697, %v733
        %v737 = vadd.f32 %v698, %v733
        %v738 = vadd.f32 %v699, %v733
        %v739 = vadd.f32 %v700, %v733
        %v740 = vadd.f32 %v701, %v733
        %v741 = vadd.f32 %v702, %v733
        %v742 = vadd.f32 %v703, %v733
        %v743 = vadd.f32 %v704, %v733
        %v744 = vadd.f32 %v705, %v733
        %v745 = vadd.f32 %v706, %v733
        %v746 = vadd.f32 %v707, %v733
        %v747 = vadd.f32 %v708, %v733
        %v748 = vadd.f32 %v709, %v733
        %v749 = vadd.f32 %v710, %v733
        %v750 = vadd.f32 %v711, %v733
        %v751 = vadd.f32 %v712, %v733
        %v752 = vadd.f32 %v713, %v733
        %v753 = vadd.f32 %v714, %v733
        %v754 = vadd.f32 %v715, %v733
        %v755 = vadd.f32 %v716, %v733
        %v756 = vadd.f32 %v717, %v733
        %v757 = vadd.f32 %v718, %v733
        %v758 = vadd.f32 %v719, %v733
        %v759 = vadd.f32 %v720, %v733
        %v760 = vadd.f32 %v721, %v733
        %v761 = vadd.f32 %v722, %v733
        %v762 = vadd.f32 %v723, %v733
        %v763 = vadd.f32 %v724, %v733
        %v764 = vadd.f32 %v725, %v733
        %v765 = vadd.f32 %v726, %v733
        %v766 = vadd.f32 %v727, %v733
        %v767 = vmax.f32 %v735, 0.0
        %v768 = vmax.f32 %v736, 0.0
        %v769 = vmax.f32 %v737, 0.0
        %v770 = vmax.f32 %v738, 0.0
        %v771 = vmax.f32 %v739, 0.0
        %v772 = vmax.f32 %v740, 0.0
        %v773 = vmax.f32 %v741, 0.0
        %v774 = vmax.f32 %v742, 0.0
        %v775 = vmax.f32 %v743, 0.0
        %v776 = vmax.f32 %v744, 0.0
        %v777 = vmax.f32 %v745, 0.0
        %v778 = vmax.f32 %v746, 0.0
        %v779 = vmax.f32 %v747, 0.0
        %v780 = vmax.f32 %v748, 0.0
        %v781 = vmax.f32 %v749, 0.0
        %v782 = vmax.f32 %v750, 0.0
        %v783 = vmax.f32 %v751, 0.0
        %v784 = vmax.f32 %v752, 0.0
        %v785 = vmax.f32 %v753, 0.0
        %v786 = vmax.f32 %v754, 0.0
        %v787 = vmax.f32 %v755, 0.0
        %v788 = vmax.f32 %v756, 0.0
        %v789 = vmax.f32 %v757, 0.0
        %v790 = vmax.f32 %v758, 0.0
        %v791 = vmax.f32 %v759, 0.0
        %v792 = vmax.f32 %v760, 0.0
        %v793 = vmax.f32 %v761, 0.0
        %v794 = vmax.f32 %v762, 0.0
        %v795 = vmax.f32 %v763, 0.0
        %v796 = vmax.f32 %v764, 0.0
        %v797 = vmax.f32 %v765, 0.0
        %v798 = vmax.f32 %v766, 0.0
        %799 = vst [vmem:[#allocation2] sm:$0xff] 0.0
        %800 = vst [vmem:[#allocation2 + $0x8] sm:$0xff] 0.0
        %801 = vst [vmem:[#allocation2 + $0x110] sm:$0xff] 0.0
        %802 = vst [vmem:[#allocation2 + $0x118] sm:$0xff] 0.0
        %803 = vst [vmem:[#allocation2 + $0x10] sm:$0xff] %v767
        %804 = vst [vmem:[#allocation2 + $0x18] sm:$0xff] %v768
        %805 = vst [vmem:[#allocation2 + $0x20] sm:$0xff] %v769
        %806 = vst [vmem:[#allocation2 + $0x28] sm:$0xff] %v770
        %807 = vst [vmem:[#allocation2 + $0x30] sm:$0xff] %v771
        %808 = vst [vmem:[#allocation2 + $0x38] sm:$0xff] %v772
        %809 = vst [vmem:[#allocation2 + $0x40] sm:$0xff] %v773
        %810 = vst [vmem:[#allocation2 + $0x48] sm:$0xff] %v774
        %811 = vst [vmem:[#allocation2 + $0x50] sm:$0xff] %v775
        %812 = vst [vmem:[#allocation2 + $0x58] sm:$0xff] %v776
        %813 = vst [vmem:[#allocation2 + $0x60] sm:$0xff] %v777
        %814 = vst [vmem:[#allocation2 + $0x68] sm:$0xff] %v778
        %815 = vst [vmem:[#allocation2 + $0x70] sm:$0xff] %v779
        %816 = vst [vmem:[#allocation2 + $0x78] sm:$0xff] %v780
        %817 = vst [vmem:[#allocation2 + $0x80] sm:$0xff] %v781
        %818 = vst [vmem:[#allocation2 + $0x88] sm:$0xff] %v782
        %819 = vst [vmem:[#allocation2 + $0x90] sm:$0xff] %v783
        %820 = vst [vmem:[#allocation2 + $0x98] sm:$0xff] %v784
        %821 = vst [vmem:[#allocation2 + $0xa0] sm:$0xff] %v785
        %822 = vst [vmem:[#allocation2 + $0xa8] sm:$0xff] %v786
        %823 = vst [vmem:[#allocation2 + $0xb0] sm:$0xff] %v787
        %824 = vst [vmem:[#allocation2 + $0xb8] sm:$0xff] %v788
        %825 = vst [vmem:[#allocation2 + $0xc0] sm:$0xff] %v789
        %826 = vst [vmem:[#allocation2 + $0xc8] sm:$0xff] %v790
        %827 = vst [vmem:[#allocation2 + $0xd0] sm:$0xff] %v791
        %828 = vst [vmem:[#allocation2 + $0xd8] sm:$0xff] %v792
        %829 = vst [vmem:[#allocation2 + $0xe0] sm:$0xff] %v793
        %830 = vst [vmem:[#allocation2 + $0xe8] sm:$0xff] %v794
        %831 = vst [vmem:[#allocation2 + $0xf0] sm:$0xff] %v795
        %832 = vst [vmem:[#allocation2 + $0xf8] sm:$0xff] %v796
        %833 = vst [vmem:[#allocation2 + $0x100] sm:$0xff] %v797
        %834 = vst [vmem:[#allocation2 + $0x108] sm:$0xff] %v798
        %v835 = vld [vmem:[#allocation2] sm:$0xff]
        %v836 = vld [vmem:[#allocation2 + $0x8] sm:$0xff]
        %v837 = vld [vmem:[#allocation2 + $0x10] sm:$0xff]
        %v838 = vld [vmem:[#allocation2 + $0x18] sm:$0xff]
        %v839 = vld [vmem:[#allocation2 + $0x20] sm:$0xff]
        %v840 = vld [vmem:[#allocation2 + $0x28] sm:$0xff]
        %v841 = vld [vmem:[#allocation2 + $0x30] sm:$0xff]
        %v842 = vld [vmem:[#allocation2 + $0x38] sm:$0xff]
        %v843 = vld [vmem:[#allocation2 + $0x40] sm:$0xff]
        %v844 = vld [vmem:[#allocation2 + $0x48] sm:$0xff]
        %v845 = vld [vmem:[#allocation2 + $0x50] sm:$0xff]
        %v846 = vld [vmem:[#allocation2 + $0x58] sm:$0xff]
        %v847 = vld [vmem:[#allocation2 + $0x60] sm:$0xff]
        %v848 = vld [vmem:[#allocation2 + $0x68] sm:$0xff]
        %v849 = vld [vmem:[#allocation2 + $0x70] sm:$0xff]
        %v850 = vld [vmem:[#allocation2 + $0x78] sm:$0xff]
        %v851 = vld [vmem:[#allocation2 + $0x80] sm:$0xff]
        %v852 = vld [vmem:[#allocation2 + $0x88] sm:$0xff]
        %v853 = vld [vmem:[#allocation2 + $0x90] sm:$0xff]
        %v854 = vld [vmem:[#allocation2 + $0x98] sm:$0xff]
        %v855 = vld [vmem:[#allocation2 + $0xa0] sm:$0xff]
        %v856 = vld [vmem:[#allocation2 + $0xa8] sm:$0xff]
        %v857 = vld [vmem:[#allocation2 + $0xb0] sm:$0xff]
        %v858 = vld [vmem:[#allocation2 + $0xb8] sm:$0xff]
        %v859 = vld [vmem:[#allocation2 + $0xc0] sm:$0xff]
        %v860 = vld [vmem:[#allocation2 + $0xc8] sm:$0xff]
        %v861 = vld [vmem:[#allocation2 + $0xd0] sm:$0xff]
        %v862 = vld [vmem:[#allocation2 + $0xd8] sm:$0xff]
        %v863 = vld [vmem:[#allocation2 + $0xe0] sm:$0xff]
        %v864 = vld [vmem:[#allocation2 + $0xe8] sm:$0xff]
        %v865 = vld [vmem:[#allocation2 + $0xf0] sm:$0xff]
        %v866 = vld [vmem:[#allocation2 + $0xf8] sm:$0xff]
        %v867 = vld [vmem:[#allocation2 + $0x100] sm:$0xff]
        %v868 = vld [vmem:[#allocation2 + $0x108] sm:$0xff]
        %v869 = vld [vmem:[#allocation2 + $0x110] sm:$0xff]
        %v870 = vld [vmem:[#allocation2 + $0x118] sm:$0xff]
        %v871 = vlaneseq
        %v872 = vshrl.u32 %v871, 7
        %v873 = vadd.s32 %v872, 8
        %v874 = vadd.s32 %v872, 16
        %v875 = vadd.s32 %v872, 24
        %v876 = vadd.s32 %v872, 32
        %v877 = vadd.s32 %v872, 40
        %v878 = vadd.s32 %v872, 48
        %v879 = vadd.s32 %v872, 56
        %v880 = vadd.s32 %v872, 64
        %v881 = vadd.s32 %v872, 72
        %v882 = vadd.s32 %v872, 80
        %v883 = vadd.s32 %v872, 88
        %v884 = vadd.s32 %v872, 96
        %v885 = vadd.s32 %v872, 104
        %v886 = vadd.s32 %v872, 112
        %v887 = vadd.s32 %v872, 120
        %v888 = vadd.s32 %v872, 128
        %v889 = vadd.s32 %v872, 136
        %v890 = vadd.s32 %v872, 144
        %v891 = vadd.s32 %v872, 152
        %v892 = vadd.s32 %v872, 160
        %v893 = vadd.s32 %v872, 168
        %v894 = vadd.s32 %v872, 176
        %v895 = vadd.s32 %v872, 184
        %v896 = vadd.s32 %v872, 192
        %v897 = vadd.s32 %v872, 200
        %v898 = vadd.s32 %v872, 208
        %v899 = vadd.s32 %v872, 216
        %v900 = vadd.s32 %v872, 224
        %v901 = vadd.s32 %v872, 232
        %v902 = vadd.s32 %v872, 240
        %v903 = vadd.s32 %v872, 248
        %v904 = vadd.s32 %v872, 256
        %v905 = vadd.s32 %v872, 264
        %v906 = vadd.s32 %v872, 272
        %v907 = vadd.s32 %v872, 280
        %vm908 = vcmp.lt.s32.totalorder %v872, 0
        %v909 = vsub.s32 0, %v872
        %v910 = vsel %vm908, %v909, %v872
        %v911 = vshrl.u32 %v910, 4
        %v912 = vand.u32 %v910, 15
        %v913 = vsub.s32 0, %v912
        %v914 = vsel %vm908, %v913, %v912
        %vm915 = vcmp.lt.s32.totalorder %v873, 0
        %v916 = vsub.s32 0, %v873
        %v917 = vsel %vm915, %v916, %v873
        %v918 = vshrl.u32 %v917, 4
        %v919 = vand.u32 %v917, 15
        %v920 = vsub.s32 0, %v919
        %v921 = vsel %vm915, %v920, %v919
        %vm922 = vcmp.lt.s32.totalorder %v874, 0
        %v923 = vsub.s32 0, %v874
        %v924 = vsel %vm922, %v923, %v874
        %v925 = vshrl.u32 %v924, 4
        %v926 = vand.u32 %v924, 15
        %v927 = vsub.s32 0, %v926
        %v928 = vsel %vm922, %v927, %v926
        %vm929 = vcmp.lt.s32.totalorder %v875, 0
        %v930 = vsub.s32 0, %v875
        %v931 = vsel %vm929, %v930, %v875
        %v932 = vshrl.u32 %v931, 4
        %v933 = vand.u32 %v931, 15
        %v934 = vsub.s32 0, %v933
        %v935 = vsel %vm929, %v934, %v933
        %vm936 = vcmp.lt.s32.totalorder %v876, 0
        %v937 = vsub.s32 0, %v876
        %v938 = vsel %vm936, %v937, %v876
        %v939 = vshrl.u32 %v938, 4
        %v940 = vand.u32 %v938, 15
        %v941 = vsub.s32 0, %v940
        %v942 = vsel %vm936, %v941, %v940
        %vm943 = vcmp.lt.s32.totalorder %v877, 0
        %v944 = vsub.s32 0, %v877
        %v945 = vsel %vm943, %v944, %v877
        %v946 = vshrl.u32 %v945, 4
        %v947 = vand.u32 %v945, 15
        %v948 = vsub.s32 0, %v947
        %v949 = vsel %vm943, %v948, %v947
        %vm950 = vcmp.lt.s32.totalorder %v878, 0
        %v951 = vsub.s32 0, %v878
        %v952 = vsel %vm950, %v951, %v878
        %v953 = vshrl.u32 %v952, 4
        %v954 = vand.u32 %v952, 15
        %v955 = vsub.s32 0, %v954
        %v956 = vsel %vm950, %v955, %v954
        %vm957 = vcmp.lt.s32.totalorder %v879, 0
        %v958 = vsub.s32 0, %v879
        %v959 = vsel %vm957, %v958, %v879
        %v960 = vshrl.u32 %v959, 4
        %v961 = vand.u32 %v959, 15
        %v962 = vsub.s32 0, %v961
        %v963 = vsel %vm957, %v962, %v961
        %vm964 = vcmp.lt.s32.totalorder %v880, 0
        %v965 = vsub.s32 0, %v880
        %v966 = vsel %vm964, %v965, %v880
        %v967 = vshrl.u32 %v966, 4
        %v968 = vand.u32 %v966, 15
        %v969 = vsub.s32 0, %v968
        %v970 = vsel %vm964, %v969, %v968
        %vm971 = vcmp.lt.s32.totalorder %v881, 0
        %v972 = vsub.s32 0, %v881
        %v973 = vsel %vm971, %v972, %v881
        %v974 = vshrl.u32 %v973, 4
        %v975 = vand.u32 %v973, 15
        %v976 = vsub.s32 0, %v975
        %v977 = vsel %vm971, %v976, %v975
        %vm978 = vcmp.lt.s32.totalorder %v882, 0
        %v979 = vsub.s32 0, %v882
        %v980 = vsel %vm978, %v979, %v882
        %v981 = vshrl.u32 %v980, 4
        %v982 = vand.u32 %v980, 15
        %v983 = vsub.s32 0, %v982
        %v984 = vsel %vm978, %v983, %v982
        %vm985 = vcmp.lt.s32.totalorder %v883, 0
        %v986 = vsub.s32 0, %v883
        %v987 = vsel %vm985, %v986, %v883
        %v988 = vshrl.u32 %v987, 4
        %v989 = vand.u32 %v987, 15
        %v990 = vsub.s32 0, %v989
        %v991 = vsel %vm985, %v990, %v989
        %vm992 = vcmp.lt.s32.totalorder %v884, 0
        %v993 = vsub.s32 0, %v884
        %v994 = vsel %vm992, %v993, %v884
        %v995 = vshrl.u32 %v994, 4
        %v996 = vand.u32 %v994, 15
        %v997 = vsub.s32 0, %v996
        %v998 = vsel %vm992, %v997, %v996
        %vm999 = vcmp.lt.s32.totalorder %v885, 0
        %v1000 = vsub.s32 0, %v885
        %v1001 = vsel %vm999, %v1000, %v885
        %v1002 = vshrl.u32 %v1001, 4
        %v1003 = vand.u32 %v1001, 15
        %v1004 = vsub.s32 0, %v1003
        %v1005 = vsel %vm999, %v1004, %v1003
        %vm1006 = vcmp.lt.s32.totalorder %v886, 0
        %v1007 = vsub.s32 0, %v886
        %v1008 = vsel %vm1006, %v1007, %v886
        %v1009 = vshrl.u32 %v1008, 4
        %v1010 = vand.u32 %v1008, 15
        %v1011 = vsub.s32 0, %v1010
        %v1012 = vsel %vm1006, %v1011, %v1010
        %vm1013 = vcmp.lt.s32.totalorder %v887, 0
        %v1014 = vsub.s32 0, %v887
        %v1015 = vsel %vm1013, %v1014, %v887
        %v1016 = vshrl.u32 %v1015, 4
        %v1017 = vand.u32 %v1015, 15
        %v1018 = vsub.s32 0, %v1017
        %v1019 = vsel %vm1013, %v1018, %v1017
        %vm1020 = vcmp.lt.s32.totalorder %v888, 0
        %v1021 = vsub.s32 0, %v888
        %v1022 = vsel %vm1020, %v1021, %v888
        %v1023 = vshrl.u32 %v1022, 4
        %v1024 = vand.u32 %v1022, 15
        %v1025 = vsub.s32 0, %v1024
        %v1026 = vsel %vm1020, %v1025, %v1024
        %vm1027 = vcmp.lt.s32.totalorder %v889, 0
        %v1028 = vsub.s32 0, %v889
        %v1029 = vsel %vm1027, %v1028, %v889
        %v1030 = vshrl.u32 %v1029, 4
        %v1031 = vand.u32 %v1029, 15
        %v1032 = vsub.s32 0, %v1031
        %v1033 = vsel %vm1027, %v1032, %v1031
        %vm1034 = vcmp.lt.s32.totalorder %v890, 0
        %v1035 = vsub.s32 0, %v890
        %v1036 = vsel %vm1034, %v1035, %v890
        %v1037 = vshrl.u32 %v1036, 4
        %v1038 = vand.u32 %v1036, 15
        %v1039 = vsub.s32 0, %v1038
        %v1040 = vsel %vm1034, %v1039, %v1038
        %vm1041 = vcmp.lt.s32.totalorder %v891, 0
        %v1042 = vsub.s32 0, %v891
        %v1043 = vsel %vm1041, %v1042, %v891
        %v1044 = vshrl.u32 %v1043, 4
        %v1045 = vand.u32 %v1043, 15
        %v1046 = vsub.s32 0, %v1045
        %v1047 = vsel %vm1041, %v1046, %v1045
        %vm1048 = vcmp.lt.s32.totalorder %v892, 0
        %v1049 = vsub.s32 0, %v892
        %v1050 = vsel %vm1048, %v1049, %v892
        %v1051 = vshrl.u32 %v1050, 4
        %v1052 = vand.u32 %v1050, 15
        %v1053 = vsub.s32 0, %v1052
        %v1054 = vsel %vm1048, %v1053, %v1052
        %vm1055 = vcmp.lt.s32.totalorder %v893, 0
        %v1056 = vsub.s32 0, %v893
        %v1057 = vsel %vm1055, %v1056, %v893
        %v1058 = vshrl.u32 %v1057, 4
        %v1059 = vand.u32 %v1057, 15
        %v1060 = vsub.s32 0, %v1059
        %v1061 = vsel %vm1055, %v1060, %v1059
        %vm1062 = vcmp.lt.s32.totalorder %v894, 0
        %v1063 = vsub.s32 0, %v894
        %v1064 = vsel %vm1062, %v1063, %v894
        %v1065 = vshrl.u32 %v1064, 4
        %v1066 = vand.u32 %v1064, 15
        %v1067 = vsub.s32 0, %v1066
        %v1068 = vsel %vm1062, %v1067, %v1066
        %vm1069 = vcmp.lt.s32.totalorder %v895, 0
        %v1070 = vsub.s32 0, %v895
        %v1071 = vsel %vm1069, %v1070, %v895
        %v1072 = vshrl.u32 %v1071, 4
        %v1073 = vand.u32 %v1071, 15
        %v1074 = vsub.s32 0, %v1073
        %v1075 = vsel %vm1069, %v1074, %v1073
        %vm1076 = vcmp.lt.s32.totalorder %v896, 0
        %v1077 = vsub.s32 0, %v896
        %v1078 = vsel %vm1076, %v1077, %v896
        %v1079 = vshrl.u32 %v1078, 4
        %v1080 = vand.u32 %v1078, 15
        %v1081 = vsub.s32 0, %v1080
        %v1082 = vsel %vm1076, %v1081, %v1080
        %vm1083 = vcmp.lt.s32.totalorder %v897, 0
        %v1084 = vsub.s32 0, %v897
        %v1085 = vsel %vm1083, %v1084, %v897
        %v1086 = vshrl.u32 %v1085, 4
        %v1087 = vand.u32 %v1085, 15
        %v1088 = vsub.s32 0, %v1087
        %v1089 = vsel %vm1083, %v1088, %v1087
        %vm1090 = vcmp.lt.s32.totalorder %v898, 0
        %v1091 = vsub.s32 0, %v898
        %v1092 = vsel %vm1090, %v1091, %v898
        %v1093 = vshrl.u32 %v1092, 4
        %v1094 = vand.u32 %v1092, 15
        %v1095 = vsub.s32 0, %v1094
        %v1096 = vsel %vm1090, %v1095, %v1094
        %vm1097 = vcmp.lt.s32.totalorder %v899, 0
        %v1098 = vsub.s32 0, %v899
        %v1099 = vsel %vm1097, %v1098, %v899
        %v1100 = vshrl.u32 %v1099, 4
        %v1101 = vand.u32 %v1099, 15
        %v1102 = vsub.s32 0, %v1101
        %v1103 = vsel %vm1097, %v1102, %v1101
        %vm1104 = vcmp.lt.s32.totalorder %v900, 0
        %v1105 = vsub.s32 0, %v900
        %v1106 = vsel %vm1104, %v1105, %v900
        %v1107 = vshrl.u32 %v1106, 4
        %v1108 = vand.u32 %v1106, 15
        %v1109 = vsub.s32 0, %v1108
        %v1110 = vsel %vm1104, %v1109, %v1108
        %vm1111 = vcmp.lt.s32.totalorder %v901, 0
        %v1112 = vsub.s32 0, %v901
        %v1113 = vsel %vm1111, %v1112, %v901
        %v1114 = vshrl.u32 %v1113, 4
        %v1115 = vand.u32 %v1113, 15
        %v1116 = vsub.s32 0, %v1115
        %v1117 = vsel %vm1111, %v1116, %v1115
        %vm1118 = vcmp.lt.s32.totalorder %v902, 0
        %v1119 = vsub.s32 0, %v902
        %v1120 = vsel %vm1118, %v1119, %v902
        %v1121 = vshrl.u32 %v1120, 4
        %v1122 = vand.u32 %v1120, 15
        %v1123 = vsub.s32 0, %v1122
        %v1124 = vsel %vm1118, %v1123, %v1122
        %vm1125 = vcmp.lt.s32.totalorder %v903, 0
        %v1126 = vsub.s32 0, %v903
        %v1127 = vsel %vm1125, %v1126, %v903
        %v1128 = vshrl.u32 %v1127, 4
        %v1129 = vand.u32 %v1127, 15
        %v1130 = vsub.s32 0, %v1129
        %v1131 = vsel %vm1125, %v1130, %v1129
        %vm1132 = vcmp.lt.s32.totalorder %v904, 0
        %v1133 = vsub.s32 0, %v904
        %v1134 = vsel %vm1132, %v1133, %v904
        %v1135 = vshrl.u32 %v1134, 4
        %v1136 = vand.u32 %v1134, 15
        %v1137 = vsub.s32 0, %v1136
        %v1138 = vsel %vm1132, %v1137, %v1136
        %vm1139 = vcmp.lt.s32.totalorder %v905, 0
        %v1140 = vsub.s32 0, %v905
        %v1141 = vsel %vm1139, %v1140, %v905
        %v1142 = vshrl.u32 %v1141, 4
        %v1143 = vand.u32 %v1141, 15
        %v1144 = vsub.s32 0, %v1143
        %v1145 = vsel %vm1139, %v1144, %v1143
        %vm1146 = vcmp.lt.s32.totalorder %v906, 0
        %v1147 = vsub.s32 0, %v906
        %v1148 = vsel %vm1146, %v1147, %v906
        %v1149 = vshrl.u32 %v1148, 4
        %v1150 = vand.u32 %v1148, 15
        %v1151 = vsub.s32 0, %v1150
        %v1152 = vsel %vm1146, %v1151, %v1150
        %vm1153 = vcmp.lt.s32.totalorder %v907, 0
        %v1154 = vsub.s32 0, %v907
        %v1155 = vsel %vm1153, %v1154, %v907
        %v1156 = vshrl.u32 %v1155, 4
        %v1157 = vand.u32 %v1155, 15
        %v1158 = vsub.s32 0, %v1157
        %v1159 = vsel %vm1153, %v1158, %v1157
        %vm1160 = vcmp.ne.s32.totalorder %v914, 0
        %vm1161 = vcmp.ne.s32.totalorder %v921, 0
        %vm1162 = vcmp.ne.s32.totalorder %v928, 0
        %vm1163 = vcmp.ne.s32.totalorder %v935, 0
        %vm1164 = vcmp.ne.s32.totalorder %v942, 0
        %vm1165 = vcmp.ne.s32.totalorder %v949, 0
        %vm1166 = vcmp.ne.s32.totalorder %v956, 0
        %vm1167 = vcmp.ne.s32.totalorder %v963, 0
        %vm1168 = vcmp.ne.s32.totalorder %v970, 0
        %vm1169 = vcmp.ne.s32.totalorder %v977, 0
        %vm1170 = vcmp.ne.s32.totalorder %v984, 0
        %vm1171 = vcmp.ne.s32.totalorder %v991, 0
        %vm1172 = vcmp.ne.s32.totalorder %v998, 0
        %vm1173 = vcmp.ne.s32.totalorder %v1005, 0
        %vm1174 = vcmp.ne.s32.totalorder %v1012, 0
        %vm1175 = vcmp.ne.s32.totalorder %v1019, 0
        %vm1176 = vcmp.ne.s32.totalorder %v1026, 0
        %vm1177 = vcmp.ne.s32.totalorder %v1033, 0
        %vm1178 = vcmp.ne.s32.totalorder %v1040, 0
        %vm1179 = vcmp.ne.s32.totalorder %v1047, 0
        %vm1180 = vcmp.ne.s32.totalorder %v1054, 0
        %vm1181 = vcmp.ne.s32.totalorder %v1061, 0
        %vm1182 = vcmp.ne.s32.totalorder %v1068, 0
        %vm1183 = vcmp.ne.s32.totalorder %v1075, 0
        %vm1184 = vcmp.ne.s32.totalorder %v1082, 0
        %vm1185 = vcmp.ne.s32.totalorder %v1089, 0
        %vm1186 = vcmp.ne.s32.totalorder %v1096, 0
        %vm1187 = vcmp.ne.s32.totalorder %v1103, 0
        %vm1188 = vcmp.ne.s32.totalorder %v1110, 0
        %vm1189 = vcmp.ne.s32.totalorder %v1117, 0
        %vm1190 = vcmp.ne.s32.totalorder %v1124, 0
        %vm1191 = vcmp.ne.s32.totalorder %v1131, 0
        %vm1192 = vcmp.ne.s32.totalorder %v1138, 0
        %vm1193 = vcmp.ne.s32.totalorder %v1145, 0
        %vm1194 = vcmp.ne.s32.totalorder %v1152, 0
        %vm1195 = vcmp.ne.s32.totalorder %v1159, 0
        %vm1196 = vcmp.lt.s32.totalorder %v914, 0
        %vm1197 = vcmp.lt.s32.totalorder %v921, 0
        %vm1198 = vcmp.lt.s32.totalorder %v928, 0
        %vm1199 = vcmp.lt.s32.totalorder %v935, 0
        %vm1200 = vcmp.lt.s32.totalorder %v942, 0
        %vm1201 = vcmp.lt.s32.totalorder %v949, 0
        %vm1202 = vcmp.lt.s32.totalorder %v956, 0
        %vm1203 = vcmp.lt.s32.totalorder %v963, 0
        %vm1204 = vcmp.lt.s32.totalorder %v970, 0
        %vm1205 = vcmp.lt.s32.totalorder %v977, 0
        %vm1206 = vcmp.lt.s32.totalorder %v984, 0
        %vm1207 = vcmp.lt.s32.totalorder %v991, 0
        %vm1208 = vcmp.lt.s32.totalorder %v998, 0
        %vm1209 = vcmp.lt.s32.totalorder %v1005, 0
        %vm1210 = vcmp.lt.s32.totalorder %v1012, 0
        %vm1211 = vcmp.lt.s32.totalorder %v1019, 0
        %vm1212 = vcmp.lt.s32.totalorder %v1026, 0
        %vm1213 = vcmp.lt.s32.totalorder %v1033, 0
        %vm1214 = vcmp.lt.s32.totalorder %v1040, 0
        %vm1215 = vcmp.lt.s32.totalorder %v1047, 0
        %vm1216 = vcmp.lt.s32.totalorder %v1054, 0
        %vm1217 = vcmp.lt.s32.totalorder %v1061, 0
        %vm1218 = vcmp.lt.s32.totalorder %v1068, 0
        %vm1219 = vcmp.lt.s32.totalorder %v1075, 0
        %vm1220 = vcmp.lt.s32.totalorder %v1082, 0
        %vm1221 = vcmp.lt.s32.totalorder %v1089, 0
        %vm1222 = vcmp.lt.s32.totalorder %v1096, 0
        %vm1223 = vcmp.lt.s32.totalorder %v1103, 0
        %vm1224 = vcmp.lt.s32.totalorder %v1110, 0
        %vm1225 = vcmp.lt.s32.totalorder %v1117, 0
        %vm1226 = vcmp.lt.s32.totalorder %v1124, 0
        %vm1227 = vcmp.lt.s32.totalorder %v1131, 0
        %vm1228 = vcmp.lt.s32.totalorder %v1138, 0
        %vm1229 = vcmp.lt.s32.totalorder %v1145, 0
        %vm1230 = vcmp.lt.s32.totalorder %v1152, 0
        %vm1231 = vcmp.lt.s32.totalorder %v1159, 0
        %vm1232 = vmand %vm1196, %vm1160
        %vm1233 = vmand %vm1197, %vm1161
        %vm1234 = vmand %vm1198, %vm1162
        %vm1235 = vmand %vm1199, %vm1163
        %vm1236 = vmand %vm1200, %vm1164
        %vm1237 = vmand %vm1201, %vm1165
        %vm1238 = vmand %vm1202, %vm1166
        %vm1239 = vmand %vm1203, %vm1167
        %vm1240 = vmand %vm1204, %vm1168
        %vm1241 = vmand %vm1205, %vm1169
        %vm1242 = vmand %vm1206, %vm1170
        %vm1243 = vmand %vm1207, %vm1171
        %vm1244 = vmand %vm1208, %vm1172
        %vm1245 = vmand %vm1209, %vm1173
        %vm1246 = vmand %vm1210, %vm1174
        %vm1247 = vmand %vm1211, %vm1175
        %vm1248 = vmand %vm1212, %vm1176
        %vm1249 = vmand %vm1213, %vm1177
        %vm1250 = vmand %vm1214, %vm1178
        %vm1251 = vmand %vm1215, %vm1179
        %vm1252 = vmand %vm1216, %vm1180
        %vm1253 = vmand %vm1217, %vm1181
        %vm1254 = vmand %vm1218, %vm1182
        %vm1255 = vmand %vm1219, %vm1183
        %vm1256 = vmand %vm1220, %vm1184
        %vm1257 = vmand %vm1221, %vm1185
        %vm1258 = vmand %vm1222, %vm1186
        %vm1259 = vmand %vm1223, %vm1187
        %vm1260 = vmand %vm1224, %vm1188
        %vm1261 = vmand %vm1225, %vm1189
        %vm1262 = vmand %vm1226, %vm1190
        %vm1263 = vmand %vm1227, %vm1191
        %vm1264 = vmand %vm1228, %vm1192
        %vm1265 = vmand %vm1229, %vm1193
        %vm1266 = vmand %vm1230, %vm1194
        %vm1267 = vmand %vm1231, %vm1195
        %v1268 = vadd.s32 %v914, 16
        %v1269 = vadd.s32 %v921, 16
        %v1270 = vadd.s32 %v928, 16
        %v1271 = vadd.s32 %v935, 16
        %v1272 = vadd.s32 %v942, 16
        %v1273 = vadd.s32 %v949, 16
        %v1274 = vadd.s32 %v956, 16
        %v1275 = vadd.s32 %v963, 16
        %v1276 = vadd.s32 %v970, 16
        %v1277 = vadd.s32 %v977, 16
        %v1278 = vadd.s32 %v984, 16
        %v1279 = vadd.s32 %v991, 16
        %v1280 = vadd.s32 %v998, 16
        %v1281 = vadd.s32 %v1005, 16
        %v1282 = vadd.s32 %v1012, 16
        %v1283 = vadd.s32 %v1019, 16
        %v1284 = vadd.s32 %v1026, 16
        %v1285 = vadd.s32 %v1033, 16
        %v1286 = vadd.s32 %v1040, 16
        %v1287 = vadd.s32 %v1047, 16
        %v1288 = vadd.s32 %v1054, 16
        %v1289 = vadd.s32 %v1061, 16
        %v1290 = vadd.s32 %v1068, 16
        %v1291 = vadd.s32 %v1075, 16
        %v1292 = vadd.s32 %v1082, 16
        %v1293 = vadd.s32 %v1089, 16
        %v1294 = vadd.s32 %v1096, 16
        %v1295 = vadd.s32 %v1103, 16
        %v1296 = vadd.s32 %v1110, 16
        %v1297 = vadd.s32 %v1117, 16
        %v1298 = vadd.s32 %v1124, 16
        %v1299 = vadd.s32 %v1131, 16
        %v1300 = vadd.s32 %v1138, 16
        %v1301 = vadd.s32 %v1145, 16
        %v1302 = vadd.s32 %v1152, 16
        %v1303 = vadd.s32 %v1159, 16
        %v1304 = vsel %vm1232, %v1268, %v914
        %v1305 = vsel %vm1233, %v1269, %v921
        %v1306 = vsel %vm1234, %v1270, %v928
        %v1307 = vsel %vm1235, %v1271, %v935
        %v1308 = vsel %vm1236, %v1272, %v942
        %v1309 = vsel %vm1237, %v1273, %v949
        %v1310 = vsel %vm1238, %v1274, %v956
        %v1311 = vsel %vm1239, %v1275, %v963
        %v1312 = vsel %vm1240, %v1276, %v970
        %v1313 = vsel %vm1241, %v1277, %v977
        %v1314 = vsel %vm1242, %v1278, %v984
        %v1315 = vsel %vm1243, %v1279, %v991
        %v1316 = vsel %vm1244, %v1280, %v998
        %v1317 = vsel %vm1245, %v1281, %v1005
        %v1318 = vsel %vm1246, %v1282, %v1012
        %v1319 = vsel %vm1247, %v1283, %v1019
        %v1320 = vsel %vm1248, %v1284, %v1026
        %v1321 = vsel %vm1249, %v1285, %v1033
        %v1322 = vsel %vm1250, %v1286, %v1040
        %v1323 = vsel %vm1251, %v1287, %v1047
        %v1324 = vsel %vm1252, %v1288, %v1054
        %v1325 = vsel %vm1253, %v1289, %v1061
        %v1326 = vsel %vm1254, %v1290, %v1068
        %v1327 = vsel %vm1255, %v1291, %v1075
        %v1328 = vsel %vm1256, %v1292, %v1082
        %v1329 = vsel %vm1257, %v1293, %v1089
        %v1330 = vsel %vm1258, %v1294, %v1096
        %v1331 = vsel %vm1259, %v1295, %v1103
        %v1332 = vsel %vm1260, %v1296, %v1110
        %v1333 = vsel %vm1261, %v1297, %v1117
        %v1334 = vsel %vm1262, %v1298, %v1124
        %v1335 = vsel %vm1263, %v1299, %v1131
        %v1336 = vsel %vm1264, %v1300, %v1138
        %v1337 = vsel %vm1265, %v1301, %v1145
        %v1338 = vsel %vm1266, %v1302, %v1152
        %v1339 = vsel %vm1267, %v1303, %v1159
        %vm1340 = vcmp.ne.s32.totalorder %v1304, 15
        %vm1341 = vcmp.ne.s32.totalorder %v1305, 15
        %vm1342 = vcmp.ne.s32.totalorder %v1306, 15
        %vm1343 = vcmp.ne.s32.totalorder %v1307, 15
        %vm1344 = vcmp.ne.s32.totalorder %v1308, 15
        %vm1345 = vcmp.ne.s32.totalorder %v1309, 15
        %vm1346 = vcmp.ne.s32.totalorder %v1310, 15
        %vm1347 = vcmp.ne.s32.totalorder %v1311, 15
        %vm1348 = vcmp.ne.s32.totalorder %v1312, 15
        %vm1349 = vcmp.ne.s32.totalorder %v1313, 15
        %vm1350 = vcmp.ne.s32.totalorder %v1314, 15
        %vm1351 = vcmp.ne.s32.totalorder %v1315, 15
        %vm1352 = vcmp.ne.s32.totalorder %v1316, 15
        %vm1353 = vcmp.ne.s32.totalorder %v1317, 15
        %vm1354 = vcmp.ne.s32.totalorder %v1318, 15
        %vm1355 = vcmp.ne.s32.totalorder %v1319, 15
        %vm1356 = vcmp.ne.s32.totalorder %v1320, 15
        %vm1357 = vcmp.ne.s32.totalorder %v1321, 15
        %vm1358 = vcmp.ne.s32.totalorder %v1322, 15
        %vm1359 = vcmp.ne.s32.totalorder %v1323, 15
        %vm1360 = vcmp.ne.s32.totalorder %v1324, 15
        %vm1361 = vcmp.ne.s32.totalorder %v1325, 15
        %vm1362 = vcmp.ne.s32.totalorder %v1326, 15
        %vm1363 = vcmp.ne.s32.totalorder %v1327, 15
        %vm1364 = vcmp.ne.s32.totalorder %v1328, 15
        %vm1365 = vcmp.ne.s32.totalorder %v1329, 15
        %vm1366 = vcmp.ne.s32.totalorder %v1330, 15
        %vm1367 = vcmp.ne.s32.totalorder %v1331, 15
        %vm1368 = vcmp.ne.s32.totalorder %v1332, 15
        %vm1369 = vcmp.ne.s32.totalorder %v1333, 15
        %vm1370 = vcmp.ne.s32.totalorder %v1334, 15
        %vm1371 = vcmp.ne.s32.totalorder %v1335, 15
        %vm1372 = vcmp.ne.s32.totalorder %v1336, 15
        %vm1373 = vcmp.ne.s32.totalorder %v1337, 15
        %vm1374 = vcmp.ne.s32.totalorder %v1338, 15
        %vm1375 = vcmp.ne.s32.totalorder %v1339, 15
        %v1376 = vsel %vm1340, 1, 0
        %v1377 = vsel %vm1341, 1, 0
        %v1378 = vsel %vm1342, 1, 0
        %v1379 = vsel %vm1343, 1, 0
        %v1380 = vsel %vm1344, 1, 0
        %v1381 = vsel %vm1345, 1, 0
        %v1382 = vsel %vm1346, 1, 0
        %v1383 = vsel %vm1347, 1, 0
        %v1384 = vsel %vm1348, 1, 0
        %v1385 = vsel %vm1349, 1, 0
        %v1386 = vsel %vm1350, 1, 0
        %v1387 = vsel %vm1351, 1, 0
        %v1388 = vsel %vm1352, 1, 0
        %v1389 = vsel %vm1353, 1, 0
        %v1390 = vsel %vm1354, 1, 0
        %v1391 = vsel %vm1355, 1, 0
        %v1392 = vsel %vm1356, 1, 0
        %v1393 = vsel %vm1357, 1, 0
        %v1394 = vsel %vm1358, 1, 0
        %v1395 = vsel %vm1359, 1, 0
        %v1396 = vsel %vm1360, 1, 0
        %v1397 = vsel %vm1361, 1, 0
        %v1398 = vsel %vm1362, 1, 0
        %v1399 = vsel %vm1363, 1, 0
        %v1400 = vsel %vm1364, 1, 0
        %v1401 = vsel %vm1365, 1, 0
        %v1402 = vsel %vm1366, 1, 0
        %v1403 = vsel %vm1367, 1, 0
        %v1404 = vsel %vm1368, 1, 0
        %v1405 = vsel %vm1369, 1, 0
        %v1406 = vsel %vm1370, 1, 0
        %v1407 = vsel %vm1371, 1, 0
        %v1408 = vsel %vm1372, 1, 0
        %v1409 = vsel %vm1373, 1, 0
        %v1410 = vsel %vm1374, 1, 0
        %v1411 = vsel %vm1375, 1, 0
        %v1412 = vcvt.s32.f32 %v1376
        %v1413 = vcvt.s32.f32 %v1377
        %v1414 = vcvt.s32.f32 %v1378
        %v1415 = vcvt.s32.f32 %v1379
        %v1416 = vcvt.s32.f32 %v1380
        %v1417 = vcvt.s32.f32 %v1381
        %v1418 = vcvt.s32.f32 %v1382
        %v1419 = vcvt.s32.f32 %v1383
        %v1420 = vcvt.s32.f32 %v1384
        %v1421 = vcvt.s32.f32 %v1385
        %v1422 = vcvt.s32.f32 %v1386
        %v1423 = vcvt.s32.f32 %v1387
        %v1424 = vcvt.s32.f32 %v1388
        %v1425 = vcvt.s32.f32 %v1389
        %v1426 = vcvt.s32.f32 %v1390
        %v1427 = vcvt.s32.f32 %v1391
        %v1428 = vcvt.s32.f32 %v1392
        %v1429 = vcvt.s32.f32 %v1393
        %v1430 = vcvt.s32.f32 %v1394
        %v1431 = vcvt.s32.f32 %v1395
        %v1432 = vcvt.s32.f32 %v1396
        %v1433 = vcvt.s32.f32 %v1397
        %v1434 = vcvt.s32.f32 %v1398
        %v1435 = vcvt.s32.f32 %v1399
        %v1436 = vcvt.s32.f32 %v1400
        %v1437 = vcvt.s32.f32 %v1401
        %v1438 = vcvt.s32.f32 %v1402
        %v1439 = vcvt.s32.f32 %v1403
        %v1440 = vcvt.s32.f32 %v1404
        %v1441 = vcvt.s32.f32 %v1405
        %v1442 = vcvt.s32.f32 %v1406
        %v1443 = vcvt.s32.f32 %v1407
        %v1444 = vcvt.s32.f32 %v1408
        %v1445 = vcvt.s32.f32 %v1409
        %v1446 = vcvt.s32.f32 %v1410
        %v1447 = vcvt.s32.f32 %v1411
        %vm1448 = vcmp.ne.s32.totalorder %v1304, 0
        %vm1449 = vcmp.ne.s32.totalorder %v1305, 0
        %vm1450 = vcmp.ne.s32.totalorder %v1306, 0
        %vm1451 = vcmp.ne.s32.totalorder %v1307, 0
        %vm1452 = vcmp.ne.s32.totalorder %v1308, 0
        %vm1453 = vcmp.ne.s32.totalorder %v1309, 0
        %vm1454 = vcmp.ne.s32.totalorder %v1310, 0
        %vm1455 = vcmp.ne.s32.totalorder %v1311, 0
        %vm1456 = vcmp.ne.s32.totalorder %v1312, 0
        %vm1457 = vcmp.ne.s32.totalorder %v1313, 0
        %vm1458 = vcmp.ne.s32.totalorder %v1314, 0
        %vm1459 = vcmp.ne.s32.totalorder %v1315, 0
        %vm1460 = vcmp.ne.s32.totalorder %v1316, 0
        %vm1461 = vcmp.ne.s32.totalorder %v1317, 0
        %vm1462 = vcmp.ne.s32.totalorder %v1318, 0
        %vm1463 = vcmp.ne.s32.totalorder %v1319, 0
        %vm1464 = vcmp.ne.s32.totalorder %v1320, 0
        %vm1465 = vcmp.ne.s32.totalorder %v1321, 0
        %vm1466 = vcmp.ne.s32.totalorder %v1322, 0
        %vm1467 = vcmp.ne.s32.totalorder %v1323, 0
        %vm1468 = vcmp.ne.s32.totalorder %v1324, 0
        %vm1469 = vcmp.ne.s32.totalorder %v1325, 0
        %vm1470 = vcmp.ne.s32.totalorder %v1326, 0
        %vm1471 = vcmp.ne.s32.totalorder %v1327, 0
        %vm1472 = vcmp.ne.s32.totalorder %v1328, 0
        %vm1473 = vcmp.ne.s32.totalorder %v1329, 0
        %vm1474 = vcmp.ne.s32.totalorder %v1330, 0
        %vm1475 = vcmp.ne.s32.totalorder %v1331, 0
        %vm1476 = vcmp.ne.s32.totalorder %v1332, 0
        %vm1477 = vcmp.ne.s32.totalorder %v1333, 0
        %vm1478 = vcmp.ne.s32.totalorder %v1334, 0
        %vm1479 = vcmp.ne.s32.totalorder %v1335, 0
        %vm1480 = vcmp.ne.s32.totalorder %v1336, 0
        %vm1481 = vcmp.ne.s32.totalorder %v1337, 0
        %vm1482 = vcmp.ne.s32.totalorder %v1338, 0
        %vm1483 = vcmp.ne.s32.totalorder %v1339, 0
        %v1484 = vsel %vm1448, 1, 0
        %v1485 = vsel %vm1449, 1, 0
        %v1486 = vsel %vm1450, 1, 0
        %v1487 = vsel %vm1451, 1, 0
        %v1488 = vsel %vm1452, 1, 0
        %v1489 = vsel %vm1453, 1, 0
        %v1490 = vsel %vm1454, 1, 0
        %v1491 = vsel %vm1455, 1, 0
        %v1492 = vsel %vm1456, 1, 0
        %v1493 = vsel %vm1457, 1, 0
        %v1494 = vsel %vm1458, 1, 0
        %v1495 = vsel %vm1459, 1, 0
        %v1496 = vsel %vm1460, 1, 0
        %v1497 = vsel %vm1461, 1, 0
        %v1498 = vsel %vm1462, 1, 0
        %v1499 = vsel %vm1463, 1, 0
        %v1500 = vsel %vm1464, 1, 0
        %v1501 = vsel %vm1465, 1, 0
        %v1502 = vsel %vm1466, 1, 0
        %v1503 = vsel %vm1467, 1, 0
        %v1504 = vsel %vm1468, 1, 0
        %v1505 = vsel %vm1469, 1, 0
        %v1506 = vsel %vm1470, 1, 0
        %v1507 = vsel %vm1471, 1, 0
        %v1508 = vsel %vm1472, 1, 0
        %v1509 = vsel %vm1473, 1, 0
        %v1510 = vsel %vm1474, 1, 0
        %v1511 = vsel %vm1475, 1, 0
        %v1512 = vsel %vm1476, 1, 0
        %v1513 = vsel %vm1477, 1, 0
        %v1514 = vsel %vm1478, 1, 0
        %v1515 = vsel %vm1479, 1, 0
        %v1516 = vsel %vm1480, 1, 0
        %v1517 = vsel %vm1481, 1, 0
        %v1518 = vsel %vm1482, 1, 0
        %v1519 = vsel %vm1483, 1, 0
        %v1520 = vcvt.s32.f32 %v1484
        %v1521 = vcvt.s32.f32 %v1485
        %v1522 = vcvt.s32.f32 %v1486
        %v1523 = vcvt.s32.f32 %v1487
        %v1524 = vcvt.s32.f32 %v1488
        %v1525 = vcvt.s32.f32 %v1489
        %v1526 = vcvt.s32.f32 %v1490
        %v1527 = vcvt.s32.f32 %v1491
        %v1528 = vcvt.s32.f32 %v1492
        %v1529 = vcvt.s32.f32 %v1493
        %v1530 = vcvt.s32.f32 %v1494
        %v1531 = vcvt.s32.f32 %v1495
        %v1532 = vcvt.s32.f32 %v1496
        %v1533 = vcvt.s32.f32 %v1497
        %v1534 = vcvt.s32.f32 %v1498
        %v1535 = vcvt.s32.f32 %v1499
        %v1536 = vcvt.s32.f32 %v1500
        %v1537 = vcvt.s32.f32 %v1501
        %v1538 = vcvt.s32.f32 %v1502
        %v1539 = vcvt.s32.f32 %v1503
        %v1540 = vcvt.s32.f32 %v1504
        %v1541 = vcvt.s32.f32 %v1505
        %v1542 = vcvt.s32.f32 %v1506
        %v1543 = vcvt.s32.f32 %v1507
        %v1544 = vcvt.s32.f32 %v1508
        %v1545 = vcvt.s32.f32 %v1509
        %v1546 = vcvt.s32.f32 %v1510
        %v1547 = vcvt.s32.f32 %v1511
        %v1548 = vcvt.s32.f32 %v1512
        %v1549 = vcvt.s32.f32 %v1513
        %v1550 = vcvt.s32.f32 %v1514
        %v1551 = vcvt.s32.f32 %v1515
        %v1552 = vcvt.s32.f32 %v1516
        %v1553 = vcvt.s32.f32 %v1517
        %v1554 = vcvt.s32.f32 %v1518
        %v1555 = vcvt.s32.f32 %v1519
        %v1556 = vmul.f32 %v835, %v1412
        %v1557 = vmul.f32 %v836, %v1413
        %v1558 = vmul.f32 %v837, %v1414
        %v1559 = vmul.f32 %v838, %v1415
        %v1560 = vmul.f32 %v839, %v1416
        %v1561 = vmul.f32 %v840, %v1417
        %v1562 = vmul.f32 %v841, %v1418
        %v1563 = vmul.f32 %v842, %v1419
        %v1564 = vmul.f32 %v843, %v1420
        %v1565 = vmul.f32 %v844, %v1421
        %v1566 = vmul.f32 %v845, %v1422
        %v1567 = vmul.f32 %v846, %v1423
        %v1568 = vmul.f32 %v847, %v1424
        %v1569 = vmul.f32 %v848, %v1425
        %v1570 = vmul.f32 %v849, %v1426
        %v1571 = vmul.f32 %v850, %v1427
        %v1572 = vmul.f32 %v851, %v1428
        %v1573 = vmul.f32 %v852, %v1429
        %v1574 = vmul.f32 %v853, %v1430
        %v1575 = vmul.f32 %v854, %v1431
        %v1576 = vmul.f32 %v855, %v1432
        %v1577 = vmul.f32 %v856, %v1433
        %v1578 = vmul.f32 %v857, %v1434
        %v1579 = vmul.f32 %v858, %v1435
        %v1580 = vmul.f32 %v859, %v1436
        %v1581 = vmul.f32 %v860, %v1437
        %v1582 = vmul.f32 %v861, %v1438
        %v1583 = vmul.f32 %v862, %v1439
        %v1584 = vmul.f32 %v863, %v1440
        %v1585 = vmul.f32 %v864, %v1441
        %v1586 = vmul.f32 %v865, %v1442
        %v1587 = vmul.f32 %v866, %v1443
        %v1588 = vmul.f32 %v867, %v1444
        %v1589 = vmul.f32 %v868, %v1445
        %v1590 = vmul.f32 %v869, %v1446
        %v1591 = vmul.f32 %v870, %v1447
        %v1592 = vrot.slane %v1556, 7
        %v1593 = vrot.slane %v1557, 7
        %v1594 = vrot.slane %v1558, 7
        %v1595 = vrot.slane %v1559, 7
        %v1596 = vrot.slane %v1560, 7
        %v1597 = vrot.slane %v1561, 7
        %v1598 = vrot.slane %v1562, 7
        %v1599 = vrot.slane %v1563, 7
        %v1600 = vrot.slane %v1564, 7
        %v1601 = vrot.slane %v1565, 7
        %v1602 = vrot.slane %v1566, 7
        %v1603 = vrot.slane %v1567, 7
        %v1604 = vrot.slane %v1568, 7
        %v1605 = vrot.slane %v1569, 7
        %v1606 = vrot.slane %v1570, 7
        %v1607 = vrot.slane %v1571, 7
        %v1608 = vrot.slane %v1572, 7
        %v1609 = vrot.slane %v1573, 7
        %v1610 = vrot.slane %v1574, 7
        %v1611 = vrot.slane %v1575, 7
        %v1612 = vrot.slane %v1576, 7
        %v1613 = vrot.slane %v1577, 7
        %v1614 = vrot.slane %v1578, 7
        %v1615 = vrot.slane %v1579, 7
        %v1616 = vrot.slane %v1580, 7
        %v1617 = vrot.slane %v1581, 7
        %v1618 = vrot.slane %v1582, 7
        %v1619 = vrot.slane %v1583, 7
        %v1620 = vrot.slane %v1584, 7
        %v1621 = vrot.slane %v1585, 7
        %v1622 = vrot.slane %v1586, 7
        %v1623 = vrot.slane %v1587, 7
        %v1624 = vrot.slane %v1588, 7
        %v1625 = vrot.slane %v1589, 7
        %v1626 = vrot.slane %v1590, 7
        %v1627 = vrot.slane %v1591, 7
        %vm1628 = vcmp.lt.s32.totalorder %v872, 1
        %v1629 = vsel %vm1628, %v1626, %v1627
        %v1630 = vsel %vm1628, %v1625, %v1626
        %v1631 = vsel %vm1628, %v1624, %v1625
        %v1632 = vsel %vm1628, %v1623, %v1624
        %v1633 = vsel %vm1628, %v1622, %v1623
        %v1634 = vsel %vm1628, %v1621, %v1622
        %v1635 = vsel %vm1628, %v1620, %v1621
        %v1636 = vsel %vm1628, %v1619, %v1620
        %v1637 = vsel %vm1628, %v1618, %v1619
        %v1638 = vsel %vm1628, %v1617, %v1618
        %v1639 = vsel %vm1628, %v1616, %v1617
        %v1640 = vsel %vm1628, %v1615, %v1616
        %v1641 = vsel %vm1628, %v1614, %v1615
        %v1642 = vsel %vm1628, %v1613, %v1614
        %v1643 = vsel %vm1628, %v1612, %v1613
        %v1644 = vsel %vm1628, %v1611, %v1612
        %v1645 = vsel %vm1628, %v1610, %v1611
        %v1646 = vsel %vm1628, %v1609, %v1610
        %v1647 = vsel %vm1628, %v1608, %v1609
        %v1648 = vsel %vm1628, %v1607, %v1608
        %v1649 = vsel %vm1628, %v1606, %v1607
        %v1650 = vsel %vm1628, %v1605, %v1606
        %v1651 = vsel %vm1628, %v1604, %v1605
        %v1652 = vsel %vm1628, %v1603, %v1604
        %v1653 = vsel %vm1628, %v1602, %v1603
        %v1654 = vsel %vm1628, %v1601, %v1602
        %v1655 = vsel %vm1628, %v1600, %v1601
        %v1656 = vsel %vm1628, %v1599, %v1600
        %v1657 = vsel %vm1628, %v1598, %v1599
        %v1658 = vsel %vm1628, %v1597, %v1598
        %v1659 = vsel %vm1628, %v1596, %v1597
        %v1660 = vsel %vm1628, %v1595, %v1596
        %v1661 = vsel %vm1628, %v1594, %v1595
        %v1662 = vsel %vm1628, %v1593, %v1594
        %v1663 = vsel %vm1628, %v1592, %v1593
        %v1664 = vsel %vm1628, %v1627, %v1592
        %v1665 = vpack.c.bf16 %v1663, %v1664
        %v1666 = vpack.c.bf16 %v1661, %v1662
        %v1667 = vpack.c.bf16 %v1659, %v1660
        %v1668 = vpack.c.bf16 %v1657, %v1658
        %v1669 = vpack.c.bf16 %v1655, %v1656
        %v1670 = vpack.c.bf16 %v1653, %v1654
        %v1671 = vpack.c.bf16 %v1651, %v1652
        %v1672 = vpack.c.bf16 %v1649, %v1650
        %v1673 = vpack.c.bf16 %v1647, %v1648
        %v1674 = vpack.c.bf16 %v1645, %v1646
        %v1675 = vpack.c.bf16 %v1643, %v1644
        %v1676 = vpack.c.bf16 %v1641, %v1642
        %v1677 = vpack.c.bf16 %v1639, %v1640
        %v1678 = vpack.c.bf16 %v1637, %v1638
        %v1679 = vpack.c.bf16 %v1635, %v1636
        %v1680 = vpack.c.bf16 %v1633, %v1634
        %v1681 = vpack.c.bf16 %v1631, %v1632
        %v1682 = vpack.c.bf16 %v1629, %v1630
        %v1683 = vpack.c.bf16 %v836, %v835
        %v1684 = vpack.c.bf16 %v838, %v837
        %v1685 = vpack.c.bf16 %v840, %v839
        %v1686 = vpack.c.bf16 %v842, %v841
        %v1687 = vpack.c.bf16 %v844, %v843
        %v1688 = vpack.c.bf16 %v846, %v845
        %v1689 = vpack.c.bf16 %v848, %v847
        %v1690 = vpack.c.bf16 %v850, %v849
        %v1691 = vpack.c.bf16 %v852, %v851
        %v1692 = vpack.c.bf16 %v854, %v853
        %v1693 = vpack.c.bf16 %v856, %v855
        %v1694 = vpack.c.bf16 %v858, %v857
        %v1695 = vpack.c.bf16 %v860, %v859
        %v1696 = vpack.c.bf16 %v862, %v861
        %v1697 = vpack.c.bf16 %v864, %v863
        %v1698 = vpack.c.bf16 %v866, %v865
        %v1699 = vpack.c.bf16 %v868, %v867
        %v1700 = vpack.c.bf16 %v870, %v869
        %v1701 = vmul.f32 %v835, %v1520
        %v1702 = vmul.f32 %v836, %v1521
        %v1703 = vmul.f32 %v837, %v1522
        %v1704 = vmul.f32 %v838, %v1523
        %v1705 = vmul.f32 %v839, %v1524
        %v1706 = vmul.f32 %v840, %v1525
        %v1707 = vmul.f32 %v841, %v1526
        %v1708 = vmul.f32 %v842, %v1527
        %v1709 = vmul.f32 %v843, %v1528
        %v1710 = vmul.f32 %v844, %v1529
        %v1711 = vmul.f32 %v845, %v1530
        %v1712 = vmul.f32 %v846, %v1531
        %v1713 = vmul.f32 %v847, %v1532
        %v1714 = vmul.f32 %v848, %v1533
        %v1715 = vmul.f32 %v849, %v1534
        %v1716 = vmul.f32 %v850, %v1535
        %v1717 = vmul.f32 %v851, %v1536
        %v1718 = vmul.f32 %v852, %v1537
        %v1719 = vmul.f32 %v853, %v1538
        %v1720 = vmul.f32 %v854, %v1539
        %v1721 = vmul.f32 %v855, %v1540
        %v1722 = vmul.f32 %v856, %v1541
        %v1723 = vmul.f32 %v857, %v1542
        %v1724 = vmul.f32 %v858, %v1543
        %v1725 = vmul.f32 %v859, %v1544
        %v1726 = vmul.f32 %v860, %v1545
        %v1727 = vmul.f32 %v861, %v1546
        %v1728 = vmul.f32 %v862, %v1547
        %v1729 = vmul.f32 %v863, %v1548
        %v1730 = vmul.f32 %v864, %v1549
        %v1731 = vmul.f32 %v865, %v1550
        %v1732 = vmul.f32 %v866, %v1551
        %v1733 = vmul.f32 %v867, %v1552
        %v1734 = vmul.f32 %v868, %v1553
        %v1735 = vmul.f32 %v869, %v1554
        %v1736 = vmul.f32 %v870, %v1555
        %v1737 = vrot.slane %v1701, 1
        %v1738 = vrot.slane %v1702, 1
        %v1739 = vrot.slane %v1703, 1
        %v1740 = vrot.slane %v1704, 1
        %v1741 = vrot.slane %v1705, 1
        %v1742 = vrot.slane %v1706, 1
        %v1743 = vrot.slane %v1707, 1
        %v1744 = vrot.slane %v1708, 1
        %v1745 = vrot.slane %v1709, 1
        %v1746 = vrot.slane %v1710, 1
        %v1747 = vrot.slane %v1711, 1
        %v1748 = vrot.slane %v1712, 1
        %v1749 = vrot.slane %v1713, 1
        %v1750 = vrot.slane %v1714, 1
        %v1751 = vrot.slane %v1715, 1
        %v1752 = vrot.slane %v1716, 1
        %v1753 = vrot.slane %v1717, 1
        %v1754 = vrot.slane %v1718, 1
        %v1755 = vrot.slane %v1719, 1
        %v1756 = vrot.slane %v1720, 1
        %v1757 = vrot.slane %v1721, 1
        %v1758 = vrot.slane %v1722, 1
        %v1759 = vrot.slane %v1723, 1
        %v1760 = vrot.slane %v1724, 1
        %v1761 = vrot.slane %v1725, 1
        %v1762 = vrot.slane %v1726, 1
        %v1763 = vrot.slane %v1727, 1
        %v1764 = vrot.slane %v1728, 1
        %v1765 = vrot.slane %v1729, 1
        %v1766 = vrot.slane %v1730, 1
        %v1767 = vrot.slane %v1731, 1
        %v1768 = vrot.slane %v1732, 1
        %v1769 = vrot.slane %v1733, 1
        %v1770 = vrot.slane %v1734, 1
        %v1771 = vrot.slane %v1735, 1
        %v1772 = vrot.slane %v1736, 1
        %vm1773 = vcmp.lt.s32.totalorder %v872, 7
        %v1774 = vsel %vm1773, %v1771, %v1772
        %v1775 = vsel %vm1773, %v1770, %v1771
        %v1776 = vsel %vm1773, %v1769, %v1770
        %v1777 = vsel %vm1773, %v1768, %v1769
        %v1778 = vsel %vm1773, %v1767, %v1768
        %v1779 = vsel %vm1773, %v1766, %v1767
        %v1780 = vsel %vm1773, %v1765, %v1766
        %v1781 = vsel %vm1773, %v1764, %v1765
        %v1782 = vsel %vm1773, %v1763, %v1764
        %v1783 = vsel %vm1773, %v1762, %v1763
        %v1784 = vsel %vm1773, %v1761, %v1762
        %v1785 = vsel %vm1773, %v1760, %v1761
        %v1786 = vsel %vm1773, %v1759, %v1760
        %v1787 = vsel %vm1773, %v1758, %v1759
        %v1788 = vsel %vm1773, %v1757, %v1758
        %v1789 = vsel %vm1773, %v1756, %v1757
        %v1790 = vsel %vm1773, %v1755, %v1756
        %v1791 = vsel %vm1773, %v1754, %v1755
        %v1792 = vsel %vm1773, %v1753, %v1754
        %v1793 = vsel %vm1773, %v1752, %v1753
        %v1794 = vsel %vm1773, %v1751, %v1752
        %v1795 = vsel %vm1773, %v1750, %v1751
        %v1796 = vsel %vm1773, %v1749, %v1750
        %v1797 = vsel %vm1773, %v1748, %v1749
        %v1798 = vsel %vm1773, %v1747, %v1748
        %v1799 = vsel %vm1773, %v1746, %v1747
        %v1800 = vsel %vm1773, %v1745, %v1746
        %v1801 = vsel %vm1773, %v1744, %v1745
        %v1802 = vsel %vm1773, %v1743, %v1744
        %v1803 = vsel %vm1773, %v1742, %v1743
        %v1804 = vsel %vm1773, %v1741, %v1742
        %v1805 = vsel %vm1773, %v1740, %v1741
        %v1806 = vsel %vm1773, %v1739, %v1740
        %v1807 = vsel %vm1773, %v1738, %v1739
        %v1808 = vsel %vm1773, %v1737, %v1738
        %v1809 = vsel %vm1773, %v1772, %v1737
        %v1810 = vpack.c.bf16 %v1807, %v1808
        %v1811 = vpack.c.bf16 %v1805, %v1806
        %v1812 = vpack.c.bf16 %v1803, %v1804
        %v1813 = vpack.c.bf16 %v1801, %v1802
        %v1814 = vpack.c.bf16 %v1799, %v1800
        %v1815 = vpack.c.bf16 %v1797, %v1798
        %v1816 = vpack.c.bf16 %v1795, %v1796
        %v1817 = vpack.c.bf16 %v1793, %v1794
        %v1818 = vpack.c.bf16 %v1791, %v1792
        %v1819 = vpack.c.bf16 %v1789, %v1790
        %v1820 = vpack.c.bf16 %v1787, %v1788
        %v1821 = vpack.c.bf16 %v1785, %v1786
        %v1822 = vpack.c.bf16 %v1783, %v1784
        %v1823 = vpack.c.bf16 %v1781, %v1782
        %v1824 = vpack.c.bf16 %v1779, %v1780
        %v1825 = vpack.c.bf16 %v1777, %v1778
        %v1826 = vpack.c.bf16 %v1775, %v1776
        %v1827 = vpack.c.bf16 %v1809, %v1774
        %v1828 = vld [vmem:[#allocation8] sm:$0xf]
        %v1829 = vld [vmem:[#allocation8 + $0x4] sm:$0xf]
        %v1830 = vld [vmem:[#allocation8 + $0x8] sm:$0xf]
        %v1831 = vld [vmem:[#allocation8 + $0xc] sm:$0xf]
        %v1832 = vld [vmem:[#allocation8 + $0x10] sm:$0xf]
        %v1833 = vld [vmem:[#allocation8 + $0x14] sm:$0xf]
        %v1834 = vld [vmem:[#allocation8 + $0x18] sm:$0xf]
        %v1835 = vld [vmem:[#allocation8 + $0x1c] sm:$0xf]
        %v1836 = vld [vmem:[#allocation8 + $0x20] sm:$0xf]
        %v1837 = vld [vmem:[#allocation8 + $0x24] sm:$0xf]
        %v1838 = vld [vmem:[#allocation8 + $0x28] sm:$0xf]
        %v1839 = vld [vmem:[#allocation8 + $0x2c] sm:$0xf]
        %v1840 = vld [vmem:[#allocation8 + $0x30] sm:$0xf]
        %v1841 = vld [vmem:[#allocation8 + $0x34] sm:$0xf]
        %v1842 = vld [vmem:[#allocation8 + $0x38] sm:$0xf]
        %v1843 = vld [vmem:[#allocation8 + $0x3c] sm:$0xf]
        %v1844 = vld [vmem:[#allocation8 + $0x40] sm:$0xf]
        %v1845 = vld [vmem:[#allocation8 + $0x44] sm:$0xf]
        %v1846 = vld [vmem:[#allocation8 + $0x48] sm:$0xf]
        %v1847 = vld [vmem:[#allocation8 + $0x4c] sm:$0xf]
        %v1848 = vld [vmem:[#allocation8 + $0x50] sm:$0xf]
        %v1849 = vld [vmem:[#allocation8 + $0x54] sm:$0xf]
        %v1850 = vld [vmem:[#allocation8 + $0x58] sm:$0xf]
        %v1851 = vld [vmem:[#allocation8 + $0x5c] sm:$0xf]
        %v1852 = vld [vmem:[#allocation8 + $0x60] sm:$0xf]
        %v1853 = vld [vmem:[#allocation8 + $0x64] sm:$0xf]
        %v1854 = vld [vmem:[#allocation8 + $0x68] sm:$0xf]
        %v1855 = vld [vmem:[#allocation8 + $0x6c] sm:$0xf]
        %v1856 = vld [vmem:[#allocation8 + $0x70] sm:$0xf]
        %v1857 = vld [vmem:[#allocation8 + $0x74] sm:$0xf]
        %v1858 = vld [vmem:[#allocation8 + $0x78] sm:$0xf]
        %v1859 = vld [vmem:[#allocation8 + $0x7c] sm:$0xf]
        %v1860 = vld [vmem:[#allocation8 + $0x80] sm:$0xf]
        %v1861 = vld [vmem:[#allocation8 + $0x84] sm:$0xf]
        %v1862 = vld [vmem:[#allocation8 + $0x88] sm:$0xf]
        %v1863 = vld [vmem:[#allocation8 + $0x8c] sm:$0xf]
        %v1864 = vld [vmem:[#allocation8 + $0x90] sm:$0xf]
        %v1865 = vld [vmem:[#allocation8 + $0x94] sm:$0xf]
        %v1866 = vld [vmem:[#allocation8 + $0x98] sm:$0xf]
        %v1867 = vld [vmem:[#allocation8 + $0x9c] sm:$0xf]
        %v1868 = vld [vmem:[#allocation8 + $0xa0] sm:$0xf]
        %v1869 = vld [vmem:[#allocation8 + $0xa4] sm:$0xf]
        %v1870 = vld [vmem:[#allocation8 + $0xa8] sm:$0xf]
        %v1871 = vld [vmem:[#allocation8 + $0xac] sm:$0xf]
        %v1872 = vld [vmem:[#allocation8 + $0xb0] sm:$0xf]
        %v1873 = vld [vmem:[#allocation8 + $0xb4] sm:$0xf]
        %v1874 = vld [vmem:[#allocation8 + $0xb8] sm:$0xf]
        %v1875 = vld [vmem:[#allocation8 + $0xbc] sm:$0xf]
        %v1876 = vld [vmem:[#allocation8 + $0xc0] sm:$0xf]
        %v1877 = vld [vmem:[#allocation8 + $0xc4] sm:$0xf]
        %v1878 = vld [vmem:[#allocation8 + $0xc8] sm:$0xf]
        %v1879 = vld [vmem:[#allocation8 + $0xcc] sm:$0xf]
        %v1880 = vld [vmem:[#allocation8 + $0xd0] sm:$0xf]
        %v1881 = vld [vmem:[#allocation8 + $0xd4] sm:$0xf]
        %v1882 = vld [vmem:[#allocation8 + $0xd8] sm:$0xf]
        %v1883 = vld [vmem:[#allocation8 + $0xdc] sm:$0xf]
        %v1884 = vld [vmem:[#allocation8 + $0xe0] sm:$0xf]
        %v1885 = vld [vmem:[#allocation8 + $0xe4] sm:$0xf]
        %v1886 = vld [vmem:[#allocation8 + $0xe8] sm:$0xf]
        %v1887 = vld [vmem:[#allocation8 + $0xec] sm:$0xf]
        %v1888 = vld [vmem:[#allocation8 + $0xf0] sm:$0xf]
        %v1889 = vld [vmem:[#allocation8 + $0xf4] sm:$0xf]
        %v1890 = vld [vmem:[#allocation8 + $0xf8] sm:$0xf]
        %v1891 = vld [vmem:[#allocation8 + $0xfc] sm:$0xf]
        %v1892 = vld [vmem:[#allocation8 + $0x100] sm:$0xf]
        %v1893 = vld [vmem:[#allocation8 + $0x104] sm:$0xf]
        %v1894 = vld [vmem:[#allocation8 + $0x108] sm:$0xf]
        %v1895 = vld [vmem:[#allocation8 + $0x10c] sm:$0xf]
        %v1896 = vld [vmem:[#allocation8 + $0x110] sm:$0xf]
        %v1897 = vld [vmem:[#allocation8 + $0x114] sm:$0xf]
        %v1898 = vld [vmem:[#allocation8 + $0x118] sm:$0xf]
        %v1899 = vld [vmem:[#allocation8 + $0x11c] sm:$0xf]
        %v1900 = vld [vmem:[#allocation8 + $0x120] sm:$0xf]
        %v1901 = vld [vmem:[#allocation8 + $0x124] sm:$0xf]
        %v1902 = vld [vmem:[#allocation8 + $0x128] sm:$0xf]
        %v1903 = vld [vmem:[#allocation8 + $0x12c] sm:$0xf]
        %v1904 = vld [vmem:[#allocation8 + $0x130] sm:$0xf]
        %v1905 = vld [vmem:[#allocation8 + $0x134] sm:$0xf]
        %v1906 = vld [vmem:[#allocation8 + $0x138] sm:$0xf]
        %v1907 = vld [vmem:[#allocation8 + $0x13c] sm:$0xf]
        %v1908 = vld [vmem:[#allocation8 + $0x140] sm:$0xf]
        %v1909 = vld [vmem:[#allocation8 + $0x144] sm:$0xf]
        %v1910 = vld [vmem:[#allocation8 + $0x148] sm:$0xf]
        %v1911 = vld [vmem:[#allocation8 + $0x14c] sm:$0xf]
        %v1912 = vld [vmem:[#allocation8 + $0x150] sm:$0xf]
        %v1913 = vld [vmem:[#allocation8 + $0x154] sm:$0xf]
        %v1914 = vld [vmem:[#allocation8 + $0x158] sm:$0xf]
        %v1915 = vld [vmem:[#allocation8 + $0x15c] sm:$0xf]
        %v1916 = vld [vmem:[#allocation8 + $0x160] sm:$0xf]
        %v1917 = vld [vmem:[#allocation8 + $0x164] sm:$0xf]
        %v1918 = vld [vmem:[#allocation8 + $0x168] sm:$0xf]
        %v1919 = vld [vmem:[#allocation8 + $0x16c] sm:$0xf]
        %v1920 = vld [vmem:[#allocation8 + $0x170] sm:$0xf]
        %v1921 = vld [vmem:[#allocation8 + $0x174] sm:$0xf]
        %v1922 = vld [vmem:[#allocation8 + $0x178] sm:$0xf]
        %v1923 = vld [vmem:[#allocation8 + $0x17c] sm:$0xf]
        %v1924 = vld [vmem:[#allocation8 + $0x180] sm:$0xf]
        %v1925 = vld [vmem:[#allocation8 + $0x184] sm:$0xf]
        %v1926 = vld [vmem:[#allocation8 + $0x188] sm:$0xf]
        %v1927 = vld [vmem:[#allocation8 + $0x18c] sm:$0xf]
        %v1928 = vld [vmem:[#allocation8 + $0x190] sm:$0xf]
        %v1929 = vld [vmem:[#allocation8 + $0x194] sm:$0xf]
        %v1930 = vld [vmem:[#allocation8 + $0x198] sm:$0xf]
        %v1931 = vld [vmem:[#allocation8 + $0x19c] sm:$0xf]
        %v1932 = vld [vmem:[#allocation8 + $0x1a0] sm:$0xf]
        %v1933 = vld [vmem:[#allocation8 + $0x1a4] sm:$0xf]
        %v1934 = vld [vmem:[#allocation8 + $0x1a8] sm:$0xf]
        %v1935 = vld [vmem:[#allocation8 + $0x1ac] sm:$0xf]
        %v1936 = vld [vmem:[#allocation8 + $0x1b0] sm:$0xf]
        %v1937 = vld [vmem:[#allocation8 + $0x1b4] sm:$0xf]
        %v1938 = vld [vmem:[#allocation8 + $0x1b8] sm:$0xf]
        %v1939 = vld [vmem:[#allocation8 + $0x1bc] sm:$0xf]
        %v1940 = vld [vmem:[#allocation8 + $0x1c0] sm:$0xf]
        %v1941 = vld [vmem:[#allocation8 + $0x1c4] sm:$0xf]
        %v1942 = vld [vmem:[#allocation8 + $0x1c8] sm:$0xf]
        %v1943 = vld [vmem:[#allocation8 + $0x1cc] sm:$0xf]
        %v1944 = vld [vmem:[#allocation8 + $0x1d0] sm:$0xf]
        %v1945 = vld [vmem:[#allocation8 + $0x1d4] sm:$0xf]
        %v1946 = vld [vmem:[#allocation8 + $0x1d8] sm:$0xf]
        %v1947 = vld [vmem:[#allocation8 + $0x1dc] sm:$0xf]
        %v1948 = vld [vmem:[#allocation8 + $0x1e0] sm:$0xf]
        %v1949 = vld [vmem:[#allocation8 + $0x1e4] sm:$0xf]
        %v1950 = vld [vmem:[#allocation8 + $0x1e8] sm:$0xf]
        %v1951 = vld [vmem:[#allocation8 + $0x1ec] sm:$0xf]
        %v1952 = vld [vmem:[#allocation8 + $0x1f0] sm:$0xf]
        %v1953 = vld [vmem:[#allocation8 + $0x1f4] sm:$0xf]
        %v1954 = vld [vmem:[#allocation8 + $0x1f8] sm:$0xf]
        %v1955 = vld [vmem:[#allocation8 + $0x1fc] sm:$0xf]
        %v1956 = vld [vmem:[#allocation8 + $0x200] sm:$0xf]
        %v1957 = vld [vmem:[#allocation8 + $0x204] sm:$0xf]
        %v1958 = vld [vmem:[#allocation8 + $0x208] sm:$0xf]
        %v1959 = vld [vmem:[#allocation8 + $0x20c] sm:$0xf]
        %v1960 = vld [vmem:[#allocation8 + $0x210] sm:$0xf]
        %v1961 = vld [vmem:[#allocation8 + $0x214] sm:$0xf]
        %v1962 = vld [vmem:[#allocation8 + $0x218] sm:$0xf]
        %v1963 = vld [vmem:[#allocation8 + $0x21c] sm:$0xf]
        %v1964 = vld [vmem:[#allocation8 + $0x220] sm:$0xf]
        %v1965 = vld [vmem:[#allocation8 + $0x224] sm:$0xf]
        %v1966 = vld [vmem:[#allocation8 + $0x228] sm:$0xf]
        %v1967 = vld [vmem:[#allocation8 + $0x22c] sm:$0xf]
        %v1968 = vld [vmem:[#allocation8 + $0x230] sm:$0xf]
        %v1969 = vld [vmem:[#allocation8 + $0x234] sm:$0xf]
        %v1970 = vld [vmem:[#allocation8 + $0x238] sm:$0xf]
        %v1971 = vld [vmem:[#allocation8 + $0x23c] sm:$0xf]
        %v2116 = vunpack.c.l.b16 %v1828
        %v2117 = vunpack.c.l.b16 %v1829
        %v2118 = vunpack.c.l.b16 %v1830
        %v2119 = vunpack.c.l.b16 %v1831
        %v2120 = vunpack.c.l.b16 %v1832
        %v2121 = vunpack.c.l.b16 %v1833
        %v2122 = vunpack.c.l.b16 %v1834
        %v2123 = vunpack.c.l.b16 %v1835
        %v2124 = vunpack.c.l.b16 %v1836
        %v2125 = vunpack.c.l.b16 %v1837
        %v2126 = vunpack.c.l.b16 %v1838
        %v2127 = vunpack.c.l.b16 %v1839
        %v2128 = vunpack.c.l.b16 %v1840
        %v2129 = vunpack.c.l.b16 %v1841
        %v2130 = vunpack.c.l.b16 %v1842
        %v2131 = vunpack.c.l.b16 %v1843
        %v2132 = vunpack.c.l.b16 %v1844
        %v2133 = vunpack.c.l.b16 %v1845
        %v2134 = vunpack.c.l.b16 %v1846
        %v2135 = vunpack.c.l.b16 %v1847
        %v2136 = vunpack.c.l.b16 %v1848
        %v2137 = vunpack.c.l.b16 %v1849
        %v2138 = vunpack.c.l.b16 %v1850
        %v2139 = vunpack.c.l.b16 %v1851
        %v2140 = vunpack.c.l.b16 %v1852
        %v2141 = vunpack.c.l.b16 %v1853
        %v2142 = vunpack.c.l.b16 %v1854
        %v2143 = vunpack.c.l.b16 %v1855
        %v2144 = vunpack.c.l.b16 %v1856
        %v2145 = vunpack.c.l.b16 %v1857
        %v2146 = vunpack.c.l.b16 %v1858
        %v2147 = vunpack.c.l.b16 %v1859
        %v2148 = vunpack.c.l.b16 %v1860
        %v2149 = vunpack.c.l.b16 %v1861
        %v2150 = vunpack.c.l.b16 %v1862
        %v2151 = vunpack.c.l.b16 %v1863
        %v2152 = vunpack.c.l.b16 %v1864
        %v2153 = vunpack.c.l.b16 %v1865
        %v2154 = vunpack.c.l.b16 %v1866
        %v2155 = vunpack.c.l.b16 %v1867
        %v2156 = vunpack.c.l.b16 %v1868
        %v2157 = vunpack.c.l.b16 %v1869
        %v2158 = vunpack.c.l.b16 %v1870
        %v2159 = vunpack.c.l.b16 %v1871
        %v2160 = vunpack.c.l.b16 %v1872
        %v2161 = vunpack.c.l.b16 %v1873
        %v2162 = vunpack.c.l.b16 %v1874
        %v2163 = vunpack.c.l.b16 %v1875
        %v2164 = vunpack.c.l.b16 %v1876
        %v2165 = vunpack.c.l.b16 %v1877
        %v2166 = vunpack.c.l.b16 %v1878
        %v2167 = vunpack.c.l.b16 %v1879
        %v2168 = vunpack.c.l.b16 %v1880
        %v2169 = vunpack.c.l.b16 %v1881
        %v2170 = vunpack.c.l.b16 %v1882
        %v2171 = vunpack.c.l.b16 %v1883
        %v2172 = vunpack.c.l.b16 %v1884
        %v2173 = vunpack.c.l.b16 %v1885
        %v2174 = vunpack.c.l.b16 %v1886
        %v2175 = vunpack.c.l.b16 %v1887
        %v2176 = vunpack.c.l.b16 %v1888
        %v2177 = vunpack.c.l.b16 %v1889
        %v2178 = vunpack.c.l.b16 %v1890
        %v2179 = vunpack.c.l.b16 %v1891
        %v2180 = vunpack.c.l.b16 %v1892
        %v2181 = vunpack.c.l.b16 %v1893
        %v2182 = vunpack.c.l.b16 %v1894
        %v2183 = vunpack.c.l.b16 %v1895
        %v2184 = vunpack.c.l.b16 %v1896
        %v2185 = vunpack.c.l.b16 %v1897
        %v2186 = vunpack.c.l.b16 %v1898
        %v2187 = vunpack.c.l.b16 %v1899
        %v2188 = vunpack.c.l.b16 %v1900
        %v2189 = vunpack.c.l.b16 %v1901
        %v2190 = vunpack.c.l.b16 %v1902
        %v2191 = vunpack.c.l.b16 %v1903
        %v2192 = vunpack.c.l.b16 %v1904
        %v2193 = vunpack.c.l.b16 %v1905
        %v2194 = vunpack.c.l.b16 %v1906
        %v2195 = vunpack.c.l.b16 %v1907
        %v2196 = vunpack.c.l.b16 %v1908
        %v2197 = vunpack.c.l.b16 %v1909
        %v2198 = vunpack.c.l.b16 %v1910
        %v2199 = vunpack.c.l.b16 %v1911
        %v2200 = vunpack.c.l.b16 %v1912
        %v2201 = vunpack.c.l.b16 %v1913
        %v2202 = vunpack.c.l.b16 %v1914
        %v2203 = vunpack.c.l.b16 %v1915
        %v2204 = vunpack.c.l.b16 %v1916
        %v2205 = vunpack.c.l.b16 %v1917
        %v2206 = vunpack.c.l.b16 %v1918
        %v2207 = vunpack.c.l.b16 %v1919
        %v2208 = vunpack.c.l.b16 %v1920
        %v2209 = vunpack.c.l.b16 %v1921
        %v2210 = vunpack.c.l.b16 %v1922
        %v2211 = vunpack.c.l.b16 %v1923
        %v2212 = vunpack.c.l.b16 %v1924
        %v2213 = vunpack.c.l.b16 %v1925
        %v2214 = vunpack.c.l.b16 %v1926
        %v2215 = vunpack.c.l.b16 %v1927
        %v2216 = vunpack.c.l.b16 %v1928
        %v2217 = vunpack.c.l.b16 %v1929
        %v2218 = vunpack.c.l.b16 %v1930
        %v2219 = vunpack.c.l.b16 %v1931
        %v2220 = vunpack.c.l.b16 %v1932
        %v2221 = vunpack.c.l.b16 %v1933
        %v2222 = vunpack.c.l.b16 %v1934
        %v2223 = vunpack.c.l.b16 %v1935
        %v2224 = vunpack.c.l.b16 %v1936
        %v2225 = vunpack.c.l.b16 %v1937
        %v2226 = vunpack.c.l.b16 %v1938
        %v2227 = vunpack.c.l.b16 %v1939
        %v2228 = vunpack.c.l.b16 %v1940
        %v2229 = vunpack.c.l.b16 %v1941
        %v2230 = vunpack.c.l.b16 %v1942
        %v2231 = vunpack.c.l.b16 %v1943
        %v2232 = vunpack.c.l.b16 %v1944
        %v2233 = vunpack.c.l.b16 %v1945
        %v2234 = vunpack.c.l.b16 %v1946
        %v2235 = vunpack.c.l.b16 %v1947
        %v2236 = vunpack.c.l.b16 %v1948
        %v2237 = vunpack.c.l.b16 %v1949
        %v2238 = vunpack.c.l.b16 %v1950
        %v2239 = vunpack.c.l.b16 %v1951
        %v2240 = vunpack.c.l.b16 %v1952
        %v2241 = vunpack.c.l.b16 %v1953
        %v2242 = vunpack.c.l.b16 %v1954
        %v2243 = vunpack.c.l.b16 %v1955
        %v2244 = vunpack.c.l.b16 %v1956
        %v2245 = vunpack.c.l.b16 %v1957
        %v2246 = vunpack.c.l.b16 %v1958
        %v2247 = vunpack.c.l.b16 %v1959
        %v2248 = vunpack.c.l.b16 %v1960
        %v2249 = vunpack.c.l.b16 %v1961
        %v2250 = vunpack.c.l.b16 %v1962
        %v2251 = vunpack.c.l.b16 %v1963
        %v2252 = vunpack.c.l.b16 %v1964
        %v2253 = vunpack.c.l.b16 %v1965
        %v2254 = vunpack.c.l.b16 %v1966
        %v2255 = vunpack.c.l.b16 %v1967
        %v2256 = vunpack.c.l.b16 %v1968
        %v2257 = vunpack.c.l.b16 %v1969
        %v2258 = vunpack.c.l.b16 %v1970
        %v2259 = vunpack.c.l.b16 %v1971
        %v2260 = vpack.c.b16 %v2117, %v2116
        %v2261 = vpack.c.b16 %v2119, %v2118
        %v2262 = vpack.c.b16 %v2121, %v2120
        %v2263 = vpack.c.b16 %v2123, %v2122
        %v2264 = vpack.c.b16 %v2125, %v2124
        %v2265 = vpack.c.b16 %v2127, %v2126
        %v2266 = vpack.c.b16 %v2129, %v2128
        %v2267 = vpack.c.b16 %v2131, %v2130
        %v2268 = vpack.c.b16 %v2133, %v2132
        %v2269 = vpack.c.b16 %v2135, %v2134
        %v2270 = vpack.c.b16 %v2137, %v2136
        %v2271 = vpack.c.b16 %v2139, %v2138
        %v2272 = vpack.c.b16 %v2141, %v2140
        %v2273 = vpack.c.b16 %v2143, %v2142
        %v2274 = vpack.c.b16 %v2145, %v2144
        %v2275 = vpack.c.b16 %v2147, %v2146
        %v2276 = vpack.c.b16 %v2149, %v2148
        %v2277 = vpack.c.b16 %v2151, %v2150
        %v2278 = vpack.c.b16 %v2153, %v2152
        %v2279 = vpack.c.b16 %v2155, %v2154
        %v2280 = vpack.c.b16 %v2157, %v2156
        %v2281 = vpack.c.b16 %v2159, %v2158
        %v2282 = vpack.c.b16 %v2161, %v2160
        %v2283 = vpack.c.b16 %v2163, %v2162
        %v2284 = vpack.c.b16 %v2165, %v2164
        %v2285 = vpack.c.b16 %v2167, %v2166
        %v2286 = vpack.c.b16 %v2169, %v2168
        %v2287 = vpack.c.b16 %v2171, %v2170
        %v2288 = vpack.c.b16 %v2173, %v2172
        %v2289 = vpack.c.b16 %v2175, %v2174
        %v2290 = vpack.c.b16 %v2177, %v2176
        %v2291 = vpack.c.b16 %v2179, %v2178
        %v2292 = vpack.c.b16 %v2181, %v2180
        %v2293 = vpack.c.b16 %v2183, %v2182
        %v2294 = vpack.c.b16 %v2185, %v2184
        %v2295 = vpack.c.b16 %v2187, %v2186
        %v2296 = vpack.c.b16 %v2189, %v2188
        %v2297 = vpack.c.b16 %v2191, %v2190
        %v2298 = vpack.c.b16 %v2193, %v2192
        %v2299 = vpack.c.b16 %v2195, %v2194
        %v2300 = vpack.c.b16 %v2197, %v2196
        %v2301 = vpack.c.b16 %v2199, %v2198
        %v2302 = vpack.c.b16 %v2201, %v2200
        %v2303 = vpack.c.b16 %v2203, %v2202
        %v2304 = vpack.c.b16 %v2205, %v2204
        %v2305 = vpack.c.b16 %v2207, %v2206
        %v2306 = vpack.c.b16 %v2209, %v2208
        %v2307 = vpack.c.b16 %v2211, %v2210
        %v2308 = vpack.c.b16 %v2213, %v2212
        %v2309 = vpack.c.b16 %v2215, %v2214
        %v2310 = vpack.c.b16 %v2217, %v2216
        %v2311 = vpack.c.b16 %v2219, %v2218
        %v2312 = vpack.c.b16 %v2221, %v2220
        %v2313 = vpack.c.b16 %v2223, %v2222
        %v2314 = vpack.c.b16 %v2225, %v2224
        %v2315 = vpack.c.b16 %v2227, %v2226
        %v2316 = vpack.c.b16 %v2229, %v2228
        %v2317 = vpack.c.b16 %v2231, %v2230
        %v2318 = vpack.c.b16 %v2233, %v2232
        %v2319 = vpack.c.b16 %v2235, %v2234
        %v2320 = vpack.c.b16 %v2237, %v2236
        %v2321 = vpack.c.b16 %v2239, %v2238
        %v2322 = vpack.c.b16 %v2241, %v2240
        %v2323 = vpack.c.b16 %v2243, %v2242
        %v2324 = vpack.c.b16 %v2245, %v2244
        %v2325 = vpack.c.b16 %v2247, %v2246
        %v2326 = vpack.c.b16 %v2249, %v2248
        %v2327 = vpack.c.b16 %v2251, %v2250
        %v2328 = vpack.c.b16 %v2253, %v2252
        %v2329 = vpack.c.b16 %v2255, %v2254
        %v2330 = vpack.c.b16 %v2257, %v2256
        %v2331 = vpack.c.b16 %v2259, %v2258
        %2404 = vmatprep.subr.bf16.mxu0 0
        %2405 = vmatpush1.bf16.msra.mxu0 %v2267
        %2406 = vmatprep.subr.bf16.mxu0 0
        %2407 = vmatpush1.bf16.msra.mxu0 %v2266
        %2408 = vmatprep.subr.bf16.mxu0 0
        %2409 = vmatpush1.bf16.msra.mxu0 %v2265
        %2410 = vmatprep.subr.bf16.mxu0 0
        %2411 = vmatpush1.bf16.msra.mxu0 %v2264
        %2412 = vmatprep.subr.bf16.mxu0 0
        %2413 = vmatpush1.bf16.msra.mxu0 %v2263
        %2414 = vmatprep.subr.bf16.mxu0 0
        %2415 = vmatpush1.bf16.msra.mxu0 %v2262
        %2416 = vmatprep.subr.bf16.mxu0 0
        %2417 = vmatpush1.bf16.msra.mxu0 %v2261
        %2418 = vmatprep.subr.bf16.mxu0 0
        %2419 = vmatpush1.bf16.msra.mxu0 %v2260
        %2420 = vmatprep.subr.bf16.mxu0 0
        %2421 = vmatpush2.bf16.msra.mxu0 %v2275
        %2422 = vmatprep.subr.bf16.mxu0 0
        %2423 = vmatpush2.bf16.msra.mxu0 %v2274
        %2424 = vmatprep.subr.bf16.mxu0 0
        %2425 = vmatpush2.bf16.msra.mxu0 %v2273
        %2426 = vmatprep.subr.bf16.mxu0 0
        %2427 = vmatpush2.bf16.msra.mxu0 %v2272
        %2428 = vmatprep.subr.bf16.mxu0 0
        %2429 = vmatpush2.bf16.msra.mxu0 %v2271
        %2430 = vmatprep.subr.bf16.mxu0 0
        %2431 = vmatpush2.bf16.msra.mxu0 %v2270
        %2432 = vmatprep.subr.bf16.mxu0 0
        %2433 = vmatpush2.bf16.msra.mxu0 %v2269
        %2434 = vmatprep.subr.bf16.mxu0 0
        %2435 = vmatpush2.bf16.msra.mxu0 %v2268
        %2436 = vmatprep.mubr.bf16.mxu0 %v1666
        %2437 = vmatmul.mubr.bf16.gmra.mxu0 %v1665
        %v2438 = vpop.f32.mrf.mxu0
        %v2439 = vadd.f32 0.0, %v2438
        %v2440 = vpop.f32.mrf.mxu0
        %v2441 = vpop.f32.mrf.mxu0
        %v2442 = vadd.f32 0.0, %v2441
        %v2443 = vpop.f32.mrf.mxu0
        %2444 = vmatprep.mubr.bf16.mxu0 %v1667
        %2445 = vmatmul.mubr.bf16.gmra.mxu0 %v1666
        %v2446 = vpop.f32.mrf.mxu0
        %v2447 = vadd.f32 0.0, %v2446
        %v2448 = vpop.f32.mrf.mxu0
        %v2449 = vpop.f32.mrf.mxu0
        %v2450 = vadd.f32 0.0, %v2449
        %v2451 = vpop.f32.mrf.mxu0
        %2452 = vmatprep.mubr.bf16.mxu0 %v1668
        %2453 = vmatmul.mubr.bf16.gmra.mxu0 %v1667
        %v2454 = vpop.f32.mrf.mxu0
        %v2455 = vadd.f32 0.0, %v2454
        %v2456 = vpop.f32.mrf.mxu0
        %v2457 = vpop.f32.mrf.mxu0
        %v2458 = vadd.f32 0.0, %v2457
        %v2459 = vpop.f32.mrf.mxu0
        %2460 = vmatprep.mubr.bf16.mxu0 %v1669
        %2461 = vmatmul.mubr.bf16.gmra.mxu0 %v1668
        %v2462 = vpop.f32.mrf.mxu0
        %v2463 = vadd.f32 0.0, %v2462
        %v2464 = vpop.f32.mrf.mxu0
        %v2465 = vpop.f32.mrf.mxu0
        %v2466 = vadd.f32 0.0, %v2465
        %v2467 = vpop.f32.mrf.mxu0
        %2468 = vmatprep.mubr.bf16.mxu0 %v1670
        %2469 = vmatmul.mubr.bf16.gmra.mxu0 %v1669
        %v2470 = vpop.f32.mrf.mxu0
        %v2471 = vadd.f32 0.0, %v2470
        %v2472 = vpop.f32.mrf.mxu0
        %v2473 = vpop.f32.mrf.mxu0
        %v2474 = vadd.f32 0.0, %v2473
        %v2475 = vpop.f32.mrf.mxu0
        %2476 = vmatprep.mubr.bf16.mxu0 %v1671
        %2477 = vmatmul.mubr.bf16.gmra.mxu0 %v1670
        %v2478 = vpop.f32.mrf.mxu0
        %v2479 = vadd.f32 0.0, %v2478
        %v2480 = vpop.f32.mrf.mxu0
        %v2481 = vpop.f32.mrf.mxu0
        %v2482 = vadd.f32 0.0, %v2481
        %v2483 = vpop.f32.mrf.mxu0
        %2484 = vmatprep.mubr.bf16.mxu0 %v1672
        %2485 = vmatmul.mubr.bf16.gmra.mxu0 %v1671
        %v2486 = vpop.f32.mrf.mxu0
        %v2487 = vadd.f32 0.0, %v2486
        %v2488 = vpop.f32.mrf.mxu0
        %v2489 = vpop.f32.mrf.mxu0
        %v2490 = vadd.f32 0.0, %v2489
        %v2491 = vpop.f32.mrf.mxu0
        %2492 = vmatprep.mubr.bf16.mxu0 %v1673
        %2493 = vmatmul.mubr.bf16.gmra.mxu0 %v1672
        %v2494 = vpop.f32.mrf.mxu0
        %v2495 = vadd.f32 0.0, %v2494
        %v2496 = vpop.f32.mrf.mxu0
        %v2497 = vpop.f32.mrf.mxu0
        %v2498 = vadd.f32 0.0, %v2497
        %v2499 = vpop.f32.mrf.mxu0
        %2500 = vmatprep.mubr.bf16.mxu0 %v1674
        %2501 = vmatmul.mubr.bf16.gmra.mxu0 %v1673
        %v2502 = vpop.f32.mrf.mxu0
        %v2503 = vadd.f32 0.0, %v2502
        %v2504 = vpop.f32.mrf.mxu0
        %v2505 = vpop.f32.mrf.mxu0
        %v2506 = vadd.f32 0.0, %v2505
        %v2507 = vpop.f32.mrf.mxu0
        %2508 = vmatprep.mubr.bf16.mxu0 %v1675
        %2509 = vmatmul.mubr.bf16.gmra.mxu0 %v1674
        %v2510 = vpop.f32.mrf.mxu0
        %v2511 = vadd.f32 0.0, %v2510
        %v2512 = vpop.f32.mrf.mxu0
        %v2513 = vpop.f32.mrf.mxu0
        %v2514 = vadd.f32 0.0, %v2513
        %v2515 = vpop.f32.mrf.mxu0
        %2516 = vmatprep.mubr.bf16.mxu0 %v1676
        %2517 = vmatmul.mubr.bf16.gmra.mxu0 %v1675
        %v2518 = vpop.f32.mrf.mxu0
        %v2519 = vadd.f32 0.0, %v2518
        %v2520 = vpop.f32.mrf.mxu0
        %v2521 = vpop.f32.mrf.mxu0
        %v2522 = vadd.f32 0.0, %v2521
        %v2523 = vpop.f32.mrf.mxu0
        %2524 = vmatprep.mubr.bf16.mxu0 %v1677
        %2525 = vmatmul.mubr.bf16.gmra.mxu0 %v1676
        %v2526 = vpop.f32.mrf.mxu0
        %v2527 = vadd.f32 0.0, %v2526
        %v2528 = vpop.f32.mrf.mxu0
        %v2529 = vpop.f32.mrf.mxu0
        %v2530 = vadd.f32 0.0, %v2529
        %v2531 = vpop.f32.mrf.mxu0
        %2532 = vmatprep.mubr.bf16.mxu0 %v1678
        %2533 = vmatmul.mubr.bf16.gmra.mxu0 %v1677
        %v2534 = vpop.f32.mrf.mxu0
        %v2535 = vadd.f32 0.0, %v2534
        %v2536 = vpop.f32.mrf.mxu0
        %v2537 = vpop.f32.mrf.mxu0
        %v2538 = vadd.f32 0.0, %v2537
        %v2539 = vpop.f32.mrf.mxu0
        %2540 = vmatprep.mubr.bf16.mxu0 %v1679
        %2541 = vmatmul.mubr.bf16.gmra.mxu0 %v1678
        %v2542 = vpop.f32.mrf.mxu0
        %v2543 = vadd.f32 0.0, %v2542
        %v2544 = vpop.f32.mrf.mxu0
        %v2545 = vpop.f32.mrf.mxu0
        %v2546 = vadd.f32 0.0, %v2545
        %v2547 = vpop.f32.mrf.mxu0
        %2548 = vmatprep.mubr.bf16.mxu0 %v1680
        %2549 = vmatmul.mubr.bf16.gmra.mxu0 %v1679
        %v2550 = vpop.f32.mrf.mxu0
        %v2551 = vadd.f32 0.0, %v2550
        %v2552 = vpop.f32.mrf.mxu0
        %v2553 = vpop.f32.mrf.mxu0
        %v2554 = vadd.f32 0.0, %v2553
        %v2555 = vpop.f32.mrf.mxu0
        %2556 = vmatprep.mubr.bf16.mxu0 %v1681
        %2557 = vmatmul.mubr.bf16.gmra.mxu0 %v1680
        %v2558 = vpop.f32.mrf.mxu0
        %v2559 = vadd.f32 0.0, %v2558
        %v2560 = vpop.f32.mrf.mxu0
        %v2561 = vpop.f32.mrf.mxu0
        %v2562 = vadd.f32 0.0, %v2561
        %v2563 = vpop.f32.mrf.mxu0
        %2564 = vdwg.mxu0
        %2565 = vmatprep.subr.bf16.mxu0 0
        %2566 = vmatpush1.bf16.msra.mxu0 %v2283
        %2567 = vmatprep.subr.bf16.mxu0 0
        %2568 = vmatpush1.bf16.msra.mxu0 %v2282
        %2569 = vmatprep.subr.bf16.mxu0 0
        %2570 = vmatpush1.bf16.msra.mxu0 %v2281
        %2571 = vmatprep.subr.bf16.mxu0 0
        %2572 = vmatpush1.bf16.msra.mxu0 %v2280
        %2573 = vmatprep.subr.bf16.mxu0 0
        %2574 = vmatpush1.bf16.msra.mxu0 %v2279
        %2575 = vmatprep.subr.bf16.mxu0 0
        %2576 = vmatpush1.bf16.msra.mxu0 %v2278
        %2577 = vmatprep.subr.bf16.mxu0 0
        %2578 = vmatpush1.bf16.msra.mxu0 %v2277
        %2579 = vmatprep.subr.bf16.mxu0 0
        %2580 = vmatpush1.bf16.msra.mxu0 %v2276
        %2581 = vmatprep.subr.bf16.mxu0 0
        %2582 = vmatpush2.bf16.msra.mxu0 %v2291
        %2583 = vmatprep.subr.bf16.mxu0 0
        %2584 = vmatpush2.bf16.msra.mxu0 %v2290
        %2585 = vmatprep.subr.bf16.mxu0 0
        %2586 = vmatpush2.bf16.msra.mxu0 %v2289
        %2587 = vmatprep.subr.bf16.mxu0 0
        %2588 = vmatpush2.bf16.msra.mxu0 %v2288
        %2589 = vmatprep.subr.bf16.mxu0 0
        %2590 = vmatpush2.bf16.msra.mxu0 %v2287
        %2591 = vmatprep.subr.bf16.mxu0 0
        %2592 = vmatpush2.bf16.msra.mxu0 %v2286
        %2593 = vmatprep.subr.bf16.mxu0 0
        %2594 = vmatpush2.bf16.msra.mxu0 %v2285
        %2595 = vmatprep.subr.bf16.mxu0 0
        %2596 = vmatpush2.bf16.msra.mxu0 %v2284
        %2597 = vmatprep.mubr.bf16.mxu0 %v1683
        %2598 = vmatmul.mubr.bf16.gmra.mxu0 %v1667
        %v2599 = vpop.f32.mrf.mxu0
        %v2600 = vadd.f32 %v2439, %v2599
        %v2601 = vpop.f32.mrf.mxu0
        %v2602 = vpop.f32.mrf.mxu0
        %v2603 = vadd.f32 %v2442, %v2602
        %v2604 = vpop.f32.mrf.mxu0
        %2605 = vmatprep.mubr.bf16.mxu0 %v1684
        %2606 = vmatmul.mubr.bf16.gmra.mxu0 %v1668
        %v2607 = vpop.f32.mrf.mxu0
        %v2608 = vadd.f32 %v2447, %v2607
        %v2609 = vpop.f32.mrf.mxu0
        %v2610 = vpop.f32.mrf.mxu0
        %v2611 = vadd.f32 %v2450, %v2610
        %v2612 = vpop.f32.mrf.mxu0
        %2613 = vmatprep.mubr.bf16.mxu0 %v1685
        %2614 = vmatmul.mubr.bf16.gmra.mxu0 %v1669
        %v2615 = vpop.f32.mrf.mxu0
        %v2616 = vadd.f32 %v2455, %v2615
        %v2617 = vpop.f32.mrf.mxu0
        %v2618 = vpop.f32.mrf.mxu0
        %v2619 = vadd.f32 %v2458, %v2618
        %v2620 = vpop.f32.mrf.mxu0
        %2621 = vmatprep.mubr.bf16.mxu0 %v1686
        %2622 = vmatmul.mubr.bf16.gmra.mxu0 %v1670
        %v2623 = vpop.f32.mrf.mxu0
        %v2624 = vadd.f32 %v2463, %v2623
        %v2625 = vpop.f32.mrf.mxu0
        %v2626 = vpop.f32.mrf.mxu0
        %v2627 = vadd.f32 %v2466, %v2626
        %v2628 = vpop.f32.mrf.mxu0
        %2629 = vmatprep.mubr.bf16.mxu0 %v1687
        %2630 = vmatmul.mubr.bf16.gmra.mxu0 %v1671
        %v2631 = vpop.f32.mrf.mxu0
        %v2632 = vadd.f32 %v2471, %v2631
        %v2633 = vpop.f32.mrf.mxu0
        %v2634 = vpop.f32.mrf.mxu0
        %v2635 = vadd.f32 %v2474, %v2634
        %v2636 = vpop.f32.mrf.mxu0
        %2637 = vmatprep.mubr.bf16.mxu0 %v1688
        %2638 = vmatmul.mubr.bf16.gmra.mxu0 %v1672
        %v2639 = vpop.f32.mrf.mxu0
        %v2640 = vadd.f32 %v2479, %v2639
        %v2641 = vpop.f32.mrf.mxu0
        %v2642 = vpop.f32.mrf.mxu0
        %v2643 = vadd.f32 %v2482, %v2642
        %v2644 = vpop.f32.mrf.mxu0
        %2645 = vmatprep.mubr.bf16.mxu0 %v1689
        %2646 = vmatmul.mubr.bf16.gmra.mxu0 %v1673
        %v2647 = vpop.f32.mrf.mxu0
        %v2648 = vadd.f32 %v2487, %v2647
        %v2649 = vpop.f32.mrf.mxu0
        %v2650 = vpop.f32.mrf.mxu0
        %v2651 = vadd.f32 %v2490, %v2650
        %v2652 = vpop.f32.mrf.mxu0
        %2653 = vmatprep.mubr.bf16.mxu0 %v1690
        %2654 = vmatmul.mubr.bf16.gmra.mxu0 %v1674
        %v2655 = vpop.f32.mrf.mxu0
        %v2656 = vadd.f32 %v2495, %v2655
        %v2657 = vpop.f32.mrf.mxu0
        %v2658 = vpop.f32.mrf.mxu0
        %v2659 = vadd.f32 %v2498, %v2658
        %v2660 = vpop.f32.mrf.mxu0
        %2661 = vmatprep.mubr.bf16.mxu0 %v1691
        %2662 = vmatmul.mubr.bf16.gmra.mxu0 %v1675
        %v2663 = vpop.f32.mrf.mxu0
        %v2664 = vadd.f32 %v2503, %v2663
        %v2665 = vpop.f32.mrf.mxu0
        %v2666 = vpop.f32.mrf.mxu0
        %v2667 = vadd.f32 %v2506, %v2666
        %v2668 = vpop.f32.mrf.mxu0
        %2669 = vmatprep.mubr.bf16.mxu0 %v1692
        %2670 = vmatmul.mubr.bf16.gmra.mxu0 %v1676
        %v2671 = vpop.f32.mrf.mxu0
        %v2672 = vadd.f32 %v2511, %v2671
        %v2673 = vpop.f32.mrf.mxu0
        %v2674 = vpop.f32.mrf.mxu0
        %v2675 = vadd.f32 %v2514, %v2674
        %v2676 = vpop.f32.mrf.mxu0
        %2677 = vmatprep.mubr.bf16.mxu0 %v1693
        %2678 = vmatmul.mubr.bf16.gmra.mxu0 %v1677
        %v2679 = vpop.f32.mrf.mxu0
        %v2680 = vadd.f32 %v2519, %v2679
        %v2681 = vpop.f32.mrf.mxu0
        %v2682 = vpop.f32.mrf.mxu0
        %v2683 = vadd.f32 %v2522, %v2682
        %v2684 = vpop.f32.mrf.mxu0
        %2685 = vmatprep.mubr.bf16.mxu0 %v1694
        %2686 = vmatmul.mubr.bf16.gmra.mxu0 %v1678
        %v2687 = vpop.f32.mrf.mxu0
        %v2688 = vadd.f32 %v2527, %v2687
        %v2689 = vpop.f32.mrf.mxu0
        %v2690 = vpop.f32.mrf.mxu0
        %v2691 = vadd.f32 %v2530, %v2690
        %v2692 = vpop.f32.mrf.mxu0
        %2693 = vmatprep.mubr.bf16.mxu0 %v1695
        %2694 = vmatmul.mubr.bf16.gmra.mxu0 %v1679
        %v2695 = vpop.f32.mrf.mxu0
        %v2696 = vadd.f32 %v2535, %v2695
        %v2697 = vpop.f32.mrf.mxu0
        %v2698 = vpop.f32.mrf.mxu0
        %v2699 = vadd.f32 %v2538, %v2698
        %v2700 = vpop.f32.mrf.mxu0
        %2701 = vmatprep.mubr.bf16.mxu0 %v1696
        %2702 = vmatmul.mubr.bf16.gmra.mxu0 %v1680
        %v2703 = vpop.f32.mrf.mxu0
        %v2704 = vadd.f32 %v2543, %v2703
        %v2705 = vpop.f32.mrf.mxu0
        %v2706 = vpop.f32.mrf.mxu0
        %v2707 = vadd.f32 %v2546, %v2706
        %v2708 = vpop.f32.mrf.mxu0
        %2709 = vmatprep.mubr.bf16.mxu0 %v1697
        %2710 = vmatmul.mubr.bf16.gmra.mxu0 %v1681
        %v2711 = vpop.f32.mrf.mxu0
        %v2712 = vadd.f32 %v2551, %v2711
        %v2713 = vpop.f32.mrf.mxu0
        %v2714 = vpop.f32.mrf.mxu0
        %v2715 = vadd.f32 %v2554, %v2714
        %v2716 = vpop.f32.mrf.mxu0
        %2717 = vmatprep.mubr.bf16.mxu0 %v1698
        %2718 = vmatmul.mubr.bf16.gmra.mxu0 %v1682
        %v2719 = vpop.f32.mrf.mxu0
        %v2720 = vadd.f32 %v2559, %v2719
        %v2721 = vpop.f32.mrf.mxu0
        %v2722 = vpop.f32.mrf.mxu0
        %v2723 = vadd.f32 %v2562, %v2722
        %v2724 = vpop.f32.mrf.mxu0
        %2725 = vdwg.mxu0
        %2726 = vmatprep.subr.bf16.mxu0 0
        %2727 = vmatpush1.bf16.msra.mxu0 %v2299
        %2728 = vmatprep.subr.bf16.mxu0 0
        %2729 = vmatpush1.bf16.msra.mxu0 %v2298
        %2730 = vmatprep.subr.bf16.mxu0 0
        %2731 = vmatpush1.bf16.msra.mxu0 %v2297
        %2732 = vmatprep.subr.bf16.mxu0 0
        %2733 = vmatpush1.bf16.msra.mxu0 %v2296
        %2734 = vmatprep.subr.bf16.mxu0 0
        %2735 = vmatpush1.bf16.msra.mxu0 %v2295
        %2736 = vmatprep.subr.bf16.mxu0 0
        %2737 = vmatpush1.bf16.msra.mxu0 %v2294
        %2738 = vmatprep.subr.bf16.mxu0 0
        %2739 = vmatpush1.bf16.msra.mxu0 %v2293
        %2740 = vmatprep.subr.bf16.mxu0 0
        %2741 = vmatpush1.bf16.msra.mxu0 %v2292
        %2742 = vmatprep.subr.bf16.mxu0 0
        %2743 = vmatpush2.bf16.msra.mxu0 %v2307
        %2744 = vmatprep.subr.bf16.mxu0 0
        %2745 = vmatpush2.bf16.msra.mxu0 %v2306
        %2746 = vmatprep.subr.bf16.mxu0 0
        %2747 = vmatpush2.bf16.msra.mxu0 %v2305
        %2748 = vmatprep.subr.bf16.mxu0 0
        %2749 = vmatpush2.bf16.msra.mxu0 %v2304
        %2750 = vmatprep.subr.bf16.mxu0 0
        %2751 = vmatpush2.bf16.msra.mxu0 %v2303
        %2752 = vmatprep.subr.bf16.mxu0 0
        %2753 = vmatpush2.bf16.msra.mxu0 %v2302
        %2754 = vmatprep.subr.bf16.mxu0 0
        %2755 = vmatpush2.bf16.msra.mxu0 %v2301
        %2756 = vmatprep.subr.bf16.mxu0 0
        %2757 = vmatpush2.bf16.msra.mxu0 %v2300
        %2758 = vmatprep.mubr.bf16.mxu0 %v1685
        %2759 = vmatmul.mubr.bf16.gmra.mxu0 %v1684
        %v2760 = vpop.f32.mrf.mxu0
        %v2761 = vadd.f32 %v2600, %v2760
        %v2762 = vpop.f32.mrf.mxu0
        %v2763 = vpop.f32.mrf.mxu0
        %v2764 = vadd.f32 %v2603, %v2763
        %v2765 = vpop.f32.mrf.mxu0
        %2766 = vmatprep.mubr.bf16.mxu0 %v1686
        %2767 = vmatmul.mubr.bf16.gmra.mxu0 %v1685
        %v2768 = vpop.f32.mrf.mxu0
        %v2769 = vadd.f32 %v2608, %v2768
        %v2770 = vpop.f32.mrf.mxu0
        %v2771 = vpop.f32.mrf.mxu0
        %v2772 = vadd.f32 %v2611, %v2771
        %v2773 = vpop.f32.mrf.mxu0
        %2774 = vmatprep.mubr.bf16.mxu0 %v1687
        %2775 = vmatmul.mubr.bf16.gmra.mxu0 %v1686
        %v2776 = vpop.f32.mrf.mxu0
        %v2777 = vadd.f32 %v2616, %v2776
        %v2778 = vpop.f32.mrf.mxu0
        %v2779 = vpop.f32.mrf.mxu0
        %v2780 = vadd.f32 %v2619, %v2779
        %v2781 = vpop.f32.mrf.mxu0
        %2782 = vmatprep.mubr.bf16.mxu0 %v1688
        %2783 = vmatmul.mubr.bf16.gmra.mxu0 %v1687
        %v2784 = vpop.f32.mrf.mxu0
        %v2785 = vadd.f32 %v2624, %v2784
        %v2786 = vpop.f32.mrf.mxu0
        %v2787 = vpop.f32.mrf.mxu0
        %v2788 = vadd.f32 %v2627, %v2787
        %v2789 = vpop.f32.mrf.mxu0
        %2790 = vmatprep.mubr.bf16.mxu0 %v1689
        %2791 = vmatmul.mubr.bf16.gmra.mxu0 %v1688
        %v2792 = vpop.f32.mrf.mxu0
        %v2793 = vadd.f32 %v2632, %v2792
        %v2794 = vpop.f32.mrf.mxu0
        %v2795 = vpop.f32.mrf.mxu0
        %v2796 = vadd.f32 %v2635, %v2795
        %v2797 = vpop.f32.mrf.mxu0
        %2798 = vmatprep.mubr.bf16.mxu0 %v1690
        %2799 = vmatmul.mubr.bf16.gmra.mxu0 %v1689
        %v2800 = vpop.f32.mrf.mxu0
        %v2801 = vadd.f32 %v2640, %v2800
        %v2802 = vpop.f32.mrf.mxu0
        %v2803 = vpop.f32.mrf.mxu0
        %v2804 = vadd.f32 %v2643, %v2803
        %v2805 = vpop.f32.mrf.mxu0
        %2806 = vmatprep.mubr.bf16.mxu0 %v1691
        %2807 = vmatmul.mubr.bf16.gmra.mxu0 %v1690
        %v2808 = vpop.f32.mrf.mxu0
        %v2809 = vadd.f32 %v2648, %v2808
        %v2810 = vpop.f32.mrf.mxu0
        %v2811 = vpop.f32.mrf.mxu0
        %v2812 = vadd.f32 %v2651, %v2811
        %v2813 = vpop.f32.mrf.mxu0
        %2814 = vmatprep.mubr.bf16.mxu0 %v1692
        %2815 = vmatmul.mubr.bf16.gmra.mxu0 %v1691
        %v2816 = vpop.f32.mrf.mxu0
        %v2817 = vadd.f32 %v2656, %v2816
        %v2818 = vpop.f32.mrf.mxu0
        %v2819 = vpop.f32.mrf.mxu0
        %v2820 = vadd.f32 %v2659, %v2819
        %v2821 = vpop.f32.mrf.mxu0
        %2822 = vmatprep.mubr.bf16.mxu0 %v1693
        %2823 = vmatmul.mubr.bf16.gmra.mxu0 %v1692
        %v2824 = vpop.f32.mrf.mxu0
        %v2825 = vadd.f32 %v2664, %v2824
        %v2826 = vpop.f32.mrf.mxu0
        %v2827 = vpop.f32.mrf.mxu0
        %v2828 = vadd.f32 %v2667, %v2827
        %v2829 = vpop.f32.mrf.mxu0
        %2830 = vmatprep.mubr.bf16.mxu0 %v1694
        %2831 = vmatmul.mubr.bf16.gmra.mxu0 %v1693
        %v2832 = vpop.f32.mrf.mxu0
        %v2833 = vadd.f32 %v2672, %v2832
        %v2834 = vpop.f32.mrf.mxu0
        %v2835 = vpop.f32.mrf.mxu0
        %v2836 = vadd.f32 %v2675, %v2835
        %v2837 = vpop.f32.mrf.mxu0
        %2838 = vmatprep.mubr.bf16.mxu0 %v1695
        %2839 = vmatmul.mubr.bf16.gmra.mxu0 %v1694
        %v2840 = vpop.f32.mrf.mxu0
        %v2841 = vadd.f32 %v2680, %v2840
        %v2842 = vpop.f32.mrf.mxu0
        %v2843 = vpop.f32.mrf.mxu0
        %v2844 = vadd.f32 %v2683, %v2843
        %v2845 = vpop.f32.mrf.mxu0
        %2846 = vmatprep.mubr.bf16.mxu0 %v1696
        %2847 = vmatmul.mubr.bf16.gmra.mxu0 %v1695
        %v2848 = vpop.f32.mrf.mxu0
        %v2849 = vadd.f32 %v2688, %v2848
        %v2850 = vpop.f32.mrf.mxu0
        %v2851 = vpop.f32.mrf.mxu0
        %v2852 = vadd.f32 %v2691, %v2851
        %v2853 = vpop.f32.mrf.mxu0
        %2854 = vmatprep.mubr.bf16.mxu0 %v1697
        %2855 = vmatmul.mubr.bf16.gmra.mxu0 %v1696
        %v2856 = vpop.f32.mrf.mxu0
        %v2857 = vadd.f32 %v2696, %v2856
        %v2858 = vpop.f32.mrf.mxu0
        %v2859 = vpop.f32.mrf.mxu0
        %v2860 = vadd.f32 %v2699, %v2859
        %v2861 = vpop.f32.mrf.mxu0
        %2862 = vmatprep.mubr.bf16.mxu0 %v1698
        %2863 = vmatmul.mubr.bf16.gmra.mxu0 %v1697
        %v2864 = vpop.f32.mrf.mxu0
        %v2865 = vadd.f32 %v2704, %v2864
        %v2866 = vpop.f32.mrf.mxu0
        %v2867 = vpop.f32.mrf.mxu0
        %v2868 = vadd.f32 %v2707, %v2867
        %v2869 = vpop.f32.mrf.mxu0
        %2870 = vmatprep.mubr.bf16.mxu0 %v1699
        %2871 = vmatmul.mubr.bf16.gmra.mxu0 %v1698
        %v2872 = vpop.f32.mrf.mxu0
        %v2873 = vadd.f32 %v2712, %v2872
        %v2874 = vpop.f32.mrf.mxu0
        %v2875 = vpop.f32.mrf.mxu0
        %v2876 = vadd.f32 %v2715, %v2875
        %v2877 = vpop.f32.mrf.mxu0
        %2878 = vmatprep.mubr.bf16.mxu0 %v1700
        %2879 = vmatmul.mubr.bf16.gmra.mxu0 %v1699
        %v2880 = vpop.f32.mrf.mxu0
        %v2881 = vadd.f32 %v2720, %v2880
        %v2882 = vpop.f32.mrf.mxu0
        %v2883 = vpop.f32.mrf.mxu0
        %v2884 = vadd.f32 %v2723, %v2883
        %v2885 = vpop.f32.mrf.mxu0
        %2886 = vdwg.mxu0
        %2887 = vmatprep.subr.bf16.mxu0 0
        %2888 = vmatpush1.bf16.msra.mxu0 %v2315
        %2889 = vmatprep.subr.bf16.mxu0 0
        %2890 = vmatpush1.bf16.msra.mxu0 %v2314
        %2891 = vmatprep.subr.bf16.mxu0 0
        %2892 = vmatpush1.bf16.msra.mxu0 %v2313
        %2893 = vmatprep.subr.bf16.mxu0 0
        %2894 = vmatpush1.bf16.msra.mxu0 %v2312
        %2895 = vmatprep.subr.bf16.mxu0 0
        %2896 = vmatpush1.bf16.msra.mxu0 %v2311
        %2897 = vmatprep.subr.bf16.mxu0 0
        %2898 = vmatpush1.bf16.msra.mxu0 %v2310
        %2899 = vmatprep.subr.bf16.mxu0 0
        %2900 = vmatpush1.bf16.msra.mxu0 %v2309
        %2901 = vmatprep.subr.bf16.mxu0 0
        %2902 = vmatpush1.bf16.msra.mxu0 %v2308
        %2903 = vmatprep.subr.bf16.mxu0 0
        %2904 = vmatpush2.bf16.msra.mxu0 %v2323
        %2905 = vmatprep.subr.bf16.mxu0 0
        %2906 = vmatpush2.bf16.msra.mxu0 %v2322
        %2907 = vmatprep.subr.bf16.mxu0 0
        %2908 = vmatpush2.bf16.msra.mxu0 %v2321
        %2909 = vmatprep.subr.bf16.mxu0 0
        %2910 = vmatpush2.bf16.msra.mxu0 %v2320
        %2911 = vmatprep.subr.bf16.mxu0 0
        %2912 = vmatpush2.bf16.msra.mxu0 %v2319
        %2913 = vmatprep.subr.bf16.mxu0 0
        %2914 = vmatpush2.bf16.msra.mxu0 %v2318
        %2915 = vmatprep.subr.bf16.mxu0 0
        %2916 = vmatpush2.bf16.msra.mxu0 %v2317
        %2917 = vmatprep.subr.bf16.mxu0 0
        %2918 = vmatpush2.bf16.msra.mxu0 %v2316
        %2919 = vmatprep.mubr.bf16.mxu0 %v1811
        %2920 = vmatmul.mubr.bf16.gmra.mxu0 %v1810
        %v2921 = vpop.f32.mrf.mxu0
        %v2922 = vadd.f32 %v2761, %v2921
        %v2923 = vpop.f32.mrf.mxu0
        %v2924 = vpop.f32.mrf.mxu0
        %v2925 = vadd.f32 %v2764, %v2924
        %v2926 = vpop.f32.mrf.mxu0
        %2927 = vmatprep.mubr.bf16.mxu0 %v1812
        %2928 = vmatmul.mubr.bf16.gmra.mxu0 %v1811
        %v2929 = vpop.f32.mrf.mxu0
        %v2930 = vadd.f32 %v2769, %v2929
        %v2931 = vpop.f32.mrf.mxu0
        %v2932 = vpop.f32.mrf.mxu0
        %v2933 = vadd.f32 %v2772, %v2932
        %v2934 = vpop.f32.mrf.mxu0
        %2935 = vmatprep.mubr.bf16.mxu0 %v1813
        %2936 = vmatmul.mubr.bf16.gmra.mxu0 %v1812
        %v2937 = vpop.f32.mrf.mxu0
        %v2938 = vadd.f32 %v2777, %v2937
        %v2939 = vpop.f32.mrf.mxu0
        %v2940 = vpop.f32.mrf.mxu0
        %v2941 = vadd.f32 %v2780, %v2940
        %v2942 = vpop.f32.mrf.mxu0
        %2943 = vmatprep.mubr.bf16.mxu0 %v1814
        %2944 = vmatmul.mubr.bf16.gmra.mxu0 %v1813
        %v2945 = vpop.f32.mrf.mxu0
        %v2946 = vadd.f32 %v2785, %v2945
        %v2947 = vpop.f32.mrf.mxu0
        %v2948 = vpop.f32.mrf.mxu0
        %v2949 = vadd.f32 %v2788, %v2948
        %v2950 = vpop.f32.mrf.mxu0
        %2951 = vmatprep.mubr.bf16.mxu0 %v1815
        %2952 = vmatmul.mubr.bf16.gmra.mxu0 %v1814
        %v2953 = vpop.f32.mrf.mxu0
        %v2954 = vadd.f32 %v2793, %v2953
        %v2955 = vpop.f32.mrf.mxu0
        %v2956 = vpop.f32.mrf.mxu0
        %v2957 = vadd.f32 %v2796, %v2956
        %v2958 = vpop.f32.mrf.mxu0
        %2959 = vmatprep.mubr.bf16.mxu0 %v1816
        %2960 = vmatmul.mubr.bf16.gmra.mxu0 %v1815
        %v2961 = vpop.f32.mrf.mxu0
        %v2962 = vadd.f32 %v2801, %v2961
        %v2963 = vpop.f32.mrf.mxu0
        %v2964 = vpop.f32.mrf.mxu0
        %v2965 = vadd.f32 %v2804, %v2964
        %v2966 = vpop.f32.mrf.mxu0
        %2967 = vmatprep.mubr.bf16.mxu0 %v1817
        %2968 = vmatmul.mubr.bf16.gmra.mxu0 %v1816
        %v2969 = vpop.f32.mrf.mxu0
        %v2970 = vadd.f32 %v2809, %v2969
        %v2971 = vpop.f32.mrf.mxu0
        %v2972 = vpop.f32.mrf.mxu0
        %v2973 = vadd.f32 %v2812, %v2972
        %v2974 = vpop.f32.mrf.mxu0
        %2975 = vmatprep.mubr.bf16.mxu0 %v1818
        %2976 = vmatmul.mubr.bf16.gmra.mxu0 %v1817
        %v2977 = vpop.f32.mrf.mxu0
        %v2978 = vadd.f32 %v2817, %v2977
        %v2979 = vpop.f32.mrf.mxu0
        %v2980 = vpop.f32.mrf.mxu0
        %v2981 = vadd.f32 %v2820, %v2980
        %v2982 = vpop.f32.mrf.mxu0
        %2983 = vmatprep.mubr.bf16.mxu0 %v1819
        %2984 = vmatmul.mubr.bf16.gmra.mxu0 %v1818
        %v2985 = vpop.f32.mrf.mxu0
        %v2986 = vadd.f32 %v2825, %v2985
        %v2987 = vpop.f32.mrf.mxu0
        %v2988 = vpop.f32.mrf.mxu0
        %v2989 = vadd.f32 %v2828, %v2988
        %v2990 = vpop.f32.mrf.mxu0
        %2991 = vmatprep.mubr.bf16.mxu0 %v1820
        %2992 = vmatmul.mubr.bf16.gmra.mxu0 %v1819
        %v2993 = vpop.f32.mrf.mxu0
        %v2994 = vadd.f32 %v2833, %v2993
        %v2995 = vpop.f32.mrf.mxu0
        %v2996 = vpop.f32.mrf.mxu0
        %v2997 = vadd.f32 %v2836, %v2996
        %v2998 = vpop.f32.mrf.mxu0
        %2999 = vmatprep.mubr.bf16.mxu0 %v1821
        %3000 = vmatmul.mubr.bf16.gmra.mxu0 %v1820
        %v3001 = vpop.f32.mrf.mxu0
        %v3002 = vadd.f32 %v2841, %v3001
        %v3003 = vpop.f32.mrf.mxu0
        %v3004 = vpop.f32.mrf.mxu0
        %v3005 = vadd.f32 %v2844, %v3004
        %v3006 = vpop.f32.mrf.mxu0
        %3007 = vmatprep.mubr.bf16.mxu0 %v1822
        %3008 = vmatmul.mubr.bf16.gmra.mxu0 %v1821
        %v3009 = vpop.f32.mrf.mxu0
        %v3010 = vadd.f32 %v2849, %v3009
        %v3011 = vpop.f32.mrf.mxu0
        %v3012 = vpop.f32.mrf.mxu0
        %v3013 = vadd.f32 %v2852, %v3012
        %v3014 = vpop.f32.mrf.mxu0
        %3015 = vmatprep.mubr.bf16.mxu0 %v1823
        %3016 = vmatmul.mubr.bf16.gmra.mxu0 %v1822
        %v3017 = vpop.f32.mrf.mxu0
        %v3018 = vadd.f32 %v2857, %v3017
        %v3019 = vpop.f32.mrf.mxu0
        %v3020 = vpop.f32.mrf.mxu0
        %v3021 = vadd.f32 %v2860, %v3020
        %v3022 = vpop.f32.mrf.mxu0
        %3023 = vmatprep.mubr.bf16.mxu0 %v1824
        %3024 = vmatmul.mubr.bf16.gmra.mxu0 %v1823
        %v3025 = vpop.f32.mrf.mxu0
        %v3026 = vadd.f32 %v2865, %v3025
        %v3027 = vpop.f32.mrf.mxu0
        %v3028 = vpop.f32.mrf.mxu0
        %v3029 = vadd.f32 %v2868, %v3028
        %v3030 = vpop.f32.mrf.mxu0
        %3031 = vmatprep.mubr.bf16.mxu0 %v1825
        %3032 = vmatmul.mubr.bf16.gmra.mxu0 %v1824
        %v3033 = vpop.f32.mrf.mxu0
        %v3034 = vadd.f32 %v2873, %v3033
        %v3035 = vpop.f32.mrf.mxu0
        %v3036 = vpop.f32.mrf.mxu0
        %v3037 = vadd.f32 %v2876, %v3036
        %v3038 = vpop.f32.mrf.mxu0
        %3039 = vmatprep.mubr.bf16.mxu0 %v1826
        %3040 = vmatmul.mubr.bf16.gmra.mxu0 %v1825
        %v3041 = vpop.f32.mrf.mxu0
        %v3042 = vadd.f32 %v2881, %v3041
        %v3043 = vpop.f32.mrf.mxu0
        %v3044 = vpop.f32.mrf.mxu0
        %v3045 = vadd.f32 %v2884, %v3044
        %v3046 = vpop.f32.mrf.mxu0
        %3047 = vdwg.mxu0
        %3048 = vmatprep.subr.bf16.mxu0 0
        %3049 = vmatpush1.bf16.msra.mxu0 %v2331
        %3050 = vmatprep.subr.bf16.mxu0 0
        %3051 = vmatpush1.bf16.msra.mxu0 %v2330
        %3052 = vmatprep.subr.bf16.mxu0 0
        %3053 = vmatpush1.bf16.msra.mxu0 %v2329
        %3054 = vmatprep.subr.bf16.mxu0 0
        %3055 = vmatpush1.bf16.msra.mxu0 %v2328
        %3056 = vmatprep.subr.bf16.mxu0 0
        %3057 = vmatpush1.bf16.msra.mxu0 %v2327
        %3058 = vmatprep.subr.bf16.mxu0 0
        %3059 = vmatpush1.bf16.msra.mxu0 %v2326
        %3060 = vmatprep.subr.bf16.mxu0 0
        %3061 = vmatpush1.bf16.msra.mxu0 %v2325
        %3062 = vmatprep.subr.bf16.mxu0 0
        %3063 = vmatpush1.bf16.msra.mxu0 %v2324
        %3064 = vmatprep.subr.bf16.mxu0 0
        %3065 = vmatpush2.bf16.msra.mxu0 0
        %3066 = vmatprep.subr.bf16.mxu0 0
        %3067 = vmatpush2.bf16.msra.mxu0 0
        %3068 = vmatprep.subr.bf16.mxu0 0
        %3069 = vmatpush2.bf16.msra.mxu0 0
        %3070 = vmatprep.subr.bf16.mxu0 0
        %3071 = vmatpush2.bf16.msra.mxu0 0
        %3072 = vmatprep.subr.bf16.mxu0 0
        %3073 = vmatpush2.bf16.msra.mxu0 0
        %3074 = vmatprep.subr.bf16.mxu0 0
        %3075 = vmatpush2.bf16.msra.mxu0 0
        %3076 = vmatprep.subr.bf16.mxu0 0
        %3077 = vmatpush2.bf16.msra.mxu0 0
        %3078 = vmatprep.subr.bf16.mxu0 0
        %3079 = vmatpush2.bf16.msra.mxu0 0
        %3080 = vmatprep.mubr.bf16.mxu0 0
        %3081 = vmatmul.mubr.bf16.gmra.mxu0 %v1812
        %v3082 = vpop.f32.mrf.mxu0
        %v3083 = vadd.f32 %v2922, %v3082
        %v3084 = vpop.f32.mrf.mxu0
        %v3085 = vpop.f32.mrf.mxu0
        %v3086 = vadd.f32 %v2925, %v3085
        %v3087 = vpop.f32.mrf.mxu0
        %3088 = vmatprep.mubr.bf16.mxu0 0
        %3089 = vmatmul.mubr.bf16.gmra.mxu0 %v1813
        %v3090 = vpop.f32.mrf.mxu0
        %v3091 = vadd.f32 %v2930, %v3090
        %v3092 = vpop.f32.mrf.mxu0
        %v3093 = vpop.f32.mrf.mxu0
        %v3094 = vadd.f32 %v2933, %v3093
        %v3095 = vpop.f32.mrf.mxu0
        %3096 = vmatprep.mubr.bf16.mxu0 0
        %3097 = vmatmul.mubr.bf16.gmra.mxu0 %v1814
        %v3098 = vpop.f32.mrf.mxu0
        %v3099 = vadd.f32 %v2938, %v3098
        %v3100 = vpop.f32.mrf.mxu0
        %v3101 = vpop.f32.mrf.mxu0
        %v3102 = vadd.f32 %v2941, %v3101
        %v3103 = vpop.f32.mrf.mxu0
        %3104 = vmatprep.mubr.bf16.mxu0 0
        %3105 = vmatmul.mubr.bf16.gmra.mxu0 %v1815
        %v3106 = vpop.f32.mrf.mxu0
        %v3107 = vadd.f32 %v2946, %v3106
        %v3108 = vpop.f32.mrf.mxu0
        %v3109 = vpop.f32.mrf.mxu0
        %v3110 = vadd.f32 %v2949, %v3109
        %v3111 = vpop.f32.mrf.mxu0
        %3112 = vmatprep.mubr.bf16.mxu0 0
        %3113 = vmatmul.mubr.bf16.gmra.mxu0 %v1816
        %v3114 = vpop.f32.mrf.mxu0
        %v3115 = vadd.f32 %v2954, %v3114
        %v3116 = vpop.f32.mrf.mxu0
        %v3117 = vpop.f32.mrf.mxu0
        %v3118 = vadd.f32 %v2957, %v3117
        %v3119 = vpop.f32.mrf.mxu0
        %3120 = vmatprep.mubr.bf16.mxu0 0
        %3121 = vmatmul.mubr.bf16.gmra.mxu0 %v1817
        %v3122 = vpop.f32.mrf.mxu0
        %v3123 = vadd.f32 %v2962, %v3122
        %v3124 = vpop.f32.mrf.mxu0
        %v3125 = vpop.f32.mrf.mxu0
        %v3126 = vadd.f32 %v2965, %v3125
        %v3127 = vpop.f32.mrf.mxu0
        %3128 = vmatprep.mubr.bf16.mxu0 0
        %3129 = vmatmul.mubr.bf16.gmra.mxu0 %v1818
        %v3130 = vpop.f32.mrf.mxu0
        %v3131 = vadd.f32 %v2970, %v3130
        %v3132 = vpop.f32.mrf.mxu0
        %v3133 = vpop.f32.mrf.mxu0
        %v3134 = vadd.f32 %v2973, %v3133
        %v3135 = vpop.f32.mrf.mxu0
        %3136 = vmatprep.mubr.bf16.mxu0 0
        %3137 = vmatmul.mubr.bf16.gmra.mxu0 %v1819
        %v3138 = vpop.f32.mrf.mxu0
        %v3139 = vadd.f32 %v2978, %v3138
        %v3140 = vpop.f32.mrf.mxu0
        %v3141 = vpop.f32.mrf.mxu0
        %v3142 = vadd.f32 %v2981, %v3141
        %v3143 = vpop.f32.mrf.mxu0
        %3144 = vmatprep.mubr.bf16.mxu0 0
        %3145 = vmatmul.mubr.bf16.gmra.mxu0 %v1820
        %v3146 = vpop.f32.mrf.mxu0
        %v3147 = vadd.f32 %v2986, %v3146
        %v3148 = vpop.f32.mrf.mxu0
        %v3149 = vpop.f32.mrf.mxu0
        %v3150 = vadd.f32 %v2989, %v3149
        %v3151 = vpop.f32.mrf.mxu0
        %3152 = vmatprep.mubr.bf16.mxu0 0
        %3153 = vmatmul.mubr.bf16.gmra.mxu0 %v1821
        %v3154 = vpop.f32.mrf.mxu0
        %v3155 = vadd.f32 %v2994, %v3154
        %v3156 = vpop.f32.mrf.mxu0
        %v3157 = vpop.f32.mrf.mxu0
        %v3158 = vadd.f32 %v2997, %v3157
        %v3159 = vpop.f32.mrf.mxu0
        %3160 = vmatprep.mubr.bf16.mxu0 0
        %3161 = vmatmul.mubr.bf16.gmra.mxu0 %v1822
        %v3162 = vpop.f32.mrf.mxu0
        %v3163 = vadd.f32 %v3002, %v3162
        %v3164 = vpop.f32.mrf.mxu0
        %v3165 = vpop.f32.mrf.mxu0
        %v3166 = vadd.f32 %v3005, %v3165
        %v3167 = vpop.f32.mrf.mxu0
        %3168 = vmatprep.mubr.bf16.mxu0 0
        %3169 = vmatmul.mubr.bf16.gmra.mxu0 %v1823
        %v3170 = vpop.f32.mrf.mxu0
        %v3171 = vadd.f32 %v3010, %v3170
        %v3172 = vpop.f32.mrf.mxu0
        %v3173 = vpop.f32.mrf.mxu0
        %v3174 = vadd.f32 %v3013, %v3173
        %v3175 = vpop.f32.mrf.mxu0
        %3176 = vmatprep.mubr.bf16.mxu0 0
        %3177 = vmatmul.mubr.bf16.gmra.mxu0 %v1824
        %v3178 = vpop.f32.mrf.mxu0
        %v3179 = vadd.f32 %v3018, %v3178
        %v3180 = vpop.f32.mrf.mxu0
        %v3181 = vpop.f32.mrf.mxu0
        %v3182 = vadd.f32 %v3021, %v3181
        %v3183 = vpop.f32.mrf.mxu0
        %3184 = vmatprep.mubr.bf16.mxu0 0
        %3185 = vmatmul.mubr.bf16.gmra.mxu0 %v1825
        %v3186 = vpop.f32.mrf.mxu0
        %v3187 = vadd.f32 %v3026, %v3186
        %v3188 = vpop.f32.mrf.mxu0
        %v3189 = vpop.f32.mrf.mxu0
        %v3190 = vadd.f32 %v3029, %v3189
        %v3191 = vpop.f32.mrf.mxu0
        %3192 = vmatprep.mubr.bf16.mxu0 0
        %3193 = vmatmul.mubr.bf16.gmra.mxu0 %v1826
        %v3194 = vpop.f32.mrf.mxu0
        %v3195 = vadd.f32 %v3034, %v3194
        %v3196 = vpop.f32.mrf.mxu0
        %v3197 = vpop.f32.mrf.mxu0
        %v3198 = vadd.f32 %v3037, %v3197
        %v3199 = vpop.f32.mrf.mxu0
        %3200 = vmatprep.mubr.bf16.mxu0 0
        %3201 = vmatmul.mubr.bf16.gmra.mxu0 %v1827
        %v3202 = vpop.f32.mrf.mxu0
        %v3203 = vadd.f32 %v3042, %v3202
        %v3204 = vpop.f32.mrf.mxu0
        %v3205 = vpop.f32.mrf.mxu0
        %v3206 = vadd.f32 %v3045, %v3205
        %v3207 = vpop.f32.mrf.mxu0
        %3208 = vdwg.mxu0
        %v3209 = vld [vmem:[%s5] sm:$0x1]
        %v3211 = vlaneseq
        %v3212 = vshrl.u32 %v3211, 7
        %v3213 = vsub.s32 0, %v3212
        %v3214 = vrot.slane %v3209, %v3213
        %v3216 = vmul.f32 %v3083, %v3214
        %v3217 = vmul.f32 %v3086, %v3214
        %v3218 = vmul.f32 %v3091, %v3214
        %v3219 = vmul.f32 %v3094, %v3214
        %v3220 = vmul.f32 %v3099, %v3214
        %v3221 = vmul.f32 %v3102, %v3214
        %v3222 = vmul.f32 %v3107, %v3214
        %v3223 = vmul.f32 %v3110, %v3214
        %v3224 = vmul.f32 %v3115, %v3214
        %v3225 = vmul.f32 %v3118, %v3214
        %v3226 = vmul.f32 %v3123, %v3214
        %v3227 = vmul.f32 %v3126, %v3214
        %v3228 = vmul.f32 %v3131, %v3214
        %v3229 = vmul.f32 %v3134, %v3214
        %v3230 = vmul.f32 %v3139, %v3214
        %v3231 = vmul.f32 %v3142, %v3214
        %v3232 = vmul.f32 %v3147, %v3214
        %v3233 = vmul.f32 %v3150, %v3214
        %v3234 = vmul.f32 %v3155, %v3214
        %v3235 = vmul.f32 %v3158, %v3214
        %v3236 = vmul.f32 %v3163, %v3214
        %v3237 = vmul.f32 %v3166, %v3214
        %v3238 = vmul.f32 %v3171, %v3214
        %v3239 = vmul.f32 %v3174, %v3214
        %v3240 = vmul.f32 %v3179, %v3214
        %v3241 = vmul.f32 %v3182, %v3214
        %v3242 = vmul.f32 %v3187, %v3214
        %v3243 = vmul.f32 %v3190, %v3214
        %v3244 = vmul.f32 %v3195, %v3214
        %v3245 = vmul.f32 %v3198, %v3214
        %v3246 = vmul.f32 %v3203, %v3214
        %v3247 = vmul.f32 %v3206, %v3214
        %v3248 = vld [vmem:[%s6] sm:$0x1]
        %v3250 = vlaneseq
        %v3251 = vshrl.u32 %v3250, 7
        %v3252 = vsub.s32 0, %v3251
        %v3253 = vrot.slane %v3248, %v3252
        %v3255 = vadd.f32 %v3216, %v3253
        %v3256 = vadd.f32 %v3217, %v3253
        %v3257 = vadd.f32 %v3218, %v3253
        %v3258 = vadd.f32 %v3219, %v3253
        %v3259 = vadd.f32 %v3220, %v3253
        %v3260 = vadd.f32 %v3221, %v3253
        %v3261 = vadd.f32 %v3222, %v3253
        %v3262 = vadd.f32 %v3223, %v3253
        %v3263 = vadd.f32 %v3224, %v3253
        %v3264 = vadd.f32 %v3225, %v3253
        %v3265 = vadd.f32 %v3226, %v3253
        %v3266 = vadd.f32 %v3227, %v3253
        %v3267 = vadd.f32 %v3228, %v3253
        %v3268 = vadd.f32 %v3229, %v3253
        %v3269 = vadd.f32 %v3230, %v3253
        %v3270 = vadd.f32 %v3231, %v3253
        %v3271 = vadd.f32 %v3232, %v3253
        %v3272 = vadd.f32 %v3233, %v3253
        %v3273 = vadd.f32 %v3234, %v3253
        %v3274 = vadd.f32 %v3235, %v3253
        %v3275 = vadd.f32 %v3236, %v3253
        %v3276 = vadd.f32 %v3237, %v3253
        %v3277 = vadd.f32 %v3238, %v3253
        %v3278 = vadd.f32 %v3239, %v3253
        %v3279 = vadd.f32 %v3240, %v3253
        %v3280 = vadd.f32 %v3241, %v3253
        %v3281 = vadd.f32 %v3242, %v3253
        %v3282 = vadd.f32 %v3243, %v3253
        %v3283 = vadd.f32 %v3244, %v3253
        %v3284 = vadd.f32 %v3245, %v3253
        %v3285 = vadd.f32 %v3246, %v3253
        %v3286 = vadd.f32 %v3247, %v3253
        %v3287 = vmax.f32 %v3255, 0.0
        %v3288 = vmax.f32 %v3256, 0.0
        %v3289 = vmax.f32 %v3257, 0.0
        %v3290 = vmax.f32 %v3258, 0.0
        %v3291 = vmax.f32 %v3259, 0.0
        %v3292 = vmax.f32 %v3260, 0.0
        %v3293 = vmax.f32 %v3261, 0.0
        %v3294 = vmax.f32 %v3262, 0.0
        %v3295 = vmax.f32 %v3263, 0.0
        %v3296 = vmax.f32 %v3264, 0.0
        %v3297 = vmax.f32 %v3265, 0.0
        %v3298 = vmax.f32 %v3266, 0.0
        %v3299 = vmax.f32 %v3267, 0.0
        %v3300 = vmax.f32 %v3268, 0.0
        %v3301 = vmax.f32 %v3269, 0.0
        %v3302 = vmax.f32 %v3270, 0.0
        %v3303 = vmax.f32 %v3271, 0.0
        %v3304 = vmax.f32 %v3272, 0.0
        %v3305 = vmax.f32 %v3273, 0.0
        %v3306 = vmax.f32 %v3274, 0.0
        %v3307 = vmax.f32 %v3275, 0.0
        %v3308 = vmax.f32 %v3276, 0.0
        %v3309 = vmax.f32 %v3277, 0.0
        %v3310 = vmax.f32 %v3278, 0.0
        %v3311 = vmax.f32 %v3279, 0.0
        %v3312 = vmax.f32 %v3280, 0.0
        %v3313 = vmax.f32 %v3281, 0.0
        %v3314 = vmax.f32 %v3282, 0.0
        %v3315 = vmax.f32 %v3283, 0.0
        %v3316 = vmax.f32 %v3284, 0.0
        %v3317 = vmax.f32 %v3285, 0.0
        %v3318 = vmax.f32 %v3286, 0.0
        %v3319 = vpack.c.bf16 %v3288, %v3287
        %v3320 = vpack.c.bf16 %v3290, %v3289
        %v3321 = vpack.c.bf16 %v3292, %v3291
        %v3322 = vpack.c.bf16 %v3294, %v3293
        %v3323 = vpack.c.bf16 %v3296, %v3295
        %v3324 = vpack.c.bf16 %v3298, %v3297
        %v3325 = vpack.c.bf16 %v3300, %v3299
        %v3326 = vpack.c.bf16 %v3302, %v3301
        %v3327 = vpack.c.bf16 %v3304, %v3303
        %v3328 = vpack.c.bf16 %v3306, %v3305
        %v3329 = vpack.c.bf16 %v3308, %v3307
        %v3330 = vpack.c.bf16 %v3310, %v3309
        %v3331 = vpack.c.bf16 %v3312, %v3311
        %v3332 = vpack.c.bf16 %v3314, %v3313
        %v3333 = vpack.c.bf16 %v3316, %v3315
        %v3334 = vpack.c.bf16 %v3318, %v3317
        %v3335 = vld [vmem:[#allocation9] sm:$0xf]
        %v3336 = vld [vmem:[#allocation9 + $0x4] sm:$0xf]
        %v3337 = vld [vmem:[#allocation9 + $0x8] sm:$0xf]
        %v3338 = vld [vmem:[#allocation9 + $0xc] sm:$0xf]
        %v3339 = vld [vmem:[#allocation9 + $0x10] sm:$0xf]
        %v3340 = vld [vmem:[#allocation9 + $0x14] sm:$0xf]
        %v3341 = vld [vmem:[#allocation9 + $0x18] sm:$0xf]
        %v3342 = vld [vmem:[#allocation9 + $0x1c] sm:$0xf]
        %v3343 = vld [vmem:[#allocation9 + $0x20] sm:$0xf]
        %v3344 = vld [vmem:[#allocation9 + $0x24] sm:$0xf]
        %v3345 = vld [vmem:[#allocation9 + $0x28] sm:$0xf]
        %v3346 = vld [vmem:[#allocation9 + $0x2c] sm:$0xf]
        %v3347 = vld [vmem:[#allocation9 + $0x30] sm:$0xf]
        %v3348 = vld [vmem:[#allocation9 + $0x34] sm:$0xf]
        %v3349 = vld [vmem:[#allocation9 + $0x38] sm:$0xf]
        %v3350 = vld [vmem:[#allocation9 + $0x3c] sm:$0xf]
        %v3367 = vunpack.c.l.b16 %v3335
        %v3368 = vunpack.c.l.b16 %v3336
        %v3369 = vunpack.c.l.b16 %v3337
        %v3370 = vunpack.c.l.b16 %v3338
        %v3371 = vunpack.c.l.b16 %v3339
        %v3372 = vunpack.c.l.b16 %v3340
        %v3373 = vunpack.c.l.b16 %v3341
        %v3374 = vunpack.c.l.b16 %v3342
        %v3375 = vunpack.c.l.b16 %v3343
        %v3376 = vunpack.c.l.b16 %v3344
        %v3377 = vunpack.c.l.b16 %v3345
        %v3378 = vunpack.c.l.b16 %v3346
        %v3379 = vunpack.c.l.b16 %v3347
        %v3380 = vunpack.c.l.b16 %v3348
        %v3381 = vunpack.c.l.b16 %v3349
        %v3382 = vunpack.c.l.b16 %v3350
        %v3383 = vpack.c.b16 %v3368, %v3367
        %v3384 = vpack.c.b16 %v3370, %v3369
        %v3385 = vpack.c.b16 %v3372, %v3371
        %v3386 = vpack.c.b16 %v3374, %v3373
        %v3387 = vpack.c.b16 %v3376, %v3375
        %v3388 = vpack.c.b16 %v3378, %v3377
        %v3389 = vpack.c.b16 %v3380, %v3379
        %v3390 = vpack.c.b16 %v3382, %v3381
        %3399 = vmatprep.subr.bf16.mxu0 0
        %3400 = vmatpush1.bf16.msra.mxu0 %v3390
        %3401 = vmatprep.subr.bf16.mxu0 0
        %3402 = vmatpush1.bf16.msra.mxu0 %v3389
        %3403 = vmatprep.subr.bf16.mxu0 0
        %3404 = vmatpush1.bf16.msra.mxu0 %v3388
        %3405 = vmatprep.subr.bf16.mxu0 0
        %3406 = vmatpush1.bf16.msra.mxu0 %v3387
        %3407 = vmatprep.subr.bf16.mxu0 0
        %3408 = vmatpush1.bf16.msra.mxu0 %v3386
        %3409 = vmatprep.subr.bf16.mxu0 0
        %3410 = vmatpush1.bf16.msra.mxu0 %v3385
        %3411 = vmatprep.subr.bf16.mxu0 0
        %3412 = vmatpush1.bf16.msra.mxu0 %v3384
        %3413 = vmatprep.subr.bf16.mxu0 0
        %3414 = vmatpush1.bf16.msra.mxu0 %v3383
        %3415 = vmatprep.subr.bf16.mxu0 0
        %3416 = vmatpush2.bf16.msra.mxu0 0
        %3417 = vmatprep.subr.bf16.mxu0 0
        %3418 = vmatpush2.bf16.msra.mxu0 0
        %3419 = vmatprep.subr.bf16.mxu0 0
        %3420 = vmatpush2.bf16.msra.mxu0 0
        %3421 = vmatprep.subr.bf16.mxu0 0
        %3422 = vmatpush2.bf16.msra.mxu0 0
        %3423 = vmatprep.subr.bf16.mxu0 0
        %3424 = vmatpush2.bf16.msra.mxu0 0
        %3425 = vmatprep.subr.bf16.mxu0 0
        %3426 = vmatpush2.bf16.msra.mxu0 0
        %3427 = vmatprep.subr.bf16.mxu0 0
        %3428 = vmatpush2.bf16.msra.mxu0 0
        %3429 = vmatprep.subr.bf16.mxu0 0
        %3430 = vmatpush2.bf16.msra.mxu0 0
        %3431 = vmatprep.mubr.bf16.mxu0 0
        %3432 = vmatmul.mubr.bf16.gmra.mxu0 %v3319
        %v3433 = vpop.f32.mrf.mxu0
        %v3434 = vadd.f32 0.0, %v3433
        %v3435 = vpop.f32.mrf.mxu0
        %v3436 = vpop.f32.mrf.mxu0
        %v3437 = vadd.f32 0.0, %v3436
        %v3438 = vpop.f32.mrf.mxu0
        %3439 = vmatprep.mubr.bf16.mxu0 0
        %3440 = vmatmul.mubr.bf16.gmra.mxu0 %v3320
        %v3441 = vpop.f32.mrf.mxu0
        %v3442 = vadd.f32 0.0, %v3441
        %v3443 = vpop.f32.mrf.mxu0
        %v3444 = vpop.f32.mrf.mxu0
        %v3445 = vadd.f32 0.0, %v3444
        %v3446 = vpop.f32.mrf.mxu0
        %3447 = vmatprep.mubr.bf16.mxu0 0
        %3448 = vmatmul.mubr.bf16.gmra.mxu0 %v3321
        %v3449 = vpop.f32.mrf.mxu0
        %v3450 = vadd.f32 0.0, %v3449
        %v3451 = vpop.f32.mrf.mxu0
        %v3452 = vpop.f32.mrf.mxu0
        %v3453 = vadd.f32 0.0, %v3452
        %v3454 = vpop.f32.mrf.mxu0
        %3455 = vmatprep.mubr.bf16.mxu0 0
        %3456 = vmatmul.mubr.bf16.gmra.mxu0 %v3322
        %v3457 = vpop.f32.mrf.mxu0
        %v3458 = vadd.f32 0.0, %v3457
        %v3459 = vpop.f32.mrf.mxu0
        %v3460 = vpop.f32.mrf.mxu0
        %v3461 = vadd.f32 0.0, %v3460
        %v3462 = vpop.f32.mrf.mxu0
        %3463 = vmatprep.mubr.bf16.mxu0 0
        %3464 = vmatmul.mubr.bf16.gmra.mxu0 %v3323
        %v3465 = vpop.f32.mrf.mxu0
        %v3466 = vadd.f32 0.0, %v3465
        %v3467 = vpop.f32.mrf.mxu0
        %v3468 = vpop.f32.mrf.mxu0
        %v3469 = vadd.f32 0.0, %v3468
        %v3470 = vpop.f32.mrf.mxu0
        %3471 = vmatprep.mubr.bf16.mxu0 0
        %3472 = vmatmul.mubr.bf16.gmra.mxu0 %v3324
        %v3473 = vpop.f32.mrf.mxu0
        %v3474 = vadd.f32 0.0, %v3473
        %v3475 = vpop.f32.mrf.mxu0
        %v3476 = vpop.f32.mrf.mxu0
        %v3477 = vadd.f32 0.0, %v3476
        %v3478 = vpop.f32.mrf.mxu0
        %3479 = vmatprep.mubr.bf16.mxu0 0
        %3480 = vmatmul.mubr.bf16.gmra.mxu0 %v3325
        %v3481 = vpop.f32.mrf.mxu0
        %v3482 = vadd.f32 0.0, %v3481
        %v3483 = vpop.f32.mrf.mxu0
        %v3484 = vpop.f32.mrf.mxu0
        %v3485 = vadd.f32 0.0, %v3484
        %v3486 = vpop.f32.mrf.mxu0
        %3487 = vmatprep.mubr.bf16.mxu0 0
        %3488 = vmatmul.mubr.bf16.gmra.mxu0 %v3326
        %v3489 = vpop.f32.mrf.mxu0
        %v3490 = vadd.f32 0.0, %v3489
        %v3491 = vpop.f32.mrf.mxu0
        %v3492 = vpop.f32.mrf.mxu0
        %v3493 = vadd.f32 0.0, %v3492
        %v3494 = vpop.f32.mrf.mxu0
        %3495 = vmatprep.mubr.bf16.mxu0 0
        %3496 = vmatmul.mubr.bf16.gmra.mxu0 %v3327
        %v3497 = vpop.f32.mrf.mxu0
        %v3498 = vadd.f32 0.0, %v3497
        %v3499 = vpop.f32.mrf.mxu0
        %v3500 = vpop.f32.mrf.mxu0
        %v3501 = vadd.f32 0.0, %v3500
        %v3502 = vpop.f32.mrf.mxu0
        %3503 = vmatprep.mubr.bf16.mxu0 0
        %3504 = vmatmul.mubr.bf16.gmra.mxu0 %v3328
        %v3505 = vpop.f32.mrf.mxu0
        %v3506 = vadd.f32 0.0, %v3505
        %v3507 = vpop.f32.mrf.mxu0
        %v3508 = vpop.f32.mrf.mxu0
        %v3509 = vadd.f32 0.0, %v3508
        %v3510 = vpop.f32.mrf.mxu0
        %3511 = vmatprep.mubr.bf16.mxu0 0
        %3512 = vmatmul.mubr.bf16.gmra.mxu0 %v3329
        %v3513 = vpop.f32.mrf.mxu0
        %v3514 = vadd.f32 0.0, %v3513
        %v3515 = vpop.f32.mrf.mxu0
        %v3516 = vpop.f32.mrf.mxu0
        %v3517 = vadd.f32 0.0, %v3516
        %v3518 = vpop.f32.mrf.mxu0
        %3519 = vmatprep.mubr.bf16.mxu0 0
        %3520 = vmatmul.mubr.bf16.gmra.mxu0 %v3330
        %v3521 = vpop.f32.mrf.mxu0
        %v3522 = vadd.f32 0.0, %v3521
        %v3523 = vpop.f32.mrf.mxu0
        %v3524 = vpop.f32.mrf.mxu0
        %v3525 = vadd.f32 0.0, %v3524
        %v3526 = vpop.f32.mrf.mxu0
        %3527 = vmatprep.mubr.bf16.mxu0 0
        %3528 = vmatmul.mubr.bf16.gmra.mxu0 %v3331
        %v3529 = vpop.f32.mrf.mxu0
        %v3530 = vadd.f32 0.0, %v3529
        %v3531 = vpop.f32.mrf.mxu0
        %v3532 = vpop.f32.mrf.mxu0
        %v3533 = vadd.f32 0.0, %v3532
        %v3534 = vpop.f32.mrf.mxu0
        %3535 = vmatprep.mubr.bf16.mxu0 0
        %3536 = vmatmul.mubr.bf16.gmra.mxu0 %v3332
        %v3537 = vpop.f32.mrf.mxu0
        %v3538 = vadd.f32 0.0, %v3537
        %v3539 = vpop.f32.mrf.mxu0
        %v3540 = vpop.f32.mrf.mxu0
        %v3541 = vadd.f32 0.0, %v3540
        %v3542 = vpop.f32.mrf.mxu0
        %3543 = vmatprep.mubr.bf16.mxu0 0
        %3544 = vmatmul.mubr.bf16.gmra.mxu0 %v3333
        %v3545 = vpop.f32.mrf.mxu0
        %v3546 = vadd.f32 0.0, %v3545
        %v3547 = vpop.f32.mrf.mxu0
        %v3548 = vpop.f32.mrf.mxu0
        %v3549 = vadd.f32 0.0, %v3548
        %v3550 = vpop.f32.mrf.mxu0
        %3551 = vmatprep.mubr.bf16.mxu0 0
        %3552 = vmatmul.mubr.bf16.gmra.mxu0 %v3334
        %v3553 = vpop.f32.mrf.mxu0
        %v3554 = vadd.f32 0.0, %v3553
        %v3555 = vpop.f32.mrf.mxu0
        %v3556 = vpop.f32.mrf.mxu0
        %v3557 = vadd.f32 0.0, %v3556
        %v3558 = vpop.f32.mrf.mxu0
        %3559 = vdwg.mxu0
        %v3560 = vld [vmem:[%s8] sm:$0x1]
        %v3562 = vlaneseq
        %v3563 = vshrl.u32 %v3562, 7
        %v3564 = vsub.s32 0, %v3563
        %v3565 = vrot.slane %v3560, %v3564
        %v3567 = vmul.f32 %v3434, %v3565
        %v3568 = vmul.f32 %v3437, %v3565
        %v3569 = vmul.f32 %v3442, %v3565
        %v3570 = vmul.f32 %v3445, %v3565
        %v3571 = vmul.f32 %v3450, %v3565
        %v3572 = vmul.f32 %v3453, %v3565
        %v3573 = vmul.f32 %v3458, %v3565
        %v3574 = vmul.f32 %v3461, %v3565
        %v3575 = vmul.f32 %v3466, %v3565
        %v3576 = vmul.f32 %v3469, %v3565
        %v3577 = vmul.f32 %v3474, %v3565
        %v3578 = vmul.f32 %v3477, %v3565
        %v3579 = vmul.f32 %v3482, %v3565
        %v3580 = vmul.f32 %v3485, %v3565
        %v3581 = vmul.f32 %v3490, %v3565
        %v3582 = vmul.f32 %v3493, %v3565
        %v3583 = vmul.f32 %v3498, %v3565
        %v3584 = vmul.f32 %v3501, %v3565
        %v3585 = vmul.f32 %v3506, %v3565
        %v3586 = vmul.f32 %v3509, %v3565
        %v3587 = vmul.f32 %v3514, %v3565
        %v3588 = vmul.f32 %v3517, %v3565
        %v3589 = vmul.f32 %v3522, %v3565
        %v3590 = vmul.f32 %v3525, %v3565
        %v3591 = vmul.f32 %v3530, %v3565
        %v3592 = vmul.f32 %v3533, %v3565
        %v3593 = vmul.f32 %v3538, %v3565
        %v3594 = vmul.f32 %v3541, %v3565
        %v3595 = vmul.f32 %v3546, %v3565
        %v3596 = vmul.f32 %v3549, %v3565
        %v3597 = vmul.f32 %v3554, %v3565
        %v3598 = vmul.f32 %v3557, %v3565
        %v3599 = vld [vmem:[%s9] sm:$0x1]
        %v3601 = vlaneseq
        %v3602 = vshrl.u32 %v3601, 7
        %v3603 = vsub.s32 0, %v3602
        %v3604 = vrot.slane %v3599, %v3603
        %v3606 = vadd.f32 %v3567, %v3604
        %v3607 = vadd.f32 %v3568, %v3604
        %v3608 = vadd.f32 %v3569, %v3604
        %v3609 = vadd.f32 %v3570, %v3604
        %v3610 = vadd.f32 %v3571, %v3604
        %v3611 = vadd.f32 %v3572, %v3604
        %v3612 = vadd.f32 %v3573, %v3604
        %v3613 = vadd.f32 %v3574, %v3604
        %v3614 = vadd.f32 %v3575, %v3604
        %v3615 = vadd.f32 %v3576, %v3604
        %v3616 = vadd.f32 %v3577, %v3604
        %v3617 = vadd.f32 %v3578, %v3604
        %v3618 = vadd.f32 %v3579, %v3604
        %v3619 = vadd.f32 %v3580, %v3604
        %v3620 = vadd.f32 %v3581, %v3604
        %v3621 = vadd.f32 %v3582, %v3604
        %v3622 = vadd.f32 %v3583, %v3604
        %v3623 = vadd.f32 %v3584, %v3604
        %v3624 = vadd.f32 %v3585, %v3604
        %v3625 = vadd.f32 %v3586, %v3604
        %v3626 = vadd.f32 %v3587, %v3604
        %v3627 = vadd.f32 %v3588, %v3604
        %v3628 = vadd.f32 %v3589, %v3604
        %v3629 = vadd.f32 %v3590, %v3604
        %v3630 = vadd.f32 %v3591, %v3604
        %v3631 = vadd.f32 %v3592, %v3604
        %v3632 = vadd.f32 %v3593, %v3604
        %v3633 = vadd.f32 %v3594, %v3604
        %v3634 = vadd.f32 %v3595, %v3604
        %v3635 = vadd.f32 %v3596, %v3604
        %v3636 = vadd.f32 %v3597, %v3604
        %v3637 = vadd.f32 %v3598, %v3604
        %v3638 = vld [vmem:[%s373] sm:$0xff]
        %v3639 = vld [vmem:[%s373 + $0x8] sm:$0xff]
        %v3640 = vld [vmem:[%s373 + $0x10] sm:$0xff]
        %v3641 = vld [vmem:[%s373 + $0x18] sm:$0xff]
        %v3642 = vld [vmem:[%s373 + $0x20] sm:$0xff]
        %v3643 = vld [vmem:[%s373 + $0x28] sm:$0xff]
        %v3644 = vld [vmem:[%s373 + $0x30] sm:$0xff]
        %v3645 = vld [vmem:[%s373 + $0x38] sm:$0xff]
        %v3646 = vld [vmem:[%s373 + $0x40] sm:$0xff]
        %v3647 = vld [vmem:[%s373 + $0x48] sm:$0xff]
        %v3648 = vld [vmem:[%s373 + $0x50] sm:$0xff]
        %v3649 = vld [vmem:[%s373 + $0x58] sm:$0xff]
        %v3650 = vld [vmem:[%s373 + $0x60] sm:$0xff]
        %v3651 = vld [vmem:[%s373 + $0x68] sm:$0xff]
        %v3652 = vld [vmem:[%s373 + $0x70] sm:$0xff]
        %v3653 = vld [vmem:[%s373 + $0x78] sm:$0xff]
        %v3654 = vld [vmem:[%s373 + $0x80] sm:$0xff]
        %v3655 = vld [vmem:[%s373 + $0x88] sm:$0xff]
        %v3656 = vld [vmem:[%s373 + $0x90] sm:$0xff]
        %v3657 = vld [vmem:[%s373 + $0x98] sm:$0xff]
        %v3658 = vld [vmem:[%s373 + $0xa0] sm:$0xff]
        %v3659 = vld [vmem:[%s373 + $0xa8] sm:$0xff]
        %v3660 = vld [vmem:[%s373 + $0xb0] sm:$0xff]
        %v3661 = vld [vmem:[%s373 + $0xb8] sm:$0xff]
        %v3662 = vld [vmem:[%s373 + $0xc0] sm:$0xff]
        %v3663 = vld [vmem:[%s373 + $0xc8] sm:$0xff]
        %v3664 = vld [vmem:[%s373 + $0xd0] sm:$0xff]
        %v3665 = vld [vmem:[%s373 + $0xd8] sm:$0xff]
        %v3666 = vld [vmem:[%s373 + $0xe0] sm:$0xff]
        %v3667 = vld [vmem:[%s373 + $0xe8] sm:$0xff]
        %v3668 = vld [vmem:[%s373 + $0xf0] sm:$0xff]
        %v3669 = vld [vmem:[%s373 + $0xf8] sm:$0xff]
        %v3670 = vadd.f32 %v3606, %v3638
        %v3671 = vadd.f32 %v3607, %v3639
        %v3672 = vadd.f32 %v3608, %v3640
        %v3673 = vadd.f32 %v3609, %v3641
        %v3674 = vadd.f32 %v3610, %v3642
        %v3675 = vadd.f32 %v3611, %v3643
        %v3676 = vadd.f32 %v3612, %v3644
        %v3677 = vadd.f32 %v3613, %v3645
        %v3678 = vadd.f32 %v3614, %v3646
        %v3679 = vadd.f32 %v3615, %v3647
        %v3680 = vadd.f32 %v3616, %v3648
        %v3681 = vadd.f32 %v3617, %v3649
        %v3682 = vadd.f32 %v3618, %v3650
        %v3683 = vadd.f32 %v3619, %v3651
        %v3684 = vadd.f32 %v3620, %v3652
        %v3685 = vadd.f32 %v3621, %v3653
        %v3686 = vadd.f32 %v3622, %v3654
        %v3687 = vadd.f32 %v3623, %v3655
        %v3688 = vadd.f32 %v3624, %v3656
        %v3689 = vadd.f32 %v3625, %v3657
        %v3690 = vadd.f32 %v3626, %v3658
        %v3691 = vadd.f32 %v3627, %v3659
        %v3692 = vadd.f32 %v3628, %v3660
        %v3693 = vadd.f32 %v3629, %v3661
        %v3694 = vadd.f32 %v3630, %v3662
        %v3695 = vadd.f32 %v3631, %v3663
        %v3696 = vadd.f32 %v3632, %v3664
        %v3697 = vadd.f32 %v3633, %v3665
        %v3698 = vadd.f32 %v3634, %v3666
        %v3699 = vadd.f32 %v3635, %v3667
        %v3700 = vadd.f32 %v3636, %v3668
        %v3701 = vadd.f32 %v3637, %v3669
        %v3702 = vmax.f32 %v3670, 0.0
        %v3703 = vmax.f32 %v3671, 0.0
        %v3704 = vmax.f32 %v3672, 0.0
        %v3705 = vmax.f32 %v3673, 0.0
        %v3706 = vmax.f32 %v3674, 0.0
        %v3707 = vmax.f32 %v3675, 0.0
        %v3708 = vmax.f32 %v3676, 0.0
        %v3709 = vmax.f32 %v3677, 0.0
        %v3710 = vmax.f32 %v3678, 0.0
        %v3711 = vmax.f32 %v3679, 0.0
        %v3712 = vmax.f32 %v3680, 0.0
        %v3713 = vmax.f32 %v3681, 0.0
        %v3714 = vmax.f32 %v3682, 0.0
        %v3715 = vmax.f32 %v3683, 0.0
        %v3716 = vmax.f32 %v3684, 0.0
        %v3717 = vmax.f32 %v3685, 0.0
        %v3718 = vmax.f32 %v3686, 0.0
        %v3719 = vmax.f32 %v3687, 0.0
        %v3720 = vmax.f32 %v3688, 0.0
        %v3721 = vmax.f32 %v3689, 0.0
        %v3722 = vmax.f32 %v3690, 0.0
        %v3723 = vmax.f32 %v3691, 0.0
        %v3724 = vmax.f32 %v3692, 0.0
        %v3725 = vmax.f32 %v3693, 0.0
        %v3726 = vmax.f32 %v3694, 0.0
        %v3727 = vmax.f32 %v3695, 0.0
        %v3728 = vmax.f32 %v3696, 0.0
        %v3729 = vmax.f32 %v3697, 0.0
        %v3730 = vmax.f32 %v3698, 0.0
        %v3731 = vmax.f32 %v3699, 0.0
        %v3732 = vmax.f32 %v3700, 0.0
        %v3733 = vmax.f32 %v3701, 0.0
        %3734 = vst.msk [vmem:[%s421] sm:$0xff] %vm479, %v3702
        %3735 = vst.msk [vmem:[%s421 + $0x8] sm:$0xff] %vm479, %v3703
        %3736 = vst.msk [vmem:[%s421 + $0x10] sm:$0xff] %vm479, %v3704
        %3737 = vst.msk [vmem:[%s421 + $0x18] sm:$0xff] %vm479, %v3705
        %3738 = vst.msk [vmem:[%s421 + $0x20] sm:$0xff] %vm479, %v3706
        %3739 = vst.msk [vmem:[%s421 + $0x28] sm:$0xff] %vm479, %v3707
        %3740 = vst.msk [vmem:[%s421 + $0x30] sm:$0xff] %vm479, %v3708
        %3741 = vst.msk [vmem:[%s421 + $0x38] sm:$0xff] %vm479, %v3709
        %3742 = vst.msk [vmem:[%s421 + $0x40] sm:$0xff] %vm479, %v3710
        %3743 = vst.msk [vmem:[%s421 + $0x48] sm:$0xff] %vm479, %v3711
        %3744 = vst.msk [vmem:[%s421 + $0x50] sm:$0xff] %vm479, %v3712
        %3745 = vst.msk [vmem:[%s421 + $0x58] sm:$0xff] %vm479, %v3713
        %3746 = vst.msk [vmem:[%s421 + $0x60] sm:$0xff] %vm479, %v3714
        %3747 = vst.msk [vmem:[%s421 + $0x68] sm:$0xff] %vm479, %v3715
        %3748 = vst.msk [vmem:[%s421 + $0x70] sm:$0xff] %vm479, %v3716
        %3749 = vst.msk [vmem:[%s421 + $0x78] sm:$0xff] %vm479, %v3717
        %3750 = vst.msk [vmem:[%s421 + $0x80] sm:$0xff] %vm479, %v3718
        %3751 = vst.msk [vmem:[%s421 + $0x88] sm:$0xff] %vm479, %v3719
        %3752 = vst.msk [vmem:[%s421 + $0x90] sm:$0xff] %vm479, %v3720
        %3753 = vst.msk [vmem:[%s421 + $0x98] sm:$0xff] %vm479, %v3721
        %3754 = vst.msk [vmem:[%s421 + $0xa0] sm:$0xff] %vm479, %v3722
        %3755 = vst.msk [vmem:[%s421 + $0xa8] sm:$0xff] %vm479, %v3723
        %3756 = vst.msk [vmem:[%s421 + $0xb0] sm:$0xff] %vm479, %v3724
        %3757 = vst.msk [vmem:[%s421 + $0xb8] sm:$0xff] %vm479, %v3725
        %3758 = vst.msk [vmem:[%s421 + $0xc0] sm:$0xff] %vm479, %v3726
        %3759 = vst.msk [vmem:[%s421 + $0xc8] sm:$0xff] %vm479, %v3727
        %3760 = vst.msk [vmem:[%s421 + $0xd0] sm:$0xff] %vm479, %v3728
        %3761 = vst.msk [vmem:[%s421 + $0xd8] sm:$0xff] %vm479, %v3729
        %3762 = vst.msk [vmem:[%s421 + $0xe0] sm:$0xff] %vm479, %v3730
        %3763 = vst.msk [vmem:[%s421 + $0xe8] sm:$0xff] %vm479, %v3731
        %3764 = vst.msk [vmem:[%s421 + $0xf0] sm:$0xff] %vm479, %v3732
        %3765 = vst.msk [vmem:[%s421 + $0xf8] sm:$0xff] %vm479, %v3733
        %s3766 = sand.u32 %s252, 1
        %s3767 = scalar_lea.sflag [#allocation5], %s3766
        %s3768 = sand.u32 %s252, 1
        %s3769 = smul.addr %s3768, 256
        %s3770 = scalar_lea.vmem [#allocation11], %s3769
        // Predicated region
        $region77: #{bottleneck_pallas.1} parent=59 // pred_check
          %p3771 = pneg %p262
        $region78: #{bottleneck_pallas.1} parent=59 // pred_check_branch
          %3773 = sbr.rel (%p3771) target = $region80
        $region79: #{bottleneck_pallas.1} parent=59 // pred_region
          %s3775 = ssub.s32 4096, 4096
          %3776 = vsyncadd %s3767, %s3775
          %s3777 = smul.addr %s29, 32
          %s3778 = smul.addr %s3777, 128
          %s3779 = scalar_lea.hbm %s10, %s3778
          %s3780 = sshll.u32 %s3770, 4
          %s3781 = int_to_ptr.vmem [resolvable:$true] %s3780
          %3786 = dma.vmem_to_hbm [thread:$0]  %s3781, 4096, %s3779, %s3767, 128, 128, 8
        $region80: #{bottleneck_pallas.1} parent=59 // pred_fallthru
          _
      $region60: #{bottleneck_pallas.1} parent=5 // pred_fallthru
        _
      %p3787 = scmp.le.s32.totalorder 2, %s24
      // Predicated region
      $region81: #{bottleneck_pallas.1} parent=5 // pred_check
        %p3788 = pneg %p3787
      $region82: #{bottleneck_pallas.1} parent=5 // pred_check_branch
        %3790 = sbr.rel (%p3788) target = $region84
      $region83: #{bottleneck_pallas.1} parent=5 // pred_region
        %s3791 = ssub.s32 %s24, 2
        // Predicated region
        $region85: #{bottleneck_pallas.1} parent=83 // pred_check
          %p3792 = pneg %p268
        $region86: #{bottleneck_pallas.1} parent=83 // pred_check_branch
          %3794 = sbr.rel (%p3792) target = $region88
        $region87: #{bottleneck_pallas.1} parent=83 // pred_region
          %s3795 = sand.u32 %s253, 1
          %s3796 = scalar_lea.sflag [#allocation5], %s3795
          %s3797 = sand.u32 %s253, 1
          %s3798 = smul.addr %s3797, 256
          %s3799 = scalar_lea.vmem [#allocation11], %s3798
          %3800 = dma.done %s3796, 4096
        $region88: #{bottleneck_pallas.1} parent=83 // pred_fallthru
          _
      $region84: #{bottleneck_pallas.1} parent=5 // pred_fallthru
        _
    $region6: #{bottleneck_pallas.1} parent=1 // loop_footer
      %s28 = sadd.s32 1, %s24
    $region7: #{bottleneck_pallas.1} parent=1 // loop_footer_branch
      %23 = sbr.rel target = $region3
    $region8: #{bottleneck_pallas.1} parent=1 // loop_exit
      _
    %3801 = vsyncpa [#allocation4], 1
    %s3802 = scalar_lea.sflag [#allocation4], 1
    %3803 = vsyncpa %s3802, 1
    %3804 = vsyncpa [#allocation7], 1
    %3805 = vsyncpa [#allocation10], 1
    %3806 = vsyncpa [#allocation5], 1
    %s3807 = scalar_lea.sflag [#allocation5], 1
    %3808 = vsyncpa %s3807, 1

</llo_original>
